<compile_context>
chip_gen: v6e
topology: v6e:2x2x1
jax: 0.10.0
libtpu: 0.0.40
codegen_flags: <defaults>
</compile_context>

<pallas_src>
import functools

import numpy as np
import jax
import jax.numpy as jnp
from jax.experimental import pallas as pl
from jax.experimental.pallas import tpu as pltpu


_HP = 128      # lane-padded hidden width: one full 128-lane block per gate
_NPAD = 8      # leaf-batch rows padded to one sublane block


# ----------------------------------------------------------------------------
# Tree structure + static post-order schedule
# ----------------------------------------------------------------------------
class TreeNode:
    def __init__(self, word=None, children=None):
        self.word = word
        self.children = children if children is not None else []
        self.state = None

    def is_leaf(self):
        return len(self.children) == 0


def make_tree():
    # root( leaf(2), leaf(5), internal( leaf(1), leaf(7) ) )
    return TreeNode(children=[
        TreeNode(word=2),
        TreeNode(word=5),
        TreeNode(children=[TreeNode(word=1), TreeNode(word=7)]),
    ])


def flatten_tree(root):
    """Flatten the data-dependent recursion into a static post-order schedule.

    Unified state-table slot layout (2N+1 slots):
      slot 0        : zero state
      slot 1 + k    : combined state of post-order node k
      slot N + 1 + k: leaf node_forward ("child") state of node k

    Schedule rows (int32, shape [4, N]):
      row 0: prev_slot  = slot of previous sibling's state (0 -> zero state)
      row 1: child_slot = slot of this node's child state
                          (leaf -> its own leaf slot N+1+k, inner -> last child's slot)
      row 2: is_leaf flag   (used only by the wrapper)
      row 3: leaf word id   (used only by the wrapper)
    """
    order = []

    def visit(node, prev_sibling):
        prev = None
        for ch in node.children:
            visit(ch, prev)
            prev = ch
        node.post_id = len(order)
        node.prev_sibling = prev_sibling
        order.append(node)

    visit(root, None)
    n = len(order)
    sched = np.zeros((4, n), dtype=np.int32)
    for node in order:
        k = node.post_id
        if node.prev_sibling is not None:
            sched[0, k] = node.prev_sibling.post_id + 1
        if node.is_leaf():
            sched[1, k] = n + 1 + k
            sched[2, k] = 1
            sched[3, k] = node.word
        else:
            sched[1, k] = node.children[-1].post_id + 1
    return sched, n


# ----------------------------------------------------------------------------
# Fused Pallas kernel: whole tree in a single invocation
# ----------------------------------------------------------------------------
def _treenet_kernel(sched_ref,                      # SMEM [2, N]: prev_slot, child_slot
                    x_ref,                          # (NPAD, IN) leaf embeddings
                    wx_ref, bxh_ref,                # (IN, 4*HP), (1, 4*HP)
                    ws_ref, wc_ref, bsc_ref,        # (HP, 3*HP), (HP, 3*HP), (1, 3*HP)
                    o_ref,                          # (1, HP) root hidden (lane-padded)
                    th_ref, tc_ref,                 # VMEM unified slot tables (2N+1, 1, HP)
                    *, num_nodes):
    HP = o_ref.shape[-1]
    f32 = jnp.float32

    # Only slot 0 (the zero state) is initialised; all other slots are written
    # before they are read.
    zero_row = jnp.zeros((1, HP), f32)
    th_ref[0] = zero_row
    tc_ref[0] = zero_row

    # ---- Batched leaf node_forward: ALL leaves in one MXU dot, off the serial chain.
    # node_forward(emb, *init_state()):  gates = x @ Wx + (bx + bh);  cell_x = 0.
    g = (jnp.dot(x_ref[...], wx_ref[...], preferred_element_type=f32)
         + bxh_ref[...])                                      # [NPAD, 4*HP]
    i_l = jax.nn.sigmoid(g[:, 0 * HP:1 * HP])
    o_l = jax.nn.sigmoid(g[:, 1 * HP:2 * HP])
    # forget gate multiplies the zero init cell -> drops out of the leaf cell.
    c_l = i_l * jnp.tanh(g[:, 3 * HP:4 * HP])                 # [NPAD, HP]
    h_l = o_l * jnp.tanh(c_l)                                 # [NPAD, HP]
    leaf_base = num_nodes + 1
    for k in range(num_nodes):                # tiny per-row stores into the slot table
        th_ref[leaf_base + k] = h_l[k:k + 1, :]
        tc_ref[leaf_base + k] = c_l[k:k + 1, :]

    # ---- Sequential post-order combine chain (branch-free, fully unrolled).
    # gates = encode_s(h_prev_sibling) + encode_c(h_child), fused biases, split as
    # two dots (no concat).  Padded lanes stay 0: sigmoid(0)=0.5 always scales a
    # zero cell / tanh(0) term.
    for k in range(num_nodes):
        prev = sched_ref[0, k]
        child = sched_ref[1, k]
        h_x = th_ref[prev]                                    # [1, HP]
        c_x = tc_ref[prev]
        h_c = th_ref[child]
        c_c = tc_ref[child]
        gates = (jnp.dot(h_x, ws_ref[...], preferred_element_type=f32)
                 + jnp.dot(h_c, wc_ref[...], preferred_element_type=f32)
                 + bsc_ref[...])                              # [1, 3*HP]
        i_g = jax.nn.sigmoid(gates[:, 0 * HP:1 * HP])
        o_g = jax.nn.sigmoid(gates[:, 1 * HP:2 * HP])
        f_g = jax.nn.sigmoid(gates[:, 2 * HP:3 * HP])
        cell = f_g * c_x + i_g * c_c
        hidden = o_g * jnp.tanh(cell)
        th_ref[k + 1] = hidden
        tc_ref[k + 1] = cell

    # Root is the last post-order node: single explicit output write.
    o_ref[...] = th_ref[num_nodes]


# ----------------------------------------------------------------------------
# Wrapper: gate-padded weights + one fused pallas_call (jitted)
# ----------------------------------------------------------------------------
def _pad_gate_cols(w, n_gates, h, hp):
    """[rows, n_gates*h] -> [rows, n_gates*hp], each gate block zero-padded."""
    rows = w.shape[0]
    w3 = w.reshape(rows, n_gates, h)
    out = jnp.zeros((rows, n_gates, hp), w.dtype).at[:, :, :h].set(w3)
    return out.reshape(rows, n_gates * hp)


@functools.partial(jax.jit,
                   static_argnames=("num_nodes", "input_size", "hidden_size"))
def _treenet_fused_call(params, sched, *, num_nodes, input_size, hidden_size):
    H, HP, IN = hidden_size, _HP, input_size
    NPAD = max(_NPAD, -(-num_nodes // 8) * 8)

    # Gate-padded, fused-bias weight layout (built once under jit, cached by XLA).
    wx_g = _pad_gate_cols(params["wx_t"], 4, H, HP)                    # [IN, 4*HP]
    bxh_g = _pad_gate_cols(params["bx"] + params["bh"], 4, H, HP)      # [1, 4*HP]
    ws_g = jnp.zeros((HP, 3 * HP), jnp.float32).at[:H, :].set(
        _pad_gate_cols(params["ws_t"], 3, H, HP))                      # [HP, 3*HP]
    wc_g = jnp.zeros((HP, 3 * HP), jnp.float32).at[:H, :].set(
        _pad_gate_cols(params["wc_t"], 3, H, HP))                      # [HP, 3*HP]
    bsc_g = _pad_gate_cols(params["bs"] + params["bc"], 3, H, HP)      # [1, 3*HP]

    # Leaf embedding rows (zero for internal nodes / padding rows).
    leaf_mask = sched[2].astype(jnp.float32)
    word_ids = sched[3]
    x_rows = params["emb"][word_ids] * leaf_mask[:, None]              # [N, IN]
    x_leaf = jnp.zeros((NPAD, IN), jnp.float32).at[:num_nodes].set(x_rows)

    sched_k = sched[:2]                                                # [2, N] slot indices
    n_slots = 2 * num_nodes + 1
    kernel = functools.partial(_treenet_kernel, num_nodes=num_nodes)

    # TODO(synk): to feed v7x's two TensorCores, batch multiple trees along the matmul M
    # dim with a leading "parallel" grid axis — the reference module evaluates one tree.
    out = pl.pallas_call(
        kernel,
        out_shape=jax.ShapeDtypeStruct((1, HP), jnp.float32),
        grid_spec=pltpu.PrefetchScalarGridSpec(
            num_scalar_prefetch=1,
            grid=(1,),
            in_specs=[
                pl.BlockSpec((NPAD, IN), lambda i, s: (0, 0)),          # leaf x (resident)
                pl.BlockSpec((IN, 4 * HP), lambda i, s: (0, 0)),        # Wx
                pl.BlockSpec((1, 4 * HP), lambda i, s: (0, 0)),         # bx + bh
                pl.BlockSpec((HP, 3 * HP), lambda i, s: (0, 0)),        # Ws (row-padded)
                pl.BlockSpec((HP, 3 * HP), lambda i, s: (0, 0)),        # Wc (row-padded)
                pl.BlockSpec((1, 3 * HP), lambda i, s: (0, 0)),         # bs + bc
            ],
            out_specs=pl.BlockSpec((1, HP), lambda i, s: (0, 0)),
            scratch_shapes=[
                pltpu.VMEM((n_slots, 1, HP), jnp.float32),              # unified h table
                pltpu.VMEM((n_slots, 1, HP), jnp.float32),              # unified c table
            ],
        ),
        compiler_params=pltpu.CompilerParams(
            dimension_semantics=("arbitrary",)),                        # single sequential step
    )(sched_k, x_leaf, wx_g, bxh_g, ws_g, wc_g, bsc_g)

    return out[:, :H]


def treenet_forward_pallas(params, root, input_size, hidden_size):
    # TODO(synk): tree flattening is data-dependent Python control flow and stays on the
    # host; per-node .state side effects live only in the kernel's VMEM slot table (only
    # the root hidden is returned, matching what TreeNet.forward returns).
    sched_np, num_nodes = flatten_tree(root)
    return _treenet_fused_call(params, jnp.asarray(sched_np),
                               num_nodes=num_nodes,
                               input_size=input_size,
                               hidden_size=hidden_size)


# ----------------------------------------------------------------------------
# Parameters + pure-JAX recursive reference (correctness check)
# ----------------------------------------------------------------------------
def init_params(key, input_size, hidden_size, vocab_size):
    ks = jax.random.split(key, 9)
    s = 0.1
    return {
        "emb":  s * jax.random.normal(ks[0], (vocab_size, input_size), jnp.float32),
        # Linear weights stored transposed: [in, out]
        "wx_t": s * jax.random.normal(ks[1], (input_size, 4 * hidden_size), jnp.float32),
        "bx":   s * jax.random.normal(ks[2], (1, 4 * hidden_size), jnp.float32),
        "wh_t": s * jax.random.normal(ks[3], (hidden_size, 4 * hidden_size), jnp.float32),
        "bh":   s * jax.random.normal(ks[4], (1, 4 * hidden_size), jnp.float32),
        "ws_t": s * jax.random.normal(ks[5], (hidden_size, 3 * hidden_size), jnp.float32),
        "bs":   s * jax.random.normal(ks[6], (1, 3 * hidden_size), jnp.float32),
        "wc_t": s * jax.random.normal(ks[7], (hidden_size, 3 * hidden_size), jnp.float32),
        "bc":   s * jax.random.normal(ks[8], (1, 3 * hidden_size), jnp.float32),
    }


def _node_forward_ref(params, x, h, c, hidden_size):
    gates = (x @ params["wx_t"] + params["bx"]
             + h @ params["wh_t"] + params["bh"])
    H = hidden_size
    i = jax.nn.sigmoid(gates[:, 0 * H:1 * H])
    o = jax.nn.sigmoid(gates[:, 1 * H:2 * H])
    f = jax.nn.sigmoid(gates[:, 2 * H:3 * H])
    g = jnp.tanh(gates[:, 3 * H:4 * H])
    cell = f * c + i * g
    return o * jnp.tanh(cell), cell


def treenet_forward_ref(params, node, state=None, *, hidden_size):
    if state is None:
        z = jnp.zeros((1, hidden_size), jnp.float32)
        state = (z, z)
    hidden_x, cell_x = state
    if node.is_leaf():
        x = params["emb"][jnp.asarray([node.word], jnp.int32)]
        z = jnp.zeros((1, hidden_size), jnp.float32)
        hidden_child, cell_child = _node_forward_ref(params, x, z, z, hidden_size)
    else:
        treenet_forward_ref(params, node.children[0], None, hidden_size=hidden_size)
        for i in range(1, len(node.children)):
            treenet_forward_ref(params, node.children[i],
                                node.children[i - 1].state, hidden_size=hidden_size)
        hidden_child, cell_child = node.children[-1].state
    gates = (hidden_x @ params["ws_t"] + params["bs"]
             + hidden_child @ params["wc_t"] + params["bc"])
    H = hidden_size
    i = jax.nn.sigmoid(gates[:, 0 * H:1 * H])
    o = jax.nn.sigmoid(gates[:, 1 * H:2 * H])
    f = jax.nn.sigmoid(gates[:, 2 * H:3 * H])
    cell = f * cell_x + i * cell_child
    hidden = o * jnp.tanh(cell)
    node.state = (hidden, cell)
    return hidden


# ----------------------------------------------------------------------------
if __name__ == "__main__":
    INPUT_SIZE, HIDDEN_SIZE, VOCAB_SIZE = 32, 32, 50
    params = init_params(jax.random.PRNGKey(0), INPUT_SIZE, HIDDEN_SIZE, VOCAB_SIZE)

    # Fused Pallas run (one pallas_call, one grid step, whole tree).
    hidden_pallas = treenet_forward_pallas(params, make_tree(),
                                           INPUT_SIZE, HIDDEN_SIZE)
    hidden_pallas = jax.block_until_ready(hidden_pallas)

    # Pure-JAX recursive reference on a fresh tree.
    hidden_ref = treenet_forward_ref(params, make_tree(), None,
                                     hidden_size=HIDDEN_SIZE)
    hidden_ref = jax.block_until_ready(hidden_ref)

    assert hidden_pallas.shape == (1, HIDDEN_SIZE)
    assert jnp.allclose(hidden_pallas, hidden_ref, atol=2e-5, rtol=2e-5), \
        "Pallas output does not match reference"
    print("KERNEL_OK")
</pallas_src>

<mosaic_0001>
module attributes {stable_mosaic.version = 11 : i64} {
  func.func @_treenet_kernel(%arg0: i32, %arg1: memref<2x6xi32, #tpu.memory_space<smem>>, %arg2: memref<8x32xf32, #tpu.memory_space<vmem>>, %arg3: memref<32x512xf32, #tpu.memory_space<vmem>>, %arg4: memref<1x512xf32, #tpu.memory_space<vmem>>, %arg5: memref<128x384xf32, #tpu.memory_space<vmem>>, %arg6: memref<128x384xf32, #tpu.memory_space<vmem>>, %arg7: memref<1x384xf32, #tpu.memory_space<vmem>>, %arg8: memref<1x128xf32, #tpu.memory_space<vmem>>, %arg9: memref<13x1x128xf32, #tpu.memory_space<vmem>>, %arg10: memref<13x1x128xf32, #tpu.memory_space<vmem>>) attributes {dimension_semantics = [#tpu.dimension_semantics<arbitrary>], iteration_bounds = array<i64: 1>, scalar_prefetch = 1 : i64, scratch_operands = 2 : i64, tpu.core_type = #tpu.core_type<tc>, window_params = [{pipeline_mode = #tpu.pipeline_mode<synchronous>, transform_indices = @transform_0, window_bounds = array<i64: 8, 32>}, {pipeline_mode = #tpu.pipeline_mode<synchronous>, transform_indices = @transform_1, window_bounds = array<i64: 32, 512>}, {pipeline_mode = #tpu.pipeline_mode<synchronous>, transform_indices = @transform_2, window_bounds = array<i64: 1, 512>}, {pipeline_mode = #tpu.pipeline_mode<synchronous>, transform_indices = @transform_3, window_bounds = array<i64: 128, 384>}, {pipeline_mode = #tpu.pipeline_mode<synchronous>, transform_indices = @transform_4, window_bounds = array<i64: 128, 384>}, {pipeline_mode = #tpu.pipeline_mode<synchronous>, transform_indices = @transform_5, window_bounds = array<i64: 1, 384>}, {pipeline_mode = #tpu.pipeline_mode<synchronous>, transform_indices = @transform_6, window_bounds = array<i64: 1, 128>}]} {
    %cst = arith.constant 0.000000e+00 : f32
    %0 = vector.broadcast %cst : f32 to vector<1x128xf32>
    %c0 = arith.constant 0 : index
    %c0_0 = arith.constant 0 : index
    %c0_1 = arith.constant 0 : index
    %1 = vector.load %arg9[%c0, %c0_0, %c0_1] : memref<13x1x128xf32, #tpu.memory_space<vmem>>, vector<1x1x128xf32>
    %2 = vector.shape_cast %1 : vector<1x1x128xf32> to vector<1x128xf32>
    %3 = vector.shape_cast %0 : vector<1x128xf32> to vector<1x1x128xf32>
    tpu.vector_store %arg9[%c0, %c0_0, %c0_1], %3 {strides = array<i32>} : memref<13x1x128xf32, #tpu.memory_space<vmem>>, vector<1x1x128xf32>,
    %c0_2 = arith.constant 0 : index
    %c0_3 = arith.constant 0 : index
    %c0_4 = arith.constant 0 : index
    %4 = vector.load %arg10[%c0_2, %c0_3, %c0_4] : memref<13x1x128xf32, #tpu.memory_space<vmem>>, vector<1x1x128xf32>
    %5 = vector.shape_cast %4 : vector<1x1x128xf32> to vector<1x128xf32>
    %6 = vector.shape_cast %0 : vector<1x128xf32> to vector<1x1x128xf32>
    tpu.vector_store %arg10[%c0_2, %c0_3, %c0_4], %6 {strides = array<i32>} : memref<13x1x128xf32, #tpu.memory_space<vmem>>, vector<1x1x128xf32>,
    %c0_5 = arith.constant 0 : index
    %c0_6 = arith.constant 0 : index
    %7 = vector.load %arg2[%c0_5, %c0_6] : memref<8x32xf32, #tpu.memory_space<vmem>>, vector<8x32xf32>
    %c0_7 = arith.constant 0 : index
    %c0_8 = arith.constant 0 : index
    %8 = vector.load %arg3[%c0_7, %c0_8] : memref<32x512xf32, #tpu.memory_space<vmem>>, vector<32x512xf32>
    %cst_9 = arith.constant dense<0.000000e+00> : vector<8x512xf32>
    %9 = tpu.matmul %7, %8, %cst_9 {dimension_numbers = #tpu.dot_dimension_numbers<[1], [0], [0], [1], [0, 0, 1, 1], [], []>} : vector<8x32xf32>, vector<32x512xf32>, vector<8x512xf32> -> vector<8x512xf32>
    %c0_10 = arith.constant 0 : index
    %c0_11 = arith.constant 0 : index
    %10 = vector.load %arg4[%c0_10, %c0_11] : memref<1x512xf32, #tpu.memory_space<vmem>>, vector<1x512xf32>
    %11 = vector.broadcast %10 : vector<1x512xf32> to vector<8x512xf32>
    %12 = arith.addf %9, %11 : vector<8x512xf32>
    %13 = vector.extract_strided_slice %12 {offsets = [0, 0], sizes = [8, 128], strides = [1, 1]} : vector<8x512xf32> to vector<8x128xf32>
    %14 = arith.negf %13 : vector<8x128xf32>
    %15 = math.exp %14 : vector<8x128xf32>
    %cst_12 = arith.constant 1.000000e+00 : f32
    %16 = vector.broadcast %cst_12 : f32 to vector<8x128xf32>
    %17 = arith.addf %16, %15 : vector<8x128xf32>
    %18 = arith.divf %16, %17 : vector<8x128xf32>
    %19 = vector.extract_strided_slice %12 {offsets = [0, 128], sizes = [8, 128], strides = [1, 1]} : vector<8x512xf32> to vector<8x128xf32>
    %20 = arith.negf %19 : vector<8x128xf32>
    %21 = math.exp %20 : vector<8x128xf32>
    %cst_13 = arith.constant 1.000000e+00 : f32
    %22 = vector.broadcast %cst_13 : f32 to vector<8x128xf32>
    %23 = arith.addf %22, %21 : vector<8x128xf32>
    %24 = arith.divf %22, %23 : vector<8x128xf32>
    %25 = vector.extract_strided_slice %12 {offsets = [0, 384], sizes = [8, 128], strides = [1, 1]} : vector<8x512xf32> to vector<8x128xf32>
    %26 = math.tanh %25 : vector<8x128xf32>
    %27 = arith.mulf %18, %26 : vector<8x128xf32>
    %28 = math.tanh %27 : vector<8x128xf32>
    %29 = arith.mulf %24, %28 : vector<8x128xf32>
    %30 = vector.extract_strided_slice %29 {offsets = [0, 0], sizes = [1, 128], strides = [1, 1]} : vector<8x128xf32> to vector<1x128xf32>
    %c7 = arith.constant 7 : index
    %c0_14 = arith.constant 0 : index
    %c0_15 = arith.constant 0 : index
    %31 = vector.load %arg9[%c7, %c0_14, %c0_15] : memref<13x1x128xf32, #tpu.memory_space<vmem>>, vector<1x1x128xf32>
    %32 = vector.shape_cast %31 : vector<1x1x128xf32> to vector<1x128xf32>
    %33 = vector.shape_cast %30 : vector<1x128xf32> to vector<1x1x128xf32>
    tpu.vector_store %arg9[%c7, %c0_14, %c0_15], %33 {strides = array<i32>} : memref<13x1x128xf32, #tpu.memory_space<vmem>>, vector<1x1x128xf32>,
    %34 = vector.extract_strided_slice %27 {offsets = [0, 0], sizes = [1, 128], strides = [1, 1]} : vector<8x128xf32> to vector<1x128xf32>
    %c7_16 = arith.constant 7 : index
    %c0_17 = arith.constant 0 : index
    %c0_18 = arith.constant 0 : index
    %35 = vector.load %arg10[%c7_16, %c0_17, %c0_18] : memref<13x1x128xf32, #tpu.memory_space<vmem>>, vector<1x1x128xf32>
    %36 = vector.shape_cast %35 : vector<1x1x128xf32> to vector<1x128xf32>
    %37 = vector.shape_cast %34 : vector<1x128xf32> to vector<1x1x128xf32>
    tpu.vector_store %arg10[%c7_16, %c0_17, %c0_18], %37 {strides = array<i32>} : memref<13x1x128xf32, #tpu.memory_space<vmem>>, vector<1x1x128xf32>,
    %38 = vector.extract_strided_slice %29 {offsets = [1, 0], sizes = [1, 128], strides = [1, 1]} : vector<8x128xf32> to vector<1x128xf32>
    %c8 = arith.constant 8 : index
    %c0_19 = arith.constant 0 : index
    %c0_20 = arith.constant 0 : index
    %39 = vector.load %arg9[%c8, %c0_19, %c0_20] : memref<13x1x128xf32, #tpu.memory_space<vmem>>, vector<1x1x128xf32>
    %40 = vector.shape_cast %39 : vector<1x1x128xf32> to vector<1x128xf32>
    %41 = vector.shape_cast %38 : vector<1x128xf32> to vector<1x1x128xf32>
    tpu.vector_store %arg9[%c8, %c0_19, %c0_20], %41 {strides = array<i32>} : memref<13x1x128xf32, #tpu.memory_space<vmem>>, vector<1x1x128xf32>,
    %42 = vector.extract_strided_slice %27 {offsets = [1, 0], sizes = [1, 128], strides = [1, 1]} : vector<8x128xf32> to vector<1x128xf32>
    %c8_21 = arith.constant 8 : index
    %c0_22 = arith.constant 0 : index
    %c0_23 = arith.constant 0 : index
    %43 = vector.load %arg10[%c8_21, %c0_22, %c0_23] : memref<13x1x128xf32, #tpu.memory_space<vmem>>, vector<1x1x128xf32>
    %44 = vector.shape_cast %43 : vector<1x1x128xf32> to vector<1x128xf32>
    %45 = vector.shape_cast %42 : vector<1x128xf32> to vector<1x1x128xf32>
    tpu.vector_store %arg10[%c8_21, %c0_22, %c0_23], %45 {strides = array<i32>} : memref<13x1x128xf32, #tpu.memory_space<vmem>>, vector<1x1x128xf32>,
    %46 = vector.extract_strided_slice %29 {offsets = [2, 0], sizes = [1, 128], strides = [1, 1]} : vector<8x128xf32> to vector<1x128xf32>
    %c9 = arith.constant 9 : index
    %c0_24 = arith.constant 0 : index
    %c0_25 = arith.constant 0 : index
    %47 = vector.load %arg9[%c9, %c0_24, %c0_25] : memref<13x1x128xf32, #tpu.memory_space<vmem>>, vector<1x1x128xf32>
    %48 = vector.shape_cast %47 : vector<1x1x128xf32> to vector<1x128xf32>
    %49 = vector.shape_cast %46 : vector<1x128xf32> to vector<1x1x128xf32>
    tpu.vector_store %arg9[%c9, %c0_24, %c0_25], %49 {strides = array<i32>} : memref<13x1x128xf32, #tpu.memory_space<vmem>>, vector<1x1x128xf32>,
    %50 = vector.extract_strided_slice %27 {offsets = [2, 0], sizes = [1, 128], strides = [1, 1]} : vector<8x128xf32> to vector<1x128xf32>
    %c9_26 = arith.constant 9 : index
    %c0_27 = arith.constant 0 : index
    %c0_28 = arith.constant 0 : index
    %51 = vector.load %arg10[%c9_26, %c0_27, %c0_28] : memref<13x1x128xf32, #tpu.memory_space<vmem>>, vector<1x1x128xf32>
    %52 = vector.shape_cast %51 : vector<1x1x128xf32> to vector<1x128xf32>
    %53 = vector.shape_cast %50 : vector<1x128xf32> to vector<1x1x128xf32>
    tpu.vector_store %arg10[%c9_26, %c0_27, %c0_28], %53 {strides = array<i32>} : memref<13x1x128xf32, #tpu.memory_space<vmem>>, vector<1x1x128xf32>,
    %54 = vector.extract_strided_slice %29 {offsets = [3, 0], sizes = [1, 128], strides = [1, 1]} : vector<8x128xf32> to vector<1x128xf32>
    %c10 = arith.constant 10 : index
    %c0_29 = arith.constant 0 : index
    %c0_30 = arith.constant 0 : index
    %55 = vector.load %arg9[%c10, %c0_29, %c0_30] : memref<13x1x128xf32, #tpu.memory_space<vmem>>, vector<1x1x128xf32>
    %56 = vector.shape_cast %55 : vector<1x1x128xf32> to vector<1x128xf32>
    %57 = vector.shape_cast %54 : vector<1x128xf32> to vector<1x1x128xf32>
    tpu.vector_store %arg9[%c10, %c0_29, %c0_30], %57 {strides = array<i32>} : memref<13x1x128xf32, #tpu.memory_space<vmem>>, vector<1x1x128xf32>,
    %58 = vector.extract_strided_slice %27 {offsets = [3, 0], sizes = [1, 128], strides = [1, 1]} : vector<8x128xf32> to vector<1x128xf32>
    %c10_31 = arith.constant 10 : index
    %c0_32 = arith.constant 0 : index
    %c0_33 = arith.constant 0 : index
    %59 = vector.load %arg10[%c10_31, %c0_32, %c0_33] : memref<13x1x128xf32, #tpu.memory_space<vmem>>, vector<1x1x128xf32>
    %60 = vector.shape_cast %59 : vector<1x1x128xf32> to vector<1x128xf32>
    %61 = vector.shape_cast %58 : vector<1x128xf32> to vector<1x1x128xf32>
    tpu.vector_store %arg10[%c10_31, %c0_32, %c0_33], %61 {strides = array<i32>} : memref<13x1x128xf32, #tpu.memory_space<vmem>>, vector<1x1x128xf32>,
    %62 = vector.extract_strided_slice %29 {offsets = [4, 0], sizes = [1, 128], strides = [1, 1]} : vector<8x128xf32> to vector<1x128xf32>
    %c11 = arith.constant 11 : index
    %c0_34 = arith.constant 0 : index
    %c0_35 = arith.constant 0 : index
    %63 = vector.load %arg9[%c11, %c0_34, %c0_35] : memref<13x1x128xf32, #tpu.memory_space<vmem>>, vector<1x1x128xf32>
    %64 = vector.shape_cast %63 : vector<1x1x128xf32> to vector<1x128xf32>
    %65 = vector.shape_cast %62 : vector<1x128xf32> to vector<1x1x128xf32>
    tpu.vector_store %arg9[%c11, %c0_34, %c0_35], %65 {strides = array<i32>} : memref<13x1x128xf32, #tpu.memory_space<vmem>>, vector<1x1x128xf32>,
    %66 = vector.extract_strided_slice %27 {offsets = [4, 0], sizes = [1, 128], strides = [1, 1]} : vector<8x128xf32> to vector<1x128xf32>
    %c11_36 = arith.constant 11 : index
    %c0_37 = arith.constant 0 : index
    %c0_38 = arith.constant 0 : index
    %67 = vector.load %arg10[%c11_36, %c0_37, %c0_38] : memref<13x1x128xf32, #tpu.memory_space<vmem>>, vector<1x1x128xf32>
    %68 = vector.shape_cast %67 : vector<1x1x128xf32> to vector<1x128xf32>
    %69 = vector.shape_cast %66 : vector<1x128xf32> to vector<1x1x128xf32>
    tpu.vector_store %arg10[%c11_36, %c0_37, %c0_38], %69 {strides = array<i32>} : memref<13x1x128xf32, #tpu.memory_space<vmem>>, vector<1x1x128xf32>,
    %70 = vector.extract_strided_slice %29 {offsets = [5, 0], sizes = [1, 128], strides = [1, 1]} : vector<8x128xf32> to vector<1x128xf32>
    %c12 = arith.constant 12 : index
    %c0_39 = arith.constant 0 : index
    %c0_40 = arith.constant 0 : index
    %71 = vector.load %arg9[%c12, %c0_39, %c0_40] : memref<13x1x128xf32, #tpu.memory_space<vmem>>, vector<1x1x128xf32>
    %72 = vector.shape_cast %71 : vector<1x1x128xf32> to vector<1x128xf32>
    %73 = vector.shape_cast %70 : vector<1x128xf32> to vector<1x1x128xf32>
    tpu.vector_store %arg9[%c12, %c0_39, %c0_40], %73 {strides = array<i32>} : memref<13x1x128xf32, #tpu.memory_space<vmem>>, vector<1x1x128xf32>,
    %74 = vector.extract_strided_slice %27 {offsets = [5, 0], sizes = [1, 128], strides = [1, 1]} : vector<8x128xf32> to vector<1x128xf32>
    %c12_41 = arith.constant 12 : index
    %c0_42 = arith.constant 0 : index
    %c0_43 = arith.constant 0 : index
    %75 = vector.load %arg10[%c12_41, %c0_42, %c0_43] : memref<13x1x128xf32, #tpu.memory_space<vmem>>, vector<1x1x128xf32>
    %76 = vector.shape_cast %75 : vector<1x1x128xf32> to vector<1x128xf32>
    %77 = vector.shape_cast %74 : vector<1x128xf32> to vector<1x1x128xf32>
    tpu.vector_store %arg10[%c12_41, %c0_42, %c0_43], %77 {strides = array<i32>} : memref<13x1x128xf32, #tpu.memory_space<vmem>>, vector<1x1x128xf32>,
    %c0_44 = arith.constant 0 : index
    %c0_45 = arith.constant 0 : index
    %78 = memref.load %arg1[%c0_44, %c0_45] : memref<2x6xi32, #tpu.memory_space<smem>>
    %c1 = arith.constant 1 : index
    %c0_46 = arith.constant 0 : index
    %79 = memref.load %arg1[%c1, %c0_46] : memref<2x6xi32, #tpu.memory_space<smem>>
    %80 = arith.index_cast %78 : i32 to index
    %c0_47 = arith.constant 0 : index
    %c0_48 = arith.constant 0 : index
    %81 = vector.load %arg9[%80, %c0_47, %c0_48] : memref<13x1x128xf32, #tpu.memory_space<vmem>>, vector<1x1x128xf32>
    %82 = vector.shape_cast %81 : vector<1x1x128xf32> to vector<1x128xf32>
    %83 = arith.index_cast %78 : i32 to index
    %c0_49 = arith.constant 0 : index
    %c0_50 = arith.constant 0 : index
    %84 = vector.load %arg10[%83, %c0_49, %c0_50] : memref<13x1x128xf32, #tpu.memory_space<vmem>>, vector<1x1x128xf32>
    %85 = vector.shape_cast %84 : vector<1x1x128xf32> to vector<1x128xf32>
    %86 = arith.index_cast %79 : i32 to index
    %c0_51 = arith.constant 0 : index
    %c0_52 = arith.constant 0 : index
    %87 = vector.load %arg9[%86, %c0_51, %c0_52] : memref<13x1x128xf32, #tpu.memory_space<vmem>>, vector<1x1x128xf32>
    %88 = vector.shape_cast %87 : vector<1x1x128xf32> to vector<1x128xf32>
    %89 = arith.index_cast %79 : i32 to index
    %c0_53 = arith.constant 0 : index
    %c0_54 = arith.constant 0 : index
    %90 = vector.load %arg10[%89, %c0_53, %c0_54] : memref<13x1x128xf32, #tpu.memory_space<vmem>>, vector<1x1x128xf32>
    %91 = vector.shape_cast %90 : vector<1x1x128xf32> to vector<1x128xf32>
    %c0_55 = arith.constant 0 : index
    %c0_56 = arith.constant 0 : index
    %92 = vector.load %arg5[%c0_55, %c0_56] : memref<128x384xf32, #tpu.memory_space<vmem>>, vector<128x384xf32>
    %cst_57 = arith.constant dense<0.000000e+00> : vector<1x384xf32>
    %93 = tpu.matmul %82, %92, %cst_57 {dimension_numbers = #tpu.dot_dimension_numbers<[1], [0], [0], [1], [0, 0, 1, 1], [], []>} : vector<1x128xf32>, vector<128x384xf32>, vector<1x384xf32> -> vector<1x384xf32>
    %c0_58 = arith.constant 0 : index
    %c0_59 = arith.constant 0 : index
    %94 = vector.load %arg6[%c0_58, %c0_59] : memref<128x384xf32, #tpu.memory_space<vmem>>, vector<128x384xf32>
    %cst_60 = arith.constant dense<0.000000e+00> : vector<1x384xf32>
    %95 = tpu.matmul %88, %94, %cst_60 {dimension_numbers = #tpu.dot_dimension_numbers<[1], [0], [0], [1], [0, 0, 1, 1], [], []>} : vector<1x128xf32>, vector<128x384xf32>, vector<1x384xf32> -> vector<1x384xf32>
    %96 = arith.addf %93, %95 : vector<1x384xf32>
    %c0_61 = arith.constant 0 : index
    %c0_62 = arith.constant 0 : index
    %97 = vector.load %arg7[%c0_61, %c0_62] : memref<1x384xf32, #tpu.memory_space<vmem>>, vector<1x384xf32>
    %98 = arith.addf %96, %97 : vector<1x384xf32>
    %99 = vector.extract_strided_slice %98 {offsets = [0, 0], sizes = [1, 128], strides = [1, 1]} : vector<1x384xf32> to vector<1x128xf32>
    %100 = arith.negf %99 : vector<1x128xf32>
    %101 = math.exp %100 : vector<1x128xf32>
    %cst_63 = arith.constant 1.000000e+00 : f32
    %102 = vector.broadcast %cst_63 : f32 to vector<1x128xf32>
    %103 = arith.addf %102, %101 : vector<1x128xf32>
    %104 = arith.divf %102, %103 : vector<1x128xf32>
    %105 = vector.extract_strided_slice %98 {offsets = [0, 128], sizes = [1, 128], strides = [1, 1]} : vector<1x384xf32> to vector<1x128xf32>
    %106 = arith.negf %105 : vector<1x128xf32>
    %107 = math.exp %106 : vector<1x128xf32>
    %cst_64 = arith.constant 1.000000e+00 : f32
    %108 = vector.broadcast %cst_64 : f32 to vector<1x128xf32>
    %109 = arith.addf %108, %107 : vector<1x128xf32>
    %110 = arith.divf %108, %109 : vector<1x128xf32>
    %111 = vector.extract_strided_slice %98 {offsets = [0, 256], sizes = [1, 128], strides = [1, 1]} : vector<1x384xf32> to vector<1x128xf32>
    %112 = arith.negf %111 : vector<1x128xf32>
    %113 = math.exp %112 : vector<1x128xf32>
    %cst_65 = arith.constant 1.000000e+00 : f32
    %114 = vector.broadcast %cst_65 : f32 to vector<1x128xf32>
    %115 = arith.addf %114, %113 : vector<1x128xf32>
    %116 = arith.divf %114, %115 : vector<1x128xf32>
    %117 = arith.mulf %116, %85 : vector<1x128xf32>
    %118 = arith.mulf %104, %91 : vector<1x128xf32>
    %119 = arith.addf %117, %118 : vector<1x128xf32>
    %120 = math.tanh %119 : vector<1x128xf32>
    %121 = arith.mulf %110, %120 : vector<1x128xf32>
    %c1_66 = arith.constant 1 : index
    %c0_67 = arith.constant 0 : index
    %c0_68 = arith.constant 0 : index
    %122 = vector.load %arg9[%c1_66, %c0_67, %c0_68] : memref<13x1x128xf32, #tpu.memory_space<vmem>>, vector<1x1x128xf32>
    %123 = vector.shape_cast %122 : vector<1x1x128xf32> to vector<1x128xf32>
    %124 = vector.shape_cast %121 : vector<1x128xf32> to vector<1x1x128xf32>
    tpu.vector_store %arg9[%c1_66, %c0_67, %c0_68], %124 {strides = array<i32>} : memref<13x1x128xf32, #tpu.memory_space<vmem>>, vector<1x1x128xf32>,
    %c1_69 = arith.constant 1 : index
    %c0_70 = arith.constant 0 : index
    %c0_71 = arith.constant 0 : index
    %125 = vector.load %arg10[%c1_69, %c0_70, %c0_71] : memref<13x1x128xf32, #tpu.memory_space<vmem>>, vector<1x1x128xf32>
    %126 = vector.shape_cast %125 : vector<1x1x128xf32> to vector<1x128xf32>
    %127 = vector.shape_cast %119 : vector<1x128xf32> to vector<1x1x128xf32>
    tpu.vector_store %arg10[%c1_69, %c0_70, %c0_71], %127 {strides = array<i32>} : memref<13x1x128xf32, #tpu.memory_space<vmem>>, vector<1x1x128xf32>,
    %c0_72 = arith.constant 0 : index
    %c1_73 = arith.constant 1 : index
    %128 = memref.load %arg1[%c0_72, %c1_73] : memref<2x6xi32, #tpu.memory_space<smem>>
    %c1_74 = arith.constant 1 : index
    %c1_75 = arith.constant 1 : index
    %129 = memref.load %arg1[%c1_74, %c1_75] : memref<2x6xi32, #tpu.memory_space<smem>>
    %130 = arith.index_cast %128 : i32 to index
    %c0_76 = arith.constant 0 : index
    %c0_77 = arith.constant 0 : index
    %131 = vector.load %arg9[%130, %c0_76, %c0_77] : memref<13x1x128xf32, #tpu.memory_space<vmem>>, vector<1x1x128xf32>
    %132 = vector.shape_cast %131 : vector<1x1x128xf32> to vector<1x128xf32>
    %133 = arith.index_cast %128 : i32 to index
    %c0_78 = arith.constant 0 : index
    %c0_79 = arith.constant 0 : index
    %134 = vector.load %arg10[%133, %c0_78, %c0_79] : memref<13x1x128xf32, #tpu.memory_space<vmem>>, vector<1x1x128xf32>
    %135 = vector.shape_cast %134 : vector<1x1x128xf32> to vector<1x128xf32>
    %136 = arith.index_cast %129 : i32 to index
    %c0_80 = arith.constant 0 : index
    %c0_81 = arith.constant 0 : index
    %137 = vector.load %arg9[%136, %c0_80, %c0_81] : memref<13x1x128xf32, #tpu.memory_space<vmem>>, vector<1x1x128xf32>
    %138 = vector.shape_cast %137 : vector<1x1x128xf32> to vector<1x128xf32>
    %139 = arith.index_cast %129 : i32 to index
    %c0_82 = arith.constant 0 : index
    %c0_83 = arith.constant 0 : index
    %140 = vector.load %arg10[%139, %c0_82, %c0_83] : memref<13x1x128xf32, #tpu.memory_space<vmem>>, vector<1x1x128xf32>
    %141 = vector.shape_cast %140 : vector<1x1x128xf32> to vector<1x128xf32>
    %c0_84 = arith.constant 0 : index
    %c0_85 = arith.constant 0 : index
    %142 = vector.load %arg5[%c0_84, %c0_85] : memref<128x384xf32, #tpu.memory_space<vmem>>, vector<128x384xf32>
    %cst_86 = arith.constant dense<0.000000e+00> : vector<1x384xf32>
    %143 = tpu.matmul %132, %142, %cst_86 {dimension_numbers = #tpu.dot_dimension_numbers<[1], [0], [0], [1], [0, 0, 1, 1], [], []>} : vector<1x128xf32>, vector<128x384xf32>, vector<1x384xf32> -> vector<1x384xf32>
    %c0_87 = arith.constant 0 : index
    %c0_88 = arith.constant 0 : index
    %144 = vector.load %arg6[%c0_87, %c0_88] : memref<128x384xf32, #tpu.memory_space<vmem>>, vector<128x384xf32>
    %cst_89 = arith.constant dense<0.000000e+00> : vector<1x384xf32>
    %145 = tpu.matmul %138, %144, %cst_89 {dimension_numbers = #tpu.dot_dimension_numbers<[1], [0], [0], [1], [0, 0, 1, 1], [], []>} : vector<1x128xf32>, vector<128x384xf32>, vector<1x384xf32> -> vector<1x384xf32>
    %146 = arith.addf %143, %145 : vector<1x384xf32>
    %c0_90 = arith.constant 0 : index
    %c0_91 = arith.constant 0 : index
    %147 = vector.load %arg7[%c0_90, %c0_91] : memref<1x384xf32, #tpu.memory_space<vmem>>, vector<1x384xf32>
    %148 = arith.addf %146, %147 : vector<1x384xf32>
    %149 = vector.extract_strided_slice %148 {offsets = [0, 0], sizes = [1, 128], strides = [1, 1]} : vector<1x384xf32> to vector<1x128xf32>
    %150 = arith.negf %149 : vector<1x128xf32>
    %151 = math.exp %150 : vector<1x128xf32>
    %cst_92 = arith.constant 1.000000e+00 : f32
    %152 = vector.broadcast %cst_92 : f32 to vector<1x128xf32>
    %153 = arith.addf %152, %151 : vector<1x128xf32>
    %154 = arith.divf %152, %153 : vector<1x128xf32>
    %155 = vector.extract_strided_slice %148 {offsets = [0, 128], sizes = [1, 128], strides = [1, 1]} : vector<1x384xf32> to vector<1x128xf32>
    %156 = arith.negf %155 : vector<1x128xf32>
    %157 = math.exp %156 : vector<1x128xf32>
    %cst_93 = arith.constant 1.000000e+00 : f32
    %158 = vector.broadcast %cst_93 : f32 to vector<1x128xf32>
    %159 = arith.addf %158, %157 : vector<1x128xf32>
    %160 = arith.divf %158, %159 : vector<1x128xf32>
    %161 = vector.extract_strided_slice %148 {offsets = [0, 256], sizes = [1, 128], strides = [1, 1]} : vector<1x384xf32> to vector<1x128xf32>
    %162 = arith.negf %161 : vector<1x128xf32>
    %163 = math.exp %162 : vector<1x128xf32>
    %cst_94 = arith.constant 1.000000e+00 : f32
    %164 = vector.broadcast %cst_94 : f32 to vector<1x128xf32>
    %165 = arith.addf %164, %163 : vector<1x128xf32>
    %166 = arith.divf %164, %165 : vector<1x128xf32>
    %167 = arith.mulf %166, %135 : vector<1x128xf32>
    %168 = arith.mulf %154, %141 : vector<1x128xf32>
    %169 = arith.addf %167, %168 : vector<1x128xf32>
    %170 = math.tanh %169 : vector<1x128xf32>
    %171 = arith.mulf %160, %170 : vector<1x128xf32>
    %c2 = arith.constant 2 : index
    %c0_95 = arith.constant 0 : index
    %c0_96 = arith.constant 0 : index
    %172 = vector.load %arg9[%c2, %c0_95, %c0_96] : memref<13x1x128xf32, #tpu.memory_space<vmem>>, vector<1x1x128xf32>
    %173 = vector.shape_cast %172 : vector<1x1x128xf32> to vector<1x128xf32>
    %174 = vector.shape_cast %171 : vector<1x128xf32> to vector<1x1x128xf32>
    tpu.vector_store %arg9[%c2, %c0_95, %c0_96], %174 {strides = array<i32>} : memref<13x1x128xf32, #tpu.memory_space<vmem>>, vector<1x1x128xf32>,
    %c2_97 = arith.constant 2 : index
    %c0_98 = arith.constant 0 : index
    %c0_99 = arith.constant 0 : index
    %175 = vector.load %arg10[%c2_97, %c0_98, %c0_99] : memref<13x1x128xf32, #tpu.memory_space<vmem>>, vector<1x1x128xf32>
    %176 = vector.shape_cast %175 : vector<1x1x128xf32> to vector<1x128xf32>
    %177 = vector.shape_cast %169 : vector<1x128xf32> to vector<1x1x128xf32>
    tpu.vector_store %arg10[%c2_97, %c0_98, %c0_99], %177 {strides = array<i32>} : memref<13x1x128xf32, #tpu.memory_space<vmem>>, vector<1x1x128xf32>,
    %c0_100 = arith.constant 0 : index
    %c2_101 = arith.constant 2 : index
    %178 = memref.load %arg1[%c0_100, %c2_101] : memref<2x6xi32, #tpu.memory_space<smem>>
    %c1_102 = arith.constant 1 : index
    %c2_103 = arith.constant 2 : index
    %179 = memref.load %arg1[%c1_102, %c2_103] : memref<2x6xi32, #tpu.memory_space<smem>>
    %180 = arith.index_cast %178 : i32 to index
    %c0_104 = arith.constant 0 : index
    %c0_105 = arith.constant 0 : index
    %181 = vector.load %arg9[%180, %c0_104, %c0_105] : memref<13x1x128xf32, #tpu.memory_space<vmem>>, vector<1x1x128xf32>
    %182 = vector.shape_cast %181 : vector<1x1x128xf32> to vector<1x128xf32>
    %183 = arith.index_cast %178 : i32 to index
    %c0_106 = arith.constant 0 : index
    %c0_107 = arith.constant 0 : index
    %184 = vector.load %arg10[%183, %c0_106, %c0_107] : memref<13x1x128xf32, #tpu.memory_space<vmem>>, vector<1x1x128xf32>
    %185 = vector.shape_cast %184 : vector<1x1x128xf32> to vector<1x128xf32>
    %186 = arith.index_cast %179 : i32 to index
    %c0_108 = arith.constant 0 : index
    %c0_109 = arith.constant 0 : index
    %187 = vector.load %arg9[%186, %c0_108, %c0_109] : memref<13x1x128xf32, #tpu.memory_space<vmem>>, vector<1x1x128xf32>
    %188 = vector.shape_cast %187 : vector<1x1x128xf32> to vector<1x128xf32>
    %189 = arith.index_cast %179 : i32 to index
    %c0_110 = arith.constant 0 : index
    %c0_111 = arith.constant 0 : index
    %190 = vector.load %arg10[%189, %c0_110, %c0_111] : memref<13x1x128xf32, #tpu.memory_space<vmem>>, vector<1x1x128xf32>
    %191 = vector.shape_cast %190 : vector<1x1x128xf32> to vector<1x128xf32>
    %c0_112 = arith.constant 0 : index
    %c0_113 = arith.constant 0 : index
    %192 = vector.load %arg5[%c0_112, %c0_113] : memref<128x384xf32, #tpu.memory_space<vmem>>, vector<128x384xf32>
    %cst_114 = arith.constant dense<0.000000e+00> : vector<1x384xf32>
    %193 = tpu.matmul %182, %192, %cst_114 {dimension_numbers = #tpu.dot_dimension_numbers<[1], [0], [0], [1], [0, 0, 1, 1], [], []>} : vector<1x128xf32>, vector<128x384xf32>, vector<1x384xf32> -> vector<1x384xf32>
    %c0_115 = arith.constant 0 : index
    %c0_116 = arith.constant 0 : index
    %194 = vector.load %arg6[%c0_115, %c0_116] : memref<128x384xf32, #tpu.memory_space<vmem>>, vector<128x384xf32>
    %cst_117 = arith.constant dense<0.000000e+00> : vector<1x384xf32>
    %195 = tpu.matmul %188, %194, %cst_117 {dimension_numbers = #tpu.dot_dimension_numbers<[1], [0], [0], [1], [0, 0, 1, 1], [], []>} : vector<1x128xf32>, vector<128x384xf32>, vector<1x384xf32> -> vector<1x384xf32>
    %196 = arith.addf %193, %195 : vector<1x384xf32>
    %c0_118 = arith.constant 0 : index
    %c0_119 = arith.constant 0 : index
    %197 = vector.load %arg7[%c0_118, %c0_119] : memref<1x384xf32, #tpu.memory_space<vmem>>, vector<1x384xf32>
    %198 = arith.addf %196, %197 : vector<1x384xf32>
    %199 = vector.extract_strided_slice %198 {offsets = [0, 0], sizes = [1, 128], strides = [1, 1]} : vector<1x384xf32> to vector<1x128xf32>
    %200 = arith.negf %199 : vector<1x128xf32>
    %201 = math.exp %200 : vector<1x128xf32>
    %cst_120 = arith.constant 1.000000e+00 : f32
    %202 = vector.broadcast %cst_120 : f32 to vector<1x128xf32>
    %203 = arith.addf %202, %201 : vector<1x128xf32>
    %204 = arith.divf %202, %203 : vector<1x128xf32>
    %205 = vector.extract_strided_slice %198 {offsets = [0, 128], sizes = [1, 128], strides = [1, 1]} : vector<1x384xf32> to vector<1x128xf32>
    %206 = arith.negf %205 : vector<1x128xf32>
    %207 = math.exp %206 : vector<1x128xf32>
    %cst_121 = arith.constant 1.000000e+00 : f32
    %208 = vector.broadcast %cst_121 : f32 to vector<1x128xf32>
    %209 = arith.addf %208, %207 : vector<1x128xf32>
    %210 = arith.divf %208, %209 : vector<1x128xf32>
    %211 = vector.extract_strided_slice %198 {offsets = [0, 256], sizes = [1, 128], strides = [1, 1]} : vector<1x384xf32> to vector<1x128xf32>
    %212 = arith.negf %211 : vector<1x128xf32>
    %213 = math.exp %212 : vector<1x128xf32>
    %cst_122 = arith.constant 1.000000e+00 : f32
    %214 = vector.broadcast %cst_122 : f32 to vector<1x128xf32>
    %215 = arith.addf %214, %213 : vector<1x128xf32>
    %216 = arith.divf %214, %215 : vector<1x128xf32>
    %217 = arith.mulf %216, %185 : vector<1x128xf32>
    %218 = arith.mulf %204, %191 : vector<1x128xf32>
    %219 = arith.addf %217, %218 : vector<1x128xf32>
    %220 = math.tanh %219 : vector<1x128xf32>
    %221 = arith.mulf %210, %220 : vector<1x128xf32>
    %c3 = arith.constant 3 : index
    %c0_123 = arith.constant 0 : index
    %c0_124 = arith.constant 0 : index
    %222 = vector.load %arg9[%c3, %c0_123, %c0_124] : memref<13x1x128xf32, #tpu.memory_space<vmem>>, vector<1x1x128xf32>
    %223 = vector.shape_cast %222 : vector<1x1x128xf32> to vector<1x128xf32>
    %224 = vector.shape_cast %221 : vector<1x128xf32> to vector<1x1x128xf32>
    tpu.vector_store %arg9[%c3, %c0_123, %c0_124], %224 {strides = array<i32>} : memref<13x1x128xf32, #tpu.memory_space<vmem>>, vector<1x1x128xf32>,
    %c3_125 = arith.constant 3 : index
    %c0_126 = arith.constant 0 : index
    %c0_127 = arith.constant 0 : index
    %225 = vector.load %arg10[%c3_125, %c0_126, %c0_127] : memref<13x1x128xf32, #tpu.memory_space<vmem>>, vector<1x1x128xf32>
    %226 = vector.shape_cast %225 : vector<1x1x128xf32> to vector<1x128xf32>
    %227 = vector.shape_cast %219 : vector<1x128xf32> to vector<1x1x128xf32>
    tpu.vector_store %arg10[%c3_125, %c0_126, %c0_127], %227 {strides = array<i32>} : memref<13x1x128xf32, #tpu.memory_space<vmem>>, vector<1x1x128xf32>,
    %c0_128 = arith.constant 0 : index
    %c3_129 = arith.constant 3 : index
    %228 = memref.load %arg1[%c0_128, %c3_129] : memref<2x6xi32, #tpu.memory_space<smem>>
    %c1_130 = arith.constant 1 : index
    %c3_131 = arith.constant 3 : index
    %229 = memref.load %arg1[%c1_130, %c3_131] : memref<2x6xi32, #tpu.memory_space<smem>>
    %230 = arith.index_cast %228 : i32 to index
    %c0_132 = arith.constant 0 : index
    %c0_133 = arith.constant 0 : index
    %231 = vector.load %arg9[%230, %c0_132, %c0_133] : memref<13x1x128xf32, #tpu.memory_space<vmem>>, vector<1x1x128xf32>
    %232 = vector.shape_cast %231 : vector<1x1x128xf32> to vector<1x128xf32>
    %233 = arith.index_cast %228 : i32 to index
    %c0_134 = arith.constant 0 : index
    %c0_135 = arith.constant 0 : index
    %234 = vector.load %arg10[%233, %c0_134, %c0_135] : memref<13x1x128xf32, #tpu.memory_space<vmem>>, vector<1x1x128xf32>
    %235 = vector.shape_cast %234 : vector<1x1x128xf32> to vector<1x128xf32>
    %236 = arith.index_cast %229 : i32 to index
    %c0_136 = arith.constant 0 : index
    %c0_137 = arith.constant 0 : index
    %237 = vector.load %arg9[%236, %c0_136, %c0_137] : memref<13x1x128xf32, #tpu.memory_space<vmem>>, vector<1x1x128xf32>
    %238 = vector.shape_cast %237 : vector<1x1x128xf32> to vector<1x128xf32>
    %239 = arith.index_cast %229 : i32 to index
    %c0_138 = arith.constant 0 : index
    %c0_139 = arith.constant 0 : index
    %240 = vector.load %arg10[%239, %c0_138, %c0_139] : memref<13x1x128xf32, #tpu.memory_space<vmem>>, vector<1x1x128xf32>
    %241 = vector.shape_cast %240 : vector<1x1x128xf32> to vector<1x128xf32>
    %c0_140 = arith.constant 0 : index
    %c0_141 = arith.constant 0 : index
    %242 = vector.load %arg5[%c0_140, %c0_141] : memref<128x384xf32, #tpu.memory_space<vmem>>, vector<128x384xf32>
    %cst_142 = arith.constant dense<0.000000e+00> : vector<1x384xf32>
    %243 = tpu.matmul %232, %242, %cst_142 {dimension_numbers = #tpu.dot_dimension_numbers<[1], [0], [0], [1], [0, 0, 1, 1], [], []>} : vector<1x128xf32>, vector<128x384xf32>, vector<1x384xf32> -> vector<1x384xf32>
    %c0_143 = arith.constant 0 : index
    %c0_144 = arith.constant 0 : index
    %244 = vector.load %arg6[%c0_143, %c0_144] : memref<128x384xf32, #tpu.memory_space<vmem>>, vector<128x384xf32>
    %cst_145 = arith.constant dense<0.000000e+00> : vector<1x384xf32>
    %245 = tpu.matmul %238, %244, %cst_145 {dimension_numbers = #tpu.dot_dimension_numbers<[1], [0], [0], [1], [0, 0, 1, 1], [], []>} : vector<1x128xf32>, vector<128x384xf32>, vector<1x384xf32> -> vector<1x384xf32>
    %246 = arith.addf %243, %245 : vector<1x384xf32>
    %c0_146 = arith.constant 0 : index
    %c0_147 = arith.constant 0 : index
    %247 = vector.load %arg7[%c0_146, %c0_147] : memref<1x384xf32, #tpu.memory_space<vmem>>, vector<1x384xf32>
    %248 = arith.addf %246, %247 : vector<1x384xf32>
    %249 = vector.extract_strided_slice %248 {offsets = [0, 0], sizes = [1, 128], strides = [1, 1]} : vector<1x384xf32> to vector<1x128xf32>
    %250 = arith.negf %249 : vector<1x128xf32>
    %251 = math.exp %250 : vector<1x128xf32>
    %cst_148 = arith.constant 1.000000e+00 : f32
    %252 = vector.broadcast %cst_148 : f32 to vector<1x128xf32>
    %253 = arith.addf %252, %251 : vector<1x128xf32>
    %254 = arith.divf %252, %253 : vector<1x128xf32>
    %255 = vector.extract_strided_slice %248 {offsets = [0, 128], sizes = [1, 128], strides = [1, 1]} : vector<1x384xf32> to vector<1x128xf32>
    %256 = arith.negf %255 : vector<1x128xf32>
    %257 = math.exp %256 : vector<1x128xf32>
    %cst_149 = arith.constant 1.000000e+00 : f32
    %258 = vector.broadcast %cst_149 : f32 to vector<1x128xf32>
    %259 = arith.addf %258, %257 : vector<1x128xf32>
    %260 = arith.divf %258, %259 : vector<1x128xf32>
    %261 = vector.extract_strided_slice %248 {offsets = [0, 256], sizes = [1, 128], strides = [1, 1]} : vector<1x384xf32> to vector<1x128xf32>
    %262 = arith.negf %261 : vector<1x128xf32>
    %263 = math.exp %262 : vector<1x128xf32>
    %cst_150 = arith.constant 1.000000e+00 : f32
    %264 = vector.broadcast %cst_150 : f32 to vector<1x128xf32>
    %265 = arith.addf %264, %263 : vector<1x128xf32>
    %266 = arith.divf %264, %265 : vector<1x128xf32>
    %267 = arith.mulf %266, %235 : vector<1x128xf32>
    %268 = arith.mulf %254, %241 : vector<1x128xf32>
    %269 = arith.addf %267, %268 : vector<1x128xf32>
    %270 = math.tanh %269 : vector<1x128xf32>
    %271 = arith.mulf %260, %270 : vector<1x128xf32>
    %c4 = arith.constant 4 : index
    %c0_151 = arith.constant 0 : index
    %c0_152 = arith.constant 0 : index
    %272 = vector.load %arg9[%c4, %c0_151, %c0_152] : memref<13x1x128xf32, #tpu.memory_space<vmem>>, vector<1x1x128xf32>
    %273 = vector.shape_cast %272 : vector<1x1x128xf32> to vector<1x128xf32>
    %274 = vector.shape_cast %271 : vector<1x128xf32> to vector<1x1x128xf32>
    tpu.vector_store %arg9[%c4, %c0_151, %c0_152], %274 {strides = array<i32>} : memref<13x1x128xf32, #tpu.memory_space<vmem>>, vector<1x1x128xf32>,
    %c4_153 = arith.constant 4 : index
    %c0_154 = arith.constant 0 : index
    %c0_155 = arith.constant 0 : index
    %275 = vector.load %arg10[%c4_153, %c0_154, %c0_155] : memref<13x1x128xf32, #tpu.memory_space<vmem>>, vector<1x1x128xf32>
    %276 = vector.shape_cast %275 : vector<1x1x128xf32> to vector<1x128xf32>
    %277 = vector.shape_cast %269 : vector<1x128xf32> to vector<1x1x128xf32>
    tpu.vector_store %arg10[%c4_153, %c0_154, %c0_155], %277 {strides = array<i32>} : memref<13x1x128xf32, #tpu.memory_space<vmem>>, vector<1x1x128xf32>,
    %c0_156 = arith.constant 0 : index
    %c4_157 = arith.constant 4 : index
    %278 = memref.load %arg1[%c0_156, %c4_157] : memref<2x6xi32, #tpu.memory_space<smem>>
    %c1_158 = arith.constant 1 : index
    %c4_159 = arith.constant 4 : index
    %279 = memref.load %arg1[%c1_158, %c4_159] : memref<2x6xi32, #tpu.memory_space<smem>>
    %280 = arith.index_cast %278 : i32 to index
    %c0_160 = arith.constant 0 : index
    %c0_161 = arith.constant 0 : index
    %281 = vector.load %arg9[%280, %c0_160, %c0_161] : memref<13x1x128xf32, #tpu.memory_space<vmem>>, vector<1x1x128xf32>
    %282 = vector.shape_cast %281 : vector<1x1x128xf32> to vector<1x128xf32>
    %283 = arith.index_cast %278 : i32 to index
    %c0_162 = arith.constant 0 : index
    %c0_163 = arith.constant 0 : index
    %284 = vector.load %arg10[%283, %c0_162, %c0_163] : memref<13x1x128xf32, #tpu.memory_space<vmem>>, vector<1x1x128xf32>
    %285 = vector.shape_cast %284 : vector<1x1x128xf32> to vector<1x128xf32>
    %286 = arith.index_cast %279 : i32 to index
    %c0_164 = arith.constant 0 : index
    %c0_165 = arith.constant 0 : index
    %287 = vector.load %arg9[%286, %c0_164, %c0_165] : memref<13x1x128xf32, #tpu.memory_space<vmem>>, vector<1x1x128xf32>
    %288 = vector.shape_cast %287 : vector<1x1x128xf32> to vector<1x128xf32>
    %289 = arith.index_cast %279 : i32 to index
    %c0_166 = arith.constant 0 : index
    %c0_167 = arith.constant 0 : index
    %290 = vector.load %arg10[%289, %c0_166, %c0_167] : memref<13x1x128xf32, #tpu.memory_space<vmem>>, vector<1x1x128xf32>
    %291 = vector.shape_cast %290 : vector<1x1x128xf32> to vector<1x128xf32>
    %c0_168 = arith.constant 0 : index
    %c0_169 = arith.constant 0 : index
    %292 = vector.load %arg5[%c0_168, %c0_169] : memref<128x384xf32, #tpu.memory_space<vmem>>, vector<128x384xf32>
    %cst_170 = arith.constant dense<0.000000e+00> : vector<1x384xf32>
    %293 = tpu.matmul %282, %292, %cst_170 {dimension_numbers = #tpu.dot_dimension_numbers<[1], [0], [0], [1], [0, 0, 1, 1], [], []>} : vector<1x128xf32>, vector<128x384xf32>, vector<1x384xf32> -> vector<1x384xf32>
    %c0_171 = arith.constant 0 : index
    %c0_172 = arith.constant 0 : index
    %294 = vector.load %arg6[%c0_171, %c0_172] : memref<128x384xf32, #tpu.memory_space<vmem>>, vector<128x384xf32>
    %cst_173 = arith.constant dense<0.000000e+00> : vector<1x384xf32>
    %295 = tpu.matmul %288, %294, %cst_173 {dimension_numbers = #tpu.dot_dimension_numbers<[1], [0], [0], [1], [0, 0, 1, 1], [], []>} : vector<1x128xf32>, vector<128x384xf32>, vector<1x384xf32> -> vector<1x384xf32>
    %296 = arith.addf %293, %295 : vector<1x384xf32>
    %c0_174 = arith.constant 0 : index
    %c0_175 = arith.constant 0 : index
    %297 = vector.load %arg7[%c0_174, %c0_175] : memref<1x384xf32, #tpu.memory_space<vmem>>, vector<1x384xf32>
    %298 = arith.addf %296, %297 : vector<1x384xf32>
    %299 = vector.extract_strided_slice %298 {offsets = [0, 0], sizes = [1, 128], strides = [1, 1]} : vector<1x384xf32> to vector<1x128xf32>
    %300 = arith.negf %299 : vector<1x128xf32>
    %301 = math.exp %300 : vector<1x128xf32>
    %cst_176 = arith.constant 1.000000e+00 : f32
    %302 = vector.broadcast %cst_176 : f32 to vector<1x128xf32>
    %303 = arith.addf %302, %301 : vector<1x128xf32>
    %304 = arith.divf %302, %303 : vector<1x128xf32>
    %305 = vector.extract_strided_slice %298 {offsets = [0, 128], sizes = [1, 128], strides = [1, 1]} : vector<1x384xf32> to vector<1x128xf32>
    %306 = arith.negf %305 : vector<1x128xf32>
    %307 = math.exp %306 : vector<1x128xf32>
    %cst_177 = arith.constant 1.000000e+00 : f32
    %308 = vector.broadcast %cst_177 : f32 to vector<1x128xf32>
    %309 = arith.addf %308, %307 : vector<1x128xf32>
    %310 = arith.divf %308, %309 : vector<1x128xf32>
    %311 = vector.extract_strided_slice %298 {offsets = [0, 256], sizes = [1, 128], strides = [1, 1]} : vector<1x384xf32> to vector<1x128xf32>
    %312 = arith.negf %311 : vector<1x128xf32>
    %313 = math.exp %312 : vector<1x128xf32>
    %cst_178 = arith.constant 1.000000e+00 : f32
    %314 = vector.broadcast %cst_178 : f32 to vector<1x128xf32>
    %315 = arith.addf %314, %313 : vector<1x128xf32>
    %316 = arith.divf %314, %315 : vector<1x128xf32>
    %317 = arith.mulf %316, %285 : vector<1x128xf32>
    %318 = arith.mulf %304, %291 : vector<1x128xf32>
    %319 = arith.addf %317, %318 : vector<1x128xf32>
    %320 = math.tanh %319 : vector<1x128xf32>
    %321 = arith.mulf %310, %320 : vector<1x128xf32>
    %c5 = arith.constant 5 : index
    %c0_179 = arith.constant 0 : index
    %c0_180 = arith.constant 0 : index
    %322 = vector.load %arg9[%c5, %c0_179, %c0_180] : memref<13x1x128xf32, #tpu.memory_space<vmem>>, vector<1x1x128xf32>
    %323 = vector.shape_cast %322 : vector<1x1x128xf32> to vector<1x128xf32>
    %324 = vector.shape_cast %321 : vector<1x128xf32> to vector<1x1x128xf32>
    tpu.vector_store %arg9[%c5, %c0_179, %c0_180], %324 {strides = array<i32>} : memref<13x1x128xf32, #tpu.memory_space<vmem>>, vector<1x1x128xf32>,
    %c5_181 = arith.constant 5 : index
    %c0_182 = arith.constant 0 : index
    %c0_183 = arith.constant 0 : index
    %325 = vector.load %arg10[%c5_181, %c0_182, %c0_183] : memref<13x1x128xf32, #tpu.memory_space<vmem>>, vector<1x1x128xf32>
    %326 = vector.shape_cast %325 : vector<1x1x128xf32> to vector<1x128xf32>
    %327 = vector.shape_cast %319 : vector<1x128xf32> to vector<1x1x128xf32>
    tpu.vector_store %arg10[%c5_181, %c0_182, %c0_183], %327 {strides = array<i32>} : memref<13x1x128xf32, #tpu.memory_space<vmem>>, vector<1x1x128xf32>,
    %c0_184 = arith.constant 0 : index
    %c5_185 = arith.constant 5 : index
    %328 = memref.load %arg1[%c0_184, %c5_185] : memref<2x6xi32, #tpu.memory_space<smem>>
    %c1_186 = arith.constant 1 : index
    %c5_187 = arith.constant 5 : index
    %329 = memref.load %arg1[%c1_186, %c5_187] : memref<2x6xi32, #tpu.memory_space<smem>>
    %330 = arith.index_cast %328 : i32 to index
    %c0_188 = arith.constant 0 : index
    %c0_189 = arith.constant 0 : index
    %331 = vector.load %arg9[%330, %c0_188, %c0_189] : memref<13x1x128xf32, #tpu.memory_space<vmem>>, vector<1x1x128xf32>
    %332 = vector.shape_cast %331 : vector<1x1x128xf32> to vector<1x128xf32>
    %333 = arith.index_cast %328 : i32 to index
    %c0_190 = arith.constant 0 : index
    %c0_191 = arith.constant 0 : index
    %334 = vector.load %arg10[%333, %c0_190, %c0_191] : memref<13x1x128xf32, #tpu.memory_space<vmem>>, vector<1x1x128xf32>
    %335 = vector.shape_cast %334 : vector<1x1x128xf32> to vector<1x128xf32>
    %336 = arith.index_cast %329 : i32 to index
    %c0_192 = arith.constant 0 : index
    %c0_193 = arith.constant 0 : index
    %337 = vector.load %arg9[%336, %c0_192, %c0_193] : memref<13x1x128xf32, #tpu.memory_space<vmem>>, vector<1x1x128xf32>
    %338 = vector.shape_cast %337 : vector<1x1x128xf32> to vector<1x128xf32>
    %339 = arith.index_cast %329 : i32 to index
    %c0_194 = arith.constant 0 : index
    %c0_195 = arith.constant 0 : index
    %340 = vector.load %arg10[%339, %c0_194, %c0_195] : memref<13x1x128xf32, #tpu.memory_space<vmem>>, vector<1x1x128xf32>
    %341 = vector.shape_cast %340 : vector<1x1x128xf32> to vector<1x128xf32>
    %c0_196 = arith.constant 0 : index
    %c0_197 = arith.constant 0 : index
    %342 = vector.load %arg5[%c0_196, %c0_197] : memref<128x384xf32, #tpu.memory_space<vmem>>, vector<128x384xf32>
    %cst_198 = arith.constant dense<0.000000e+00> : vector<1x384xf32>
    %343 = tpu.matmul %332, %342, %cst_198 {dimension_numbers = #tpu.dot_dimension_numbers<[1], [0], [0], [1], [0, 0, 1, 1], [], []>} : vector<1x128xf32>, vector<128x384xf32>, vector<1x384xf32> -> vector<1x384xf32>
    %c0_199 = arith.constant 0 : index
    %c0_200 = arith.constant 0 : index
    %344 = vector.load %arg6[%c0_199, %c0_200] : memref<128x384xf32, #tpu.memory_space<vmem>>, vector<128x384xf32>
    %cst_201 = arith.constant dense<0.000000e+00> : vector<1x384xf32>
    %345 = tpu.matmul %338, %344, %cst_201 {dimension_numbers = #tpu.dot_dimension_numbers<[1], [0], [0], [1], [0, 0, 1, 1], [], []>} : vector<1x128xf32>, vector<128x384xf32>, vector<1x384xf32> -> vector<1x384xf32>
    %346 = arith.addf %343, %345 : vector<1x384xf32>
    %c0_202 = arith.constant 0 : index
    %c0_203 = arith.constant 0 : index
    %347 = vector.load %arg7[%c0_202, %c0_203] : memref<1x384xf32, #tpu.memory_space<vmem>>, vector<1x384xf32>
    %348 = arith.addf %346, %347 : vector<1x384xf32>
    %349 = vector.extract_strided_slice %348 {offsets = [0, 0], sizes = [1, 128], strides = [1, 1]} : vector<1x384xf32> to vector<1x128xf32>
    %350 = arith.negf %349 : vector<1x128xf32>
    %351 = math.exp %350 : vector<1x128xf32>
    %cst_204 = arith.constant 1.000000e+00 : f32
    %352 = vector.broadcast %cst_204 : f32 to vector<1x128xf32>
    %353 = arith.addf %352, %351 : vector<1x128xf32>
    %354 = arith.divf %352, %353 : vector<1x128xf32>
    %355 = vector.extract_strided_slice %348 {offsets = [0, 128], sizes = [1, 128], strides = [1, 1]} : vector<1x384xf32> to vector<1x128xf32>
    %356 = arith.negf %355 : vector<1x128xf32>
    %357 = math.exp %356 : vector<1x128xf32>
    %cst_205 = arith.constant 1.000000e+00 : f32
    %358 = vector.broadcast %cst_205 : f32 to vector<1x128xf32>
    %359 = arith.addf %358, %357 : vector<1x128xf32>
    %360 = arith.divf %358, %359 : vector<1x128xf32>
    %361 = vector.extract_strided_slice %348 {offsets = [0, 256], sizes = [1, 128], strides = [1, 1]} : vector<1x384xf32> to vector<1x128xf32>
    %362 = arith.negf %361 : vector<1x128xf32>
    %363 = math.exp %362 : vector<1x128xf32>
    %cst_206 = arith.constant 1.000000e+00 : f32
    %364 = vector.broadcast %cst_206 : f32 to vector<1x128xf32>
    %365 = arith.addf %364, %363 : vector<1x128xf32>
    %366 = arith.divf %364, %365 : vector<1x128xf32>
    %367 = arith.mulf %366, %335 : vector<1x128xf32>
    %368 = arith.mulf %354, %341 : vector<1x128xf32>
    %369 = arith.addf %367, %368 : vector<1x128xf32>
    %370 = math.tanh %369 : vector<1x128xf32>
    %371 = arith.mulf %360, %370 : vector<1x128xf32>
    %c6 = arith.constant 6 : index
    %c0_207 = arith.constant 0 : index
    %c0_208 = arith.constant 0 : index
    %372 = vector.load %arg9[%c6, %c0_207, %c0_208] : memref<13x1x128xf32, #tpu.memory_space<vmem>>, vector<1x1x128xf32>
    %373 = vector.shape_cast %372 : vector<1x1x128xf32> to vector<1x128xf32>
    %374 = vector.shape_cast %371 : vector<1x128xf32> to vector<1x1x128xf32>
    tpu.vector_store %arg9[%c6, %c0_207, %c0_208], %374 {strides = array<i32>} : memref<13x1x128xf32, #tpu.memory_space<vmem>>, vector<1x1x128xf32>,
    %c6_209 = arith.constant 6 : index
    %c0_210 = arith.constant 0 : index
    %c0_211 = arith.constant 0 : index
    %375 = vector.load %arg10[%c6_209, %c0_210, %c0_211] : memref<13x1x128xf32, #tpu.memory_space<vmem>>, vector<1x1x128xf32>
    %376 = vector.shape_cast %375 : vector<1x1x128xf32> to vector<1x128xf32>
    %377 = vector.shape_cast %369 : vector<1x128xf32> to vector<1x1x128xf32>
    tpu.vector_store %arg10[%c6_209, %c0_210, %c0_211], %377 {strides = array<i32>} : memref<13x1x128xf32, #tpu.memory_space<vmem>>, vector<1x1x128xf32>,
    %c6_212 = arith.constant 6 : index
    %c0_213 = arith.constant 0 : index
    %c0_214 = arith.constant 0 : index
    %378 = vector.load %arg9[%c6_212, %c0_213, %c0_214] : memref<13x1x128xf32, #tpu.memory_space<vmem>>, vector<1x1x128xf32>
    %379 = vector.shape_cast %378 : vector<1x1x128xf32> to vector<1x128xf32>
    %c0_215 = arith.constant 0 : index
    %c0_216 = arith.constant 0 : index
    %380 = vector.load %arg8[%c0_215, %c0_216] : memref<1x128xf32, #tpu.memory_space<vmem>>, vector<1x128xf32>
    tpu.vector_store %arg8[%c0_215, %c0_216], %379 {strides = array<i32>} : memref<1x128xf32, #tpu.memory_space<vmem>>, vector<1x128xf32>,
    return
  }
  func.func @transform_0(%arg0: i32, %arg1: memref<2x6xi32, #tpu.memory_space<smem>>) -> (i32, i32) {
    %c0_i32 = arith.constant 0 : i32
    %c0_i32_0 = arith.constant 0 : i32
    %c0_i32_1 = arith.constant 0 : i32
    return %c0_i32, %c0_i32_0 : i32, i32
  }
  func.func @transform_1(%arg0: i32, %arg1: memref<2x6xi32, #tpu.memory_space<smem>>) -> (i32, i32) {
    %c0_i32 = arith.constant 0 : i32
    %c0_i32_0 = arith.constant 0 : i32
    %c0_i32_1 = arith.constant 0 : i32
    return %c0_i32, %c0_i32_0 : i32, i32
  }
  func.func @transform_2(%arg0: i32, %arg1: memref<2x6xi32, #tpu.memory_space<smem>>) -> (i32, i32) {
    %c0_i32 = arith.constant 0 : i32
    %c0_i32_0 = arith.constant 0 : i32
    %c0_i32_1 = arith.constant 0 : i32
    return %c0_i32, %c0_i32_0 : i32, i32
  }
  func.func @transform_3(%arg0: i32, %arg1: memref<2x6xi32, #tpu.memory_space<smem>>) -> (i32, i32) {
    %c0_i32 = arith.constant 0 : i32
    %c0_i32_0 = arith.constant 0 : i32
    %c0_i32_1 = arith.constant 0 : i32
    return %c0_i32, %c0_i32_0 : i32, i32
  }
  func.func @transform_4(%arg0: i32, %arg1: memref<2x6xi32, #tpu.memory_space<smem>>) -> (i32, i32) {
    %c0_i32 = arith.constant 0 : i32
    %c0_i32_0 = arith.constant 0 : i32
    %c0_i32_1 = arith.constant 0 : i32
    return %c0_i32, %c0_i32_0 : i32, i32
  }
  func.func @transform_5(%arg0: i32, %arg1: memref<2x6xi32, #tpu.memory_space<smem>>) -> (i32, i32) {
    %c0_i32 = arith.constant 0 : i32
    %c0_i32_0 = arith.constant 0 : i32
    %c0_i32_1 = arith.constant 0 : i32
    return %c0_i32, %c0_i32_0 : i32, i32
  }
  func.func @transform_6(%arg0: i32, %arg1: memref<2x6xi32, #tpu.memory_space<smem>>) -> (i32, i32) {
    %c0_i32 = arith.constant 0 : i32
    %c0_i32_0 = arith.constant 0 : i32
    %c0_i32_1 = arith.constant 0 : i32
    return %c0_i32, %c0_i32_0 : i32, i32
  }
}

</mosaic_0001>

<llo_original>
// kernel: _treenet_fused_call.1
$region0: #{_treenet_fused_call.1}
  #allocation0 [shape = 'u32[]', space=smem, size = 0x4, offset = 0x4, fixed_abs, tag = 'smem constant byte address 0x4 - core index']
  #allocation1 [shape = 'u32[144,128]{1,0:T(1,128)}', space=vmem, size = 0x12000, scoped, tag = 'internal scratch']
  #allocation2 [shape = 'f32[13,1,128]{2,1,0:T(1,128)}', space=vmem, size = 0x1a00, scoped, tag = 'scratch operand']
  #allocation3 [shape = 'f32[13,1,128]{2,1,0:T(1,128)}', space=vmem, size = 0x1a00, scoped, tag = 'scratch operand']
  #allocation4 [shape = 's32[1]{0}', space=sflag, size = 0x4, scoped, tag = 'scoped memory for _treenet_fused_call.1']
  #allocation5 [shape = 'u8[1024]{0}', space=smem, size = 0x400, scoped, tag = 'prefetched SMEM operand 0']
  %s0 = inlined_call_operand.vmem [shape: s32[2,6], index: 0, kind: input, shape index: {}]
  %s1 = inlined_call_operand.vmem [shape: f32[8,32], index: 1, kind: input, shape index: {}]
  %s2 = inlined_call_operand.vmem [shape: f32[32,512], index: 2, kind: input, shape index: {}]
  %s3 = inlined_call_operand.vmem [shape: f32[1,512], index: 3, kind: input, shape index: {}]
  %s4 = inlined_call_operand.vmem [shape: f32[128,384], index: 4, kind: input, shape index: {}]
  %s5 = inlined_call_operand.vmem [shape: f32[128,384], index: 5, kind: input, shape index: {}]
  %s6 = inlined_call_operand.vmem [shape: f32[1,384], index: 6, kind: input, shape index: {}]
  %s7 = inlined_call_operand.hbm [shape: f32[1,128], index: 7, kind: output, shape index: {}]
  %s8 = sld [smem:[#allocation0]]
  $region34: #{_treenet_fused_call.1} parent=0
    _
  %s10 = ssub.s32 1, %s8
  %s11 = scalar_select 0, %s10, %s8
  %s12 = sshll.u32 %s0, 4
  %s13 = int_to_ptr.vmem [resolvable:$true] %s12
  %15 = dma.vmem_to_smem %s13, 32, [#allocation5], [#allocation4]
  %16 = dma.done [#allocation4], 32
  %17 = sfence
  $region1: #{_treenet_fused_call.1} parent=0
    #allocation6 [shape = 'u8[512]{0}', space=vmem, size = 0x400, scoped, tag = 'output window, operand 0, single buffered']
    #allocation7 [shape = 's32[1]{0}', space=sflag, size = 0x4, scoped, tag = 'scoped memory for _treenet_fused_call.1']
    %18 = vsyncpa [#allocation7], 0
    // Predicated region
    $region2: #{_treenet_fused_call.1} parent=1 // pred_check
      _
    $region3: #{_treenet_fused_call.1} parent=1 // pred_check_branch
      %20 = sbr.rel (0) target = $region5
    $region4: #{_treenet_fused_call.1} parent=1 // pred_region
      _
    $region5: #{_treenet_fused_call.1} parent=1 // pred_fallthru
      _
    // Predicated region
    $region6: #{_treenet_fused_call.1} parent=1 // pred_check
      _
    $region7: #{_treenet_fused_call.1} parent=1 // pred_check_branch
      %22 = sbr.rel (0) target = $region9
    $region8: #{_treenet_fused_call.1} parent=1 // pred_region
      _
    $region9: #{_treenet_fused_call.1} parent=1 // pred_fallthru
      _
    // Predicated region
    $region10: #{_treenet_fused_call.1} parent=1 // pred_check
      _
    $region11: #{_treenet_fused_call.1} parent=1 // pred_check_branch
      %24 = sbr.rel (0) target = $region13
    $region12: #{_treenet_fused_call.1} parent=1 // pred_region
      _
    $region13: #{_treenet_fused_call.1} parent=1 // pred_fallthru
      _
    // Predicated region
    $region14: #{_treenet_fused_call.1} parent=1 // pred_check
      _
    $region15: #{_treenet_fused_call.1} parent=1 // pred_check_branch
      %26 = sbr.rel (0) target = $region17
    $region16: #{_treenet_fused_call.1} parent=1 // pred_region
      _
    $region17: #{_treenet_fused_call.1} parent=1 // pred_fallthru
      _
    // Predicated region
    $region18: #{_treenet_fused_call.1} parent=1 // pred_check
      _
    $region19: #{_treenet_fused_call.1} parent=1 // pred_check_branch
      %28 = sbr.rel (0) target = $region21
    $region20: #{_treenet_fused_call.1} parent=1 // pred_region
      _
    $region21: #{_treenet_fused_call.1} parent=1 // pred_fallthru
      _
    // Predicated region
    $region22: #{_treenet_fused_call.1} parent=1 // pred_check
      _
    $region23: #{_treenet_fused_call.1} parent=1 // pred_check_branch
      %30 = sbr.rel (0) target = $region25
    $region24: #{_treenet_fused_call.1} parent=1 // pred_region
      _
    $region25: #{_treenet_fused_call.1} parent=1 // pred_fallthru
      _
    %31 = vst [vmem:[#allocation2] sm:$0x1] 0.0
    %32 = vst [vmem:[#allocation3] sm:$0x1] 0.0
    %v33 = vld [vmem:[%s1] sm:$0xff]
    %v34 = vld [vmem:[%s2] sm:$0xff]
    %v35 = vld [vmem:[%s2 + $0x8] sm:$0xff]
    %v36 = vld [vmem:[%s2 + $0x10] sm:$0xff]
    %v37 = vld [vmem:[%s2 + $0x18] sm:$0xff]
    %v38 = vld [vmem:[%s2 + $0x20] sm:$0xff]
    %v39 = vld [vmem:[%s2 + $0x28] sm:$0xff]
    %v40 = vld [vmem:[%s2 + $0x30] sm:$0xff]
    %v41 = vld [vmem:[%s2 + $0x38] sm:$0xff]
    %v42 = vld [vmem:[%s2 + $0x40] sm:$0xff]
    %v43 = vld [vmem:[%s2 + $0x48] sm:$0xff]
    %v44 = vld [vmem:[%s2 + $0x50] sm:$0xff]
    %v45 = vld [vmem:[%s2 + $0x58] sm:$0xff]
    %v46 = vld [vmem:[%s2 + $0x60] sm:$0xff]
    %v47 = vld [vmem:[%s2 + $0x68] sm:$0xff]
    %v48 = vld [vmem:[%s2 + $0x70] sm:$0xff]
    %v49 = vld [vmem:[%s2 + $0x78] sm:$0xff]
    %v50 = vld [vmem:[%s3] sm:$0xf]
    %v52 = vlaneseq
    %v53 = vshrl.u32 %v52, 7
    %v54 = vsub.s32 0, %v53
    %v55 = vrot.slane %v50, %v54
    %v56 = vlaneseq
    %v57 = vshrl.u32 %v56, 7
    %v58 = vsub.s32 1, %v57
    %v59 = vrot.slane %v50, %v58
    %v60 = vlaneseq
    %v61 = vshrl.u32 %v60, 7
    %v62 = vsub.s32 3, %v61
    %v63 = vrot.slane %v50, %v62
    %vm67 = vcmask 261120
    %v69 = vsel %vm67, %v33, 0
    %71 = vmatprep.subr.mxu0 0.0
    %72 = vmatpush1.msra.mxu0 0.0
    %73 = vmatprep.subr.mxu0 0.0
    %74 = vmatpush1.msra.mxu0 0.0
    %75 = vmatprep.subr.mxu0 0.0
    %76 = vmatpush1.msra.mxu0 0.0
    %77 = vmatprep.subr.mxu0 0.0
    %78 = vmatpush1.msra.mxu0 0.0
    %79 = vmatprep.subr.mxu0 0.0
    %80 = vmatpush1.msra.mxu0 0.0
    %81 = vmatprep.subr.mxu0 0.0
    %82 = vmatpush1.msra.mxu0 0.0
    %83 = vmatprep.subr.mxu0 0.0
    %84 = vmatpush1.msra.mxu0 0.0
    %85 = vmatprep.subr.mxu0 0.0
    %86 = vmatpush1.msra.mxu0 0.0
    %87 = vmatprep.subr.mxu0 0.0
    %88 = vmatpush1.msra.mxu0 0.0
    %89 = vmatprep.subr.mxu0 0.0
    %90 = vmatpush1.msra.mxu0 0.0
    %91 = vmatprep.subr.mxu0 0.0
    %92 = vmatpush1.msra.mxu0 0.0
    %93 = vmatprep.subr.mxu0 0.0
    %94 = vmatpush1.msra.mxu0 0.0
    %95 = vmatprep.subr.mxu0 %v47
    %96 = vmatpush1.msra.mxu0 %v46
    %97 = vmatprep.subr.mxu0 %v43
    %98 = vmatpush1.msra.mxu0 %v42
    %99 = vmatprep.subr.mxu0 %v39
    %100 = vmatpush1.msra.mxu0 %v38
    %101 = vmatprep.subr.mxu0 %v35
    %102 = vmatpush1.msra.mxu0 %v34
    %103 = vmatprep.subr.mxu0 0.0
    %104 = vmatpush2.msra.mxu0 0.0
    %105 = vmatprep.subr.mxu0 0.0
    %106 = vmatpush2.msra.mxu0 0.0
    %107 = vmatprep.subr.mxu0 0.0
    %108 = vmatpush2.msra.mxu0 0.0
    %109 = vmatprep.subr.mxu0 0.0
    %110 = vmatpush2.msra.mxu0 0.0
    %111 = vmatprep.subr.mxu0 0.0
    %112 = vmatpush2.msra.mxu0 0.0
    %113 = vmatprep.subr.mxu0 0.0
    %114 = vmatpush2.msra.mxu0 0.0
    %115 = vmatprep.subr.mxu0 0.0
    %116 = vmatpush2.msra.mxu0 0.0
    %117 = vmatprep.subr.mxu0 0.0
    %118 = vmatpush2.msra.mxu0 0.0
    %119 = vmatprep.subr.mxu0 0.0
    %120 = vmatpush2.msra.mxu0 0.0
    %121 = vmatprep.subr.mxu0 0.0
    %122 = vmatpush2.msra.mxu0 0.0
    %123 = vmatprep.subr.mxu0 0.0
    %124 = vmatpush2.msra.mxu0 0.0
    %125 = vmatprep.subr.mxu0 0.0
    %126 = vmatpush2.msra.mxu0 0.0
    %127 = vmatprep.subr.mxu0 0.0
    %128 = vmatpush2.msra.mxu0 0.0
    %129 = vmatprep.subr.mxu0 0.0
    %130 = vmatpush2.msra.mxu0 0.0
    %131 = vmatprep.subr.mxu0 0.0
    %132 = vmatpush2.msra.mxu0 0.0
    %133 = vmatprep.subr.mxu0 0.0
    %134 = vmatpush2.msra.mxu0 0.0
    %135 = vmatprep.mubr.f32.mxu0 0.0
    %136 = vmatmul.mubr.f32.gmra.mxu0 %v69
    %v137 = vpop.f32.mrf.mxu0
    %v138 = vadd.f32 %v55, %v137
    %v139 = vpop.f32.mrf.mxu0
    %v140 = vadd.f32 %v59, %v139
    %141 = vdwg.mxu0
    %142 = vmatprep.subr.mxu0 0.0
    %143 = vmatpush1.msra.mxu0 0.0
    %144 = vmatprep.subr.mxu0 0.0
    %145 = vmatpush1.msra.mxu0 0.0
    %146 = vmatprep.subr.mxu0 0.0
    %147 = vmatpush1.msra.mxu0 0.0
    %148 = vmatprep.subr.mxu0 0.0
    %149 = vmatpush1.msra.mxu0 0.0
    %150 = vmatprep.subr.mxu0 0.0
    %151 = vmatpush1.msra.mxu0 0.0
    %152 = vmatprep.subr.mxu0 0.0
    %153 = vmatpush1.msra.mxu0 0.0
    %154 = vmatprep.subr.mxu0 0.0
    %155 = vmatpush1.msra.mxu0 0.0
    %156 = vmatprep.subr.mxu0 0.0
    %157 = vmatpush1.msra.mxu0 0.0
    %158 = vmatprep.subr.mxu0 0.0
    %159 = vmatpush1.msra.mxu0 0.0
    %160 = vmatprep.subr.mxu0 0.0
    %161 = vmatpush1.msra.mxu0 0.0
    %162 = vmatprep.subr.mxu0 0.0
    %163 = vmatpush1.msra.mxu0 0.0
    %164 = vmatprep.subr.mxu0 0.0
    %165 = vmatpush1.msra.mxu0 0.0
    %166 = vmatprep.subr.mxu0 %v49
    %167 = vmatpush1.msra.mxu0 %v48
    %168 = vmatprep.subr.mxu0 %v45
    %169 = vmatpush1.msra.mxu0 %v44
    %170 = vmatprep.subr.mxu0 %v41
    %171 = vmatpush1.msra.mxu0 %v40
    %172 = vmatprep.subr.mxu0 %v37
    %173 = vmatpush1.msra.mxu0 %v36
    %174 = vmatprep.subr.mxu0 0.0
    %175 = vmatpush2.msra.mxu0 0.0
    %176 = vmatprep.subr.mxu0 0.0
    %177 = vmatpush2.msra.mxu0 0.0
    %178 = vmatprep.subr.mxu0 0.0
    %179 = vmatpush2.msra.mxu0 0.0
    %180 = vmatprep.subr.mxu0 0.0
    %181 = vmatpush2.msra.mxu0 0.0
    %182 = vmatprep.subr.mxu0 0.0
    %183 = vmatpush2.msra.mxu0 0.0
    %184 = vmatprep.subr.mxu0 0.0
    %185 = vmatpush2.msra.mxu0 0.0
    %186 = vmatprep.subr.mxu0 0.0
    %187 = vmatpush2.msra.mxu0 0.0
    %188 = vmatprep.subr.mxu0 0.0
    %189 = vmatpush2.msra.mxu0 0.0
    %190 = vmatprep.subr.mxu0 0.0
    %191 = vmatpush2.msra.mxu0 0.0
    %192 = vmatprep.subr.mxu0 0.0
    %193 = vmatpush2.msra.mxu0 0.0
    %194 = vmatprep.subr.mxu0 0.0
    %195 = vmatpush2.msra.mxu0 0.0
    %196 = vmatprep.subr.mxu0 0.0
    %197 = vmatpush2.msra.mxu0 0.0
    %198 = vmatprep.subr.mxu0 0.0
    %199 = vmatpush2.msra.mxu0 0.0
    %200 = vmatprep.subr.mxu0 0.0
    %201 = vmatpush2.msra.mxu0 0.0
    %202 = vmatprep.subr.mxu0 0.0
    %203 = vmatpush2.msra.mxu0 0.0
    %204 = vmatprep.subr.mxu0 0.0
    %205 = vmatpush2.msra.mxu0 0.0
    %206 = vmatprep.mubr.f32.mxu0 0.0
    %207 = vmatmul.mubr.f32.gmra.mxu0 %v69
    %v208 = vpop.f32.mrf.mxu0
    %v209 = vpop.f32.mrf.mxu0
    %v210 = vadd.f32 %v63, %v209
    %211 = vdwg.mxu0
    %v212 = vxor.u32 %v138, 2147483648
    %v213 = vmul.f32 %v212, 1.442695
    %v214 = vpow.pop %v213
    %v215 = vadd.f32 %v214, 1.0
    %v216 = vrcp.pop %v215
    %v217 = vmul.f32 1.0, %v216
    %v218 = vxor.u32 %v140, 2147483648
    %v219 = vmul.f32 %v218, 1.442695
    %v220 = vpow.pop %v219
    %v221 = vadd.f32 %v220, 1.0
    %v222 = vrcp.pop %v221
    %v223 = vmul.f32 1.0, %v222
    %v224 = vtanh.pop %v210
    %v225 = vmul.f32 %v217, %v224
    %v226 = vtanh.pop %v225
    %v227 = vmul.f32 %v223, %v226
    %s228 = scalar_lea.vmem [#allocation2], 7
    %229 = vst [vmem:[%s228] sm:$0x1] %v227
    %s230 = scalar_lea.vmem [#allocation3], 7
    %231 = vst [vmem:[%s230] sm:$0x1] %v225
    %s232 = scalar_lea.vmem [#allocation2], 8
    %233 = vst [vmem:[%s232 - $0x1] sm:$0x2] %v227
    %s234 = scalar_lea.vmem [#allocation3], 8
    %235 = vst [vmem:[%s234 - $0x1] sm:$0x2] %v225
    %s236 = scalar_lea.vmem [#allocation2], 9
    %237 = vst [vmem:[%s236 - $0x2] sm:$0x4] %v227
    %s238 = scalar_lea.vmem [#allocation3], 9
    %239 = vst [vmem:[%s238 - $0x2] sm:$0x4] %v225
    %s240 = scalar_lea.vmem [#allocation2], 10
    %241 = vst [vmem:[%s240 - $0x3] sm:$0x8] %v227
    %s242 = scalar_lea.vmem [#allocation3], 10
    %243 = vst [vmem:[%s242 - $0x3] sm:$0x8] %v225
    %s244 = scalar_lea.vmem [#allocation2], 11
    %245 = vst [vmem:[%s244 - $0x4] sm:$0x10] %v227
    %s246 = scalar_lea.vmem [#allocation3], 11
    %247 = vst [vmem:[%s246 - $0x4] sm:$0x10] %v225
    %s248 = scalar_lea.vmem [#allocation2], 12
    %249 = vst [vmem:[%s248 - $0x5] sm:$0x20] %v227
    %s250 = scalar_lea.vmem [#allocation3], 12
    %251 = vst [vmem:[%s250 - $0x5] sm:$0x20] %v225
    %s252 = sld [smem:[#allocation5]]
    %s253 = sld [smem:[#allocation5 + $0x80]]
    %s254 = scalar_lea.vmem [#allocation2], %s252
    %v255 = vld [vmem:[%s254] sm:$0x1]
    %s256 = scalar_lea.vmem [#allocation3], %s252
    %v257 = vld [vmem:[%s256] sm:$0x1]
    %s258 = scalar_lea.vmem [#allocation2], %s253
    %v259 = vld [vmem:[%s258] sm:$0x1]
    %s260 = scalar_lea.vmem [#allocation3], %s253
    %v261 = vld [vmem:[%s260] sm:$0x1]
    %v262 = vld [vmem:[%s4] sm:$0xff]
    %v263 = vld [vmem:[%s4 + $0x8] sm:$0xff]
    %v264 = vld [vmem:[%s4 + $0x10] sm:$0xff]
    %v265 = vld [vmem:[%s4 + $0x18] sm:$0xff]
    %v266 = vld [vmem:[%s4 + $0x20] sm:$0xff]
    %v267 = vld [vmem:[%s4 + $0x28] sm:$0xff]
    %v268 = vld [vmem:[%s4 + $0x30] sm:$0xff]
    %v269 = vld [vmem:[%s4 + $0x38] sm:$0xff]
    %v270 = vld [vmem:[%s4 + $0x40] sm:$0xff]
    %v271 = vld [vmem:[%s4 + $0x48] sm:$0xff]
    %v272 = vld [vmem:[%s4 + $0x50] sm:$0xff]
    %v273 = vld [vmem:[%s4 + $0x58] sm:$0xff]
    %v274 = vld [vmem:[%s4 + $0x60] sm:$0xff]
    %v275 = vld [vmem:[%s4 + $0x68] sm:$0xff]
    %v276 = vld [vmem:[%s4 + $0x70] sm:$0xff]
    %v277 = vld [vmem:[%s4 + $0x78] sm:$0xff]
    %v278 = vld [vmem:[%s4 + $0x80] sm:$0xff]
    %v279 = vld [vmem:[%s4 + $0x88] sm:$0xff]
    %v280 = vld [vmem:[%s4 + $0x90] sm:$0xff]
    %v281 = vld [vmem:[%s4 + $0x98] sm:$0xff]
    %v282 = vld [vmem:[%s4 + $0xa0] sm:$0xff]
    %v283 = vld [vmem:[%s4 + $0xa8] sm:$0xff]
    %v284 = vld [vmem:[%s4 + $0xb0] sm:$0xff]
    %v285 = vld [vmem:[%s4 + $0xb8] sm:$0xff]
    %v286 = vld [vmem:[%s4 + $0xc0] sm:$0xff]
    %v287 = vld [vmem:[%s4 + $0xc8] sm:$0xff]
    %v288 = vld [vmem:[%s4 + $0xd0] sm:$0xff]
    %v289 = vld [vmem:[%s4 + $0xd8] sm:$0xff]
    %v290 = vld [vmem:[%s4 + $0xe0] sm:$0xff]
    %v291 = vld [vmem:[%s4 + $0xe8] sm:$0xff]
    %v292 = vld [vmem:[%s4 + $0xf0] sm:$0xff]
    %v293 = vld [vmem:[%s4 + $0xf8] sm:$0xff]
    %v294 = vld [vmem:[%s4 + $0x100] sm:$0xff]
    %v295 = vld [vmem:[%s4 + $0x108] sm:$0xff]
    %v296 = vld [vmem:[%s4 + $0x110] sm:$0xff]
    %v297 = vld [vmem:[%s4 + $0x118] sm:$0xff]
    %v298 = vld [vmem:[%s4 + $0x120] sm:$0xff]
    %v299 = vld [vmem:[%s4 + $0x128] sm:$0xff]
    %v300 = vld [vmem:[%s4 + $0x130] sm:$0xff]
    %v301 = vld [vmem:[%s4 + $0x138] sm:$0xff]
    %v302 = vld [vmem:[%s4 + $0x140] sm:$0xff]
    %v303 = vld [vmem:[%s4 + $0x148] sm:$0xff]
    %v304 = vld [vmem:[%s4 + $0x150] sm:$0xff]
    %v305 = vld [vmem:[%s4 + $0x158] sm:$0xff]
    %v306 = vld [vmem:[%s4 + $0x160] sm:$0xff]
    %v307 = vld [vmem:[%s4 + $0x168] sm:$0xff]
    %v308 = vld [vmem:[%s4 + $0x170] sm:$0xff]
    %v309 = vld [vmem:[%s4 + $0x178] sm:$0xff]
    %v310 = vld [vmem:[%s5] sm:$0xff]
    %v311 = vld [vmem:[%s5 + $0x8] sm:$0xff]
    %v312 = vld [vmem:[%s5 + $0x10] sm:$0xff]
    %v313 = vld [vmem:[%s5 + $0x18] sm:$0xff]
    %v314 = vld [vmem:[%s5 + $0x20] sm:$0xff]
    %v315 = vld [vmem:[%s5 + $0x28] sm:$0xff]
    %v316 = vld [vmem:[%s5 + $0x30] sm:$0xff]
    %v317 = vld [vmem:[%s5 + $0x38] sm:$0xff]
    %v318 = vld [vmem:[%s5 + $0x40] sm:$0xff]
    %v319 = vld [vmem:[%s5 + $0x48] sm:$0xff]
    %v320 = vld [vmem:[%s5 + $0x50] sm:$0xff]
    %v321 = vld [vmem:[%s5 + $0x58] sm:$0xff]
    %v322 = vld [vmem:[%s5 + $0x60] sm:$0xff]
    %v323 = vld [vmem:[%s5 + $0x68] sm:$0xff]
    %v324 = vld [vmem:[%s5 + $0x70] sm:$0xff]
    %v325 = vld [vmem:[%s5 + $0x78] sm:$0xff]
    %v326 = vld [vmem:[%s5 + $0x80] sm:$0xff]
    %v327 = vld [vmem:[%s5 + $0x88] sm:$0xff]
    %v328 = vld [vmem:[%s5 + $0x90] sm:$0xff]
    %v329 = vld [vmem:[%s5 + $0x98] sm:$0xff]
    %v330 = vld [vmem:[%s5 + $0xa0] sm:$0xff]
    %v331 = vld [vmem:[%s5 + $0xa8] sm:$0xff]
    %v332 = vld [vmem:[%s5 + $0xb0] sm:$0xff]
    %v333 = vld [vmem:[%s5 + $0xb8] sm:$0xff]
    %v334 = vld [vmem:[%s5 + $0xc0] sm:$0xff]
    %v335 = vld [vmem:[%s5 + $0xc8] sm:$0xff]
    %v336 = vld [vmem:[%s5 + $0xd0] sm:$0xff]
    %v337 = vld [vmem:[%s5 + $0xd8] sm:$0xff]
    %v338 = vld [vmem:[%s5 + $0xe0] sm:$0xff]
    %v339 = vld [vmem:[%s5 + $0xe8] sm:$0xff]
    %v340 = vld [vmem:[%s5 + $0xf0] sm:$0xff]
    %v341 = vld [vmem:[%s5 + $0xf8] sm:$0xff]
    %v342 = vld [vmem:[%s5 + $0x100] sm:$0xff]
    %v343 = vld [vmem:[%s5 + $0x108] sm:$0xff]
    %v344 = vld [vmem:[%s5 + $0x110] sm:$0xff]
    %v345 = vld [vmem:[%s5 + $0x118] sm:$0xff]
    %v346 = vld [vmem:[%s5 + $0x120] sm:$0xff]
    %v347 = vld [vmem:[%s5 + $0x128] sm:$0xff]
    %v348 = vld [vmem:[%s5 + $0x130] sm:$0xff]
    %v349 = vld [vmem:[%s5 + $0x138] sm:$0xff]
    %v350 = vld [vmem:[%s5 + $0x140] sm:$0xff]
    %v351 = vld [vmem:[%s5 + $0x148] sm:$0xff]
    %v352 = vld [vmem:[%s5 + $0x150] sm:$0xff]
    %v353 = vld [vmem:[%s5 + $0x158] sm:$0xff]
    %v354 = vld [vmem:[%s5 + $0x160] sm:$0xff]
    %v355 = vld [vmem:[%s5 + $0x168] sm:$0xff]
    %v356 = vld [vmem:[%s5 + $0x170] sm:$0xff]
    %v357 = vld [vmem:[%s5 + $0x178] sm:$0xff]
    %358 = vmatprep.subr.mxu0 %v356
    %359 = vmatpush1.msra.mxu0 %v355
    %360 = vmatprep.subr.mxu0 %v353
    %361 = vmatpush1.msra.mxu0 %v352
    %362 = vmatprep.subr.mxu0 %v350
    %363 = vmatpush1.msra.mxu0 %v349
    %364 = vmatprep.subr.mxu0 %v347
    %365 = vmatpush1.msra.mxu0 %v346
    %366 = vmatprep.subr.mxu0 %v344
    %367 = vmatpush1.msra.mxu0 %v343
    %368 = vmatprep.subr.mxu0 %v341
    %369 = vmatpush1.msra.mxu0 %v340
    %370 = vmatprep.subr.mxu0 %v338
    %371 = vmatpush1.msra.mxu0 %v337
    %372 = vmatprep.subr.mxu0 %v335
    %373 = vmatpush1.msra.mxu0 %v334
    %374 = vmatprep.subr.mxu0 %v332
    %375 = vmatpush1.msra.mxu0 %v331
    %376 = vmatprep.subr.mxu0 %v329
    %377 = vmatpush1.msra.mxu0 %v328
    %378 = vmatprep.subr.mxu0 %v326
    %379 = vmatpush1.msra.mxu0 %v325
    %380 = vmatprep.subr.mxu0 %v323
    %381 = vmatpush1.msra.mxu0 %v322
    %382 = vmatprep.subr.mxu0 %v320
    %383 = vmatpush1.msra.mxu0 %v319
    %384 = vmatprep.subr.mxu0 %v317
    %385 = vmatpush1.msra.mxu0 %v316
    %386 = vmatprep.subr.mxu0 %v314
    %387 = vmatpush1.msra.mxu0 %v313
    %388 = vmatprep.subr.mxu0 %v311
    %389 = vmatpush1.msra.mxu0 %v310
    %390 = vmatprep.subr.mxu0 0.0
    %391 = vmatpush2.msra.mxu0 0.0
    %392 = vmatprep.subr.mxu0 0.0
    %393 = vmatpush2.msra.mxu0 0.0
    %394 = vmatprep.subr.mxu0 0.0
    %395 = vmatpush2.msra.mxu0 0.0
    %396 = vmatprep.subr.mxu0 0.0
    %397 = vmatpush2.msra.mxu0 0.0
    %398 = vmatprep.subr.mxu0 0.0
    %399 = vmatpush2.msra.mxu0 0.0
    %400 = vmatprep.subr.mxu0 0.0
    %401 = vmatpush2.msra.mxu0 0.0
    %402 = vmatprep.subr.mxu0 0.0
    %403 = vmatpush2.msra.mxu0 0.0
    %404 = vmatprep.subr.mxu0 0.0
    %405 = vmatpush2.msra.mxu0 0.0
    %406 = vmatprep.subr.mxu0 0.0
    %407 = vmatpush2.msra.mxu0 0.0
    %408 = vmatprep.subr.mxu0 0.0
    %409 = vmatpush2.msra.mxu0 0.0
    %410 = vmatprep.subr.mxu0 0.0
    %411 = vmatpush2.msra.mxu0 0.0
    %412 = vmatprep.subr.mxu0 0.0
    %413 = vmatpush2.msra.mxu0 0.0
    %414 = vmatprep.subr.mxu0 0.0
    %415 = vmatpush2.msra.mxu0 0.0
    %416 = vmatprep.subr.mxu0 0.0
    %417 = vmatpush2.msra.mxu0 0.0
    %418 = vmatprep.subr.mxu0 0.0
    %419 = vmatpush2.msra.mxu0 0.0
    %420 = vmatprep.subr.mxu0 0.0
    %421 = vmatpush2.msra.mxu0 0.0
    %422 = vmatprep.mubr.f32.mxu0 0.0
    %423 = vmatmul.mubr.f32.gmra.mxu0 %v259
    %v424 = vpop.f32.mrf.mxu0
    %v425 = vadd.f32 0.0, %v424
    %v426 = vpop.f32.mrf.mxu0
    %v427 = vadd.f32 0.0, %v426
    %428 = vdwg.mxu0
    %429 = vmatprep.subr.mxu0 0.0
    %430 = vmatpush1.msra.mxu0 %v357
    %431 = vmatprep.subr.mxu0 0.0
    %432 = vmatpush1.msra.mxu0 %v354
    %433 = vmatprep.subr.mxu0 0.0
    %434 = vmatpush1.msra.mxu0 %v351
    %435 = vmatprep.subr.mxu0 0.0
    %436 = vmatpush1.msra.mxu0 %v348
    %437 = vmatprep.subr.mxu0 0.0
    %438 = vmatpush1.msra.mxu0 %v345
    %439 = vmatprep.subr.mxu0 0.0
    %440 = vmatpush1.msra.mxu0 %v342
    %441 = vmatprep.subr.mxu0 0.0
    %442 = vmatpush1.msra.mxu0 %v339
    %443 = vmatprep.subr.mxu0 0.0
    %444 = vmatpush1.msra.mxu0 %v336
    %445 = vmatprep.subr.mxu0 0.0
    %446 = vmatpush1.msra.mxu0 %v333
    %447 = vmatprep.subr.mxu0 0.0
    %448 = vmatpush1.msra.mxu0 %v330
    %449 = vmatprep.subr.mxu0 0.0
    %450 = vmatpush1.msra.mxu0 %v327
    %451 = vmatprep.subr.mxu0 0.0
    %452 = vmatpush1.msra.mxu0 %v324
    %453 = vmatprep.subr.mxu0 0.0
    %454 = vmatpush1.msra.mxu0 %v321
    %455 = vmatprep.subr.mxu0 0.0
    %456 = vmatpush1.msra.mxu0 %v318
    %457 = vmatprep.subr.mxu0 0.0
    %458 = vmatpush1.msra.mxu0 %v315
    %459 = vmatprep.subr.mxu0 0.0
    %460 = vmatpush1.msra.mxu0 %v312
    %461 = vmatprep.subr.mxu0 0.0
    %462 = vmatpush2.msra.mxu0 0.0
    %463 = vmatprep.subr.mxu0 0.0
    %464 = vmatpush2.msra.mxu0 0.0
    %465 = vmatprep.subr.mxu0 0.0
    %466 = vmatpush2.msra.mxu0 0.0
    %467 = vmatprep.subr.mxu0 0.0
    %468 = vmatpush2.msra.mxu0 0.0
    %469 = vmatprep.subr.mxu0 0.0
    %470 = vmatpush2.msra.mxu0 0.0
    %471 = vmatprep.subr.mxu0 0.0
    %472 = vmatpush2.msra.mxu0 0.0
    %473 = vmatprep.subr.mxu0 0.0
    %474 = vmatpush2.msra.mxu0 0.0
    %475 = vmatprep.subr.mxu0 0.0
    %476 = vmatpush2.msra.mxu0 0.0
    %477 = vmatprep.subr.mxu0 0.0
    %478 = vmatpush2.msra.mxu0 0.0
    %479 = vmatprep.subr.mxu0 0.0
    %480 = vmatpush2.msra.mxu0 0.0
    %481 = vmatprep.subr.mxu0 0.0
    %482 = vmatpush2.msra.mxu0 0.0
    %483 = vmatprep.subr.mxu0 0.0
    %484 = vmatpush2.msra.mxu0 0.0
    %485 = vmatprep.subr.mxu0 0.0
    %486 = vmatpush2.msra.mxu0 0.0
    %487 = vmatprep.subr.mxu0 0.0
    %488 = vmatpush2.msra.mxu0 0.0
    %489 = vmatprep.subr.mxu0 0.0
    %490 = vmatpush2.msra.mxu0 0.0
    %491 = vmatprep.subr.mxu0 0.0
    %492 = vmatpush2.msra.mxu0 0.0
    %493 = vmatprep.mubr.f32.mxu0 0.0
    %494 = vmatmul.mubr.f32.gmra.mxu0 %v259
    %v495 = vpop.f32.mrf.mxu0
    %v496 = vadd.f32 0.0, %v495
    %v497 = vpop.f32.mrf.mxu0
    %498 = vdwg.mxu0
    %499 = vmatprep.subr.mxu0 %v308
    %500 = vmatpush1.msra.mxu0 %v307
    %501 = vmatprep.subr.mxu0 %v305
    %502 = vmatpush1.msra.mxu0 %v304
    %503 = vmatprep.subr.mxu0 %v302
    %504 = vmatpush1.msra.mxu0 %v301
    %505 = vmatprep.subr.mxu0 %v299
    %506 = vmatpush1.msra.mxu0 %v298
    %507 = vmatprep.subr.mxu0 %v296
    %508 = vmatpush1.msra.mxu0 %v295
    %509 = vmatprep.subr.mxu0 %v293
    %510 = vmatpush1.msra.mxu0 %v292
    %511 = vmatprep.subr.mxu0 %v290
    %512 = vmatpush1.msra.mxu0 %v289
    %513 = vmatprep.subr.mxu0 %v287
    %514 = vmatpush1.msra.mxu0 %v286
    %515 = vmatprep.subr.mxu0 %v284
    %516 = vmatpush1.msra.mxu0 %v283
    %517 = vmatprep.subr.mxu0 %v281
    %518 = vmatpush1.msra.mxu0 %v280
    %519 = vmatprep.subr.mxu0 %v278
    %520 = vmatpush1.msra.mxu0 %v277
    %521 = vmatprep.subr.mxu0 %v275
    %522 = vmatpush1.msra.mxu0 %v274
    %523 = vmatprep.subr.mxu0 %v272
    %524 = vmatpush1.msra.mxu0 %v271
    %525 = vmatprep.subr.mxu0 %v269
    %526 = vmatpush1.msra.mxu0 %v268
    %527 = vmatprep.subr.mxu0 %v266
    %528 = vmatpush1.msra.mxu0 %v265
    %529 = vmatprep.subr.mxu0 %v263
    %530 = vmatpush1.msra.mxu0 %v262
    %531 = vmatprep.subr.mxu0 0.0
    %532 = vmatpush2.msra.mxu0 0.0
    %533 = vmatprep.subr.mxu0 0.0
    %534 = vmatpush2.msra.mxu0 0.0
    %535 = vmatprep.subr.mxu0 0.0
    %536 = vmatpush2.msra.mxu0 0.0
    %537 = vmatprep.subr.mxu0 0.0
    %538 = vmatpush2.msra.mxu0 0.0
    %539 = vmatprep.subr.mxu0 0.0
    %540 = vmatpush2.msra.mxu0 0.0
    %541 = vmatprep.subr.mxu0 0.0
    %542 = vmatpush2.msra.mxu0 0.0
    %543 = vmatprep.subr.mxu0 0.0
    %544 = vmatpush2.msra.mxu0 0.0
    %545 = vmatprep.subr.mxu0 0.0
    %546 = vmatpush2.msra.mxu0 0.0
    %547 = vmatprep.subr.mxu0 0.0
    %548 = vmatpush2.msra.mxu0 0.0
    %549 = vmatprep.subr.mxu0 0.0
    %550 = vmatpush2.msra.mxu0 0.0
    %551 = vmatprep.subr.mxu0 0.0
    %552 = vmatpush2.msra.mxu0 0.0
    %553 = vmatprep.subr.mxu0 0.0
    %554 = vmatpush2.msra.mxu0 0.0
    %555 = vmatprep.subr.mxu0 0.0
    %556 = vmatpush2.msra.mxu0 0.0
    %557 = vmatprep.subr.mxu0 0.0
    %558 = vmatpush2.msra.mxu0 0.0
    %559 = vmatprep.subr.mxu0 0.0
    %560 = vmatpush2.msra.mxu0 0.0
    %561 = vmatprep.subr.mxu0 0.0
    %562 = vmatpush2.msra.mxu0 0.0
    %563 = vmatprep.mubr.f32.mxu0 0.0
    %564 = vmatmul.mubr.f32.gmra.mxu0 %v255
    %v565 = vpop.f32.mrf.mxu0
    %v566 = vadd.f32 %v425, %v565
    %v567 = vpop.f32.mrf.mxu0
    %v568 = vadd.f32 %v427, %v567
    %569 = vdwg.mxu0
    %570 = vmatprep.subr.mxu0 0.0
    %571 = vmatpush1.msra.mxu0 %v309
    %572 = vmatprep.subr.mxu0 0.0
    %573 = vmatpush1.msra.mxu0 %v306
    %574 = vmatprep.subr.mxu0 0.0
    %575 = vmatpush1.msra.mxu0 %v303
    %576 = vmatprep.subr.mxu0 0.0
    %577 = vmatpush1.msra.mxu0 %v300
    %578 = vmatprep.subr.mxu0 0.0
    %579 = vmatpush1.msra.mxu0 %v297
    %580 = vmatprep.subr.mxu0 0.0
    %581 = vmatpush1.msra.mxu0 %v294
    %582 = vmatprep.subr.mxu0 0.0
    %583 = vmatpush1.msra.mxu0 %v291
    %584 = vmatprep.subr.mxu0 0.0
    %585 = vmatpush1.msra.mxu0 %v288
    %586 = vmatprep.subr.mxu0 0.0
    %587 = vmatpush1.msra.mxu0 %v285
    %588 = vmatprep.subr.mxu0 0.0
    %589 = vmatpush1.msra.mxu0 %v282
    %590 = vmatprep.subr.mxu0 0.0
    %591 = vmatpush1.msra.mxu0 %v279
    %592 = vmatprep.subr.mxu0 0.0
    %593 = vmatpush1.msra.mxu0 %v276
    %594 = vmatprep.subr.mxu0 0.0
    %595 = vmatpush1.msra.mxu0 %v273
    %596 = vmatprep.subr.mxu0 0.0
    %597 = vmatpush1.msra.mxu0 %v270
    %598 = vmatprep.subr.mxu0 0.0
    %599 = vmatpush1.msra.mxu0 %v267
    %600 = vmatprep.subr.mxu0 0.0
    %601 = vmatpush1.msra.mxu0 %v264
    %602 = vmatprep.subr.mxu0 0.0
    %603 = vmatpush2.msra.mxu0 0.0
    %604 = vmatprep.subr.mxu0 0.0
    %605 = vmatpush2.msra.mxu0 0.0
    %606 = vmatprep.subr.mxu0 0.0
    %607 = vmatpush2.msra.mxu0 0.0
    %608 = vmatprep.subr.mxu0 0.0
    %609 = vmatpush2.msra.mxu0 0.0
    %610 = vmatprep.subr.mxu0 0.0
    %611 = vmatpush2.msra.mxu0 0.0
    %612 = vmatprep.subr.mxu0 0.0
    %613 = vmatpush2.msra.mxu0 0.0
    %614 = vmatprep.subr.mxu0 0.0
    %615 = vmatpush2.msra.mxu0 0.0
    %616 = vmatprep.subr.mxu0 0.0
    %617 = vmatpush2.msra.mxu0 0.0
    %618 = vmatprep.subr.mxu0 0.0
    %619 = vmatpush2.msra.mxu0 0.0
    %620 = vmatprep.subr.mxu0 0.0
    %621 = vmatpush2.msra.mxu0 0.0
    %622 = vmatprep.subr.mxu0 0.0
    %623 = vmatpush2.msra.mxu0 0.0
    %624 = vmatprep.subr.mxu0 0.0
    %625 = vmatpush2.msra.mxu0 0.0
    %626 = vmatprep.subr.mxu0 0.0
    %627 = vmatpush2.msra.mxu0 0.0
    %628 = vmatprep.subr.mxu0 0.0
    %629 = vmatpush2.msra.mxu0 0.0
    %630 = vmatprep.subr.mxu0 0.0
    %631 = vmatpush2.msra.mxu0 0.0
    %632 = vmatprep.subr.mxu0 0.0
    %633 = vmatpush2.msra.mxu0 0.0
    %634 = vmatprep.mubr.f32.mxu0 0.0
    %635 = vmatmul.mubr.f32.gmra.mxu0 %v255
    %v636 = vpop.f32.mrf.mxu0
    %v637 = vadd.f32 %v496, %v636
    %v638 = vpop.f32.mrf.mxu0
    %639 = vdwg.mxu0
    %v640 = vld [vmem:[%s6] sm:$0x7]
    %v642 = vlaneseq
    %v643 = vshrl.u32 %v642, 7
    %v644 = vsub.s32 0, %v643
    %v645 = vrot.slane %v640, %v644
    %v646 = vlaneseq
    %v647 = vshrl.u32 %v646, 7
    %v648 = vsub.s32 1, %v647
    %v649 = vrot.slane %v640, %v648
    %v650 = vlaneseq
    %v651 = vshrl.u32 %v650, 7
    %v652 = vsub.s32 2, %v651
    %v653 = vrot.slane %v640, %v652
    %v657 = vadd.f32 %v566, %v645
    %v658 = vadd.f32 %v568, %v649
    %v659 = vadd.f32 %v637, %v653
    %v660 = vxor.u32 %v657, 2147483648
    %v661 = vmul.f32 %v660, 1.442695
    %v662 = vpow.pop %v661
    %v663 = vadd.f32 %v662, 1.0
    %v664 = vrcp.pop %v663
    %v665 = vmul.f32 1.0, %v664
    %v666 = vxor.u32 %v658, 2147483648
    %v667 = vmul.f32 %v666, 1.442695
    %v668 = vpow.pop %v667
    %v669 = vadd.f32 %v668, 1.0
    %v670 = vrcp.pop %v669
    %v671 = vmul.f32 1.0, %v670
    %v672 = vxor.u32 %v659, 2147483648
    %v673 = vmul.f32 %v672, 1.442695
    %v674 = vpow.pop %v673
    %v675 = vadd.f32 %v674, 1.0
    %v676 = vrcp.pop %v675
    %v677 = vmul.f32 1.0, %v676
    %v678 = vmul.f32 %v677, %v257
    %v679 = vmul.f32 %v665, %v261
    %v680 = vadd.f32 %v678, %v679
    %v681 = vtanh.pop %v680
    %v682 = vmul.f32 %v671, %v681
    %s683 = scalar_lea.vmem [#allocation2], 1
    %684 = vst [vmem:[%s683] sm:$0x1] %v682
    %s685 = scalar_lea.vmem [#allocation3], 1
    %686 = vst [vmem:[%s685] sm:$0x1] %v680
    %s687 = sld [smem:[#allocation5 + $0x1]]
    %s688 = sld [smem:[#allocation5 + $0x81]]
    %s689 = scalar_lea.vmem [#allocation2], %s687
    %v690 = vld [vmem:[%s689] sm:$0x1]
    %s691 = scalar_lea.vmem [#allocation3], %s687
    %v692 = vld [vmem:[%s691] sm:$0x1]
    %s693 = scalar_lea.vmem [#allocation2], %s688
    %v694 = vld [vmem:[%s693] sm:$0x1]
    %s695 = scalar_lea.vmem [#allocation3], %s688
    %v696 = vld [vmem:[%s695] sm:$0x1]
    %v697 = vld [vmem:[%s4] sm:$0xff]
    %v698 = vld [vmem:[%s4 + $0x8] sm:$0xff]
    %v699 = vld [vmem:[%s4 + $0x10] sm:$0xff]
    %v700 = vld [vmem:[%s4 + $0x18] sm:$0xff]
    %v701 = vld [vmem:[%s4 + $0x20] sm:$0xff]
    %v702 = vld [vmem:[%s4 + $0x28] sm:$0xff]
    %v703 = vld [vmem:[%s4 + $0x30] sm:$0xff]
    %v704 = vld [vmem:[%s4 + $0x38] sm:$0xff]
    %v705 = vld [vmem:[%s4 + $0x40] sm:$0xff]
    %v706 = vld [vmem:[%s4 + $0x48] sm:$0xff]
    %v707 = vld [vmem:[%s4 + $0x50] sm:$0xff]
    %v708 = vld [vmem:[%s4 + $0x58] sm:$0xff]
    %v709 = vld [vmem:[%s4 + $0x60] sm:$0xff]
    %v710 = vld [vmem:[%s4 + $0x68] sm:$0xff]
    %v711 = vld [vmem:[%s4 + $0x70] sm:$0xff]
    %v712 = vld [vmem:[%s4 + $0x78] sm:$0xff]
    %v713 = vld [vmem:[%s4 + $0x80] sm:$0xff]
    %v714 = vld [vmem:[%s4 + $0x88] sm:$0xff]
    %v715 = vld [vmem:[%s4 + $0x90] sm:$0xff]
    %v716 = vld [vmem:[%s4 + $0x98] sm:$0xff]
    %v717 = vld [vmem:[%s4 + $0xa0] sm:$0xff]
    %v718 = vld [vmem:[%s4 + $0xa8] sm:$0xff]
    %v719 = vld [vmem:[%s4 + $0xb0] sm:$0xff]
    %v720 = vld [vmem:[%s4 + $0xb8] sm:$0xff]
    %v721 = vld [vmem:[%s4 + $0xc0] sm:$0xff]
    %v722 = vld [vmem:[%s4 + $0xc8] sm:$0xff]
    %v723 = vld [vmem:[%s4 + $0xd0] sm:$0xff]
    %v724 = vld [vmem:[%s4 + $0xd8] sm:$0xff]
    %v725 = vld [vmem:[%s4 + $0xe0] sm:$0xff]
    %v726 = vld [vmem:[%s4 + $0xe8] sm:$0xff]
    %v727 = vld [vmem:[%s4 + $0xf0] sm:$0xff]
    %v728 = vld [vmem:[%s4 + $0xf8] sm:$0xff]
    %v729 = vld [vmem:[%s4 + $0x100] sm:$0xff]
    %v730 = vld [vmem:[%s4 + $0x108] sm:$0xff]
    %v731 = vld [vmem:[%s4 + $0x110] sm:$0xff]
    %v732 = vld [vmem:[%s4 + $0x118] sm:$0xff]
    %v733 = vld [vmem:[%s4 + $0x120] sm:$0xff]
    %v734 = vld [vmem:[%s4 + $0x128] sm:$0xff]
    %v735 = vld [vmem:[%s4 + $0x130] sm:$0xff]
    %v736 = vld [vmem:[%s4 + $0x138] sm:$0xff]
    %v737 = vld [vmem:[%s4 + $0x140] sm:$0xff]
    %v738 = vld [vmem:[%s4 + $0x148] sm:$0xff]
    %v739 = vld [vmem:[%s4 + $0x150] sm:$0xff]
    %v740 = vld [vmem:[%s4 + $0x158] sm:$0xff]
    %v741 = vld [vmem:[%s4 + $0x160] sm:$0xff]
    %v742 = vld [vmem:[%s4 + $0x168] sm:$0xff]
    %v743 = vld [vmem:[%s4 + $0x170] sm:$0xff]
    %v744 = vld [vmem:[%s4 + $0x178] sm:$0xff]
    %v745 = vld [vmem:[%s5] sm:$0xff]
    %v746 = vld [vmem:[%s5 + $0x8] sm:$0xff]
    %v747 = vld [vmem:[%s5 + $0x10] sm:$0xff]
    %v748 = vld [vmem:[%s5 + $0x18] sm:$0xff]
    %v749 = vld [vmem:[%s5 + $0x20] sm:$0xff]
    %v750 = vld [vmem:[%s5 + $0x28] sm:$0xff]
    %v751 = vld [vmem:[%s5 + $0x30] sm:$0xff]
    %v752 = vld [vmem:[%s5 + $0x38] sm:$0xff]
    %v753 = vld [vmem:[%s5 + $0x40] sm:$0xff]
    %v754 = vld [vmem:[%s5 + $0x48] sm:$0xff]
    %v755 = vld [vmem:[%s5 + $0x50] sm:$0xff]
    %v756 = vld [vmem:[%s5 + $0x58] sm:$0xff]
    %v757 = vld [vmem:[%s5 + $0x60] sm:$0xff]
    %v758 = vld [vmem:[%s5 + $0x68] sm:$0xff]
    %v759 = vld [vmem:[%s5 + $0x70] sm:$0xff]
    %v760 = vld [vmem:[%s5 + $0x78] sm:$0xff]
    %v761 = vld [vmem:[%s5 + $0x80] sm:$0xff]
    %v762 = vld [vmem:[%s5 + $0x88] sm:$0xff]
    %v763 = vld [vmem:[%s5 + $0x90] sm:$0xff]
    %v764 = vld [vmem:[%s5 + $0x98] sm:$0xff]
    %v765 = vld [vmem:[%s5 + $0xa0] sm:$0xff]
    %v766 = vld [vmem:[%s5 + $0xa8] sm:$0xff]
    %v767 = vld [vmem:[%s5 + $0xb0] sm:$0xff]
    %v768 = vld [vmem:[%s5 + $0xb8] sm:$0xff]
    %v769 = vld [vmem:[%s5 + $0xc0] sm:$0xff]
    %v770 = vld [vmem:[%s5 + $0xc8] sm:$0xff]
    %v771 = vld [vmem:[%s5 + $0xd0] sm:$0xff]
    %v772 = vld [vmem:[%s5 + $0xd8] sm:$0xff]
    %v773 = vld [vmem:[%s5 + $0xe0] sm:$0xff]
    %v774 = vld [vmem:[%s5 + $0xe8] sm:$0xff]
    %v775 = vld [vmem:[%s5 + $0xf0] sm:$0xff]
    %v776 = vld [vmem:[%s5 + $0xf8] sm:$0xff]
    %v777 = vld [vmem:[%s5 + $0x100] sm:$0xff]
    %v778 = vld [vmem:[%s5 + $0x108] sm:$0xff]
    %v779 = vld [vmem:[%s5 + $0x110] sm:$0xff]
    %v780 = vld [vmem:[%s5 + $0x118] sm:$0xff]
    %v781 = vld [vmem:[%s5 + $0x120] sm:$0xff]
    %v782 = vld [vmem:[%s5 + $0x128] sm:$0xff]
    %v783 = vld [vmem:[%s5 + $0x130] sm:$0xff]
    %v784 = vld [vmem:[%s5 + $0x138] sm:$0xff]
    %v785 = vld [vmem:[%s5 + $0x140] sm:$0xff]
    %v786 = vld [vmem:[%s5 + $0x148] sm:$0xff]
    %v787 = vld [vmem:[%s5 + $0x150] sm:$0xff]
    %v788 = vld [vmem:[%s5 + $0x158] sm:$0xff]
    %v789 = vld [vmem:[%s5 + $0x160] sm:$0xff]
    %v790 = vld [vmem:[%s5 + $0x168] sm:$0xff]
    %v791 = vld [vmem:[%s5 + $0x170] sm:$0xff]
    %v792 = vld [vmem:[%s5 + $0x178] sm:$0xff]
    %793 = vmatprep.subr.mxu0 %v791
    %794 = vmatpush1.msra.mxu0 %v790
    %795 = vmatprep.subr.mxu0 %v788
    %796 = vmatpush1.msra.mxu0 %v787
    %797 = vmatprep.subr.mxu0 %v785
    %798 = vmatpush1.msra.mxu0 %v784
    %799 = vmatprep.subr.mxu0 %v782
    %800 = vmatpush1.msra.mxu0 %v781
    %801 = vmatprep.subr.mxu0 %v779
    %802 = vmatpush1.msra.mxu0 %v778
    %803 = vmatprep.subr.mxu0 %v776
    %804 = vmatpush1.msra.mxu0 %v775
    %805 = vmatprep.subr.mxu0 %v773
    %806 = vmatpush1.msra.mxu0 %v772
    %807 = vmatprep.subr.mxu0 %v770
    %808 = vmatpush1.msra.mxu0 %v769
    %809 = vmatprep.subr.mxu0 %v767
    %810 = vmatpush1.msra.mxu0 %v766
    %811 = vmatprep.subr.mxu0 %v764
    %812 = vmatpush1.msra.mxu0 %v763
    %813 = vmatprep.subr.mxu0 %v761
    %814 = vmatpush1.msra.mxu0 %v760
    %815 = vmatprep.subr.mxu0 %v758
    %816 = vmatpush1.msra.mxu0 %v757
    %817 = vmatprep.subr.mxu0 %v755
    %818 = vmatpush1.msra.mxu0 %v754
    %819 = vmatprep.subr.mxu0 %v752
    %820 = vmatpush1.msra.mxu0 %v751
    %821 = vmatprep.subr.mxu0 %v749
    %822 = vmatpush1.msra.mxu0 %v748
    %823 = vmatprep.subr.mxu0 %v746
    %824 = vmatpush1.msra.mxu0 %v745
    %825 = vmatprep.subr.mxu0 0.0
    %826 = vmatpush2.msra.mxu0 0.0
    %827 = vmatprep.subr.mxu0 0.0
    %828 = vmatpush2.msra.mxu0 0.0
    %829 = vmatprep.subr.mxu0 0.0
    %830 = vmatpush2.msra.mxu0 0.0
    %831 = vmatprep.subr.mxu0 0.0
    %832 = vmatpush2.msra.mxu0 0.0
    %833 = vmatprep.subr.mxu0 0.0
    %834 = vmatpush2.msra.mxu0 0.0
    %835 = vmatprep.subr.mxu0 0.0
    %836 = vmatpush2.msra.mxu0 0.0
    %837 = vmatprep.subr.mxu0 0.0
    %838 = vmatpush2.msra.mxu0 0.0
    %839 = vmatprep.subr.mxu0 0.0
    %840 = vmatpush2.msra.mxu0 0.0
    %841 = vmatprep.subr.mxu0 0.0
    %842 = vmatpush2.msra.mxu0 0.0
    %843 = vmatprep.subr.mxu0 0.0
    %844 = vmatpush2.msra.mxu0 0.0
    %845 = vmatprep.subr.mxu0 0.0
    %846 = vmatpush2.msra.mxu0 0.0
    %847 = vmatprep.subr.mxu0 0.0
    %848 = vmatpush2.msra.mxu0 0.0
    %849 = vmatprep.subr.mxu0 0.0
    %850 = vmatpush2.msra.mxu0 0.0
    %851 = vmatprep.subr.mxu0 0.0
    %852 = vmatpush2.msra.mxu0 0.0
    %853 = vmatprep.subr.mxu0 0.0
    %854 = vmatpush2.msra.mxu0 0.0
    %855 = vmatprep.subr.mxu0 0.0
    %856 = vmatpush2.msra.mxu0 0.0
    %857 = vmatprep.mubr.f32.mxu0 0.0
    %858 = vmatmul.mubr.f32.gmra.mxu0 %v694
    %v859 = vpop.f32.mrf.mxu0
    %v860 = vadd.f32 0.0, %v859
    %v861 = vpop.f32.mrf.mxu0
    %v862 = vadd.f32 0.0, %v861
    %863 = vdwg.mxu0
    %864 = vmatprep.subr.mxu0 0.0
    %865 = vmatpush1.msra.mxu0 %v792
    %866 = vmatprep.subr.mxu0 0.0
    %867 = vmatpush1.msra.mxu0 %v789
    %868 = vmatprep.subr.mxu0 0.0
    %869 = vmatpush1.msra.mxu0 %v786
    %870 = vmatprep.subr.mxu0 0.0
    %871 = vmatpush1.msra.mxu0 %v783
    %872 = vmatprep.subr.mxu0 0.0
    %873 = vmatpush1.msra.mxu0 %v780
    %874 = vmatprep.subr.mxu0 0.0
    %875 = vmatpush1.msra.mxu0 %v777
    %876 = vmatprep.subr.mxu0 0.0
    %877 = vmatpush1.msra.mxu0 %v774
    %878 = vmatprep.subr.mxu0 0.0
    %879 = vmatpush1.msra.mxu0 %v771
    %880 = vmatprep.subr.mxu0 0.0
    %881 = vmatpush1.msra.mxu0 %v768
    %882 = vmatprep.subr.mxu0 0.0
    %883 = vmatpush1.msra.mxu0 %v765
    %884 = vmatprep.subr.mxu0 0.0
    %885 = vmatpush1.msra.mxu0 %v762
    %886 = vmatprep.subr.mxu0 0.0
    %887 = vmatpush1.msra.mxu0 %v759
    %888 = vmatprep.subr.mxu0 0.0
    %889 = vmatpush1.msra.mxu0 %v756
    %890 = vmatprep.subr.mxu0 0.0
    %891 = vmatpush1.msra.mxu0 %v753
    %892 = vmatprep.subr.mxu0 0.0
    %893 = vmatpush1.msra.mxu0 %v750
    %894 = vmatprep.subr.mxu0 0.0
    %895 = vmatpush1.msra.mxu0 %v747
    %896 = vmatprep.subr.mxu0 0.0
    %897 = vmatpush2.msra.mxu0 0.0
    %898 = vmatprep.subr.mxu0 0.0
    %899 = vmatpush2.msra.mxu0 0.0
    %900 = vmatprep.subr.mxu0 0.0
    %901 = vmatpush2.msra.mxu0 0.0
    %902 = vmatprep.subr.mxu0 0.0
    %903 = vmatpush2.msra.mxu0 0.0
    %904 = vmatprep.subr.mxu0 0.0
    %905 = vmatpush2.msra.mxu0 0.0
    %906 = vmatprep.subr.mxu0 0.0
    %907 = vmatpush2.msra.mxu0 0.0
    %908 = vmatprep.subr.mxu0 0.0
    %909 = vmatpush2.msra.mxu0 0.0
    %910 = vmatprep.subr.mxu0 0.0
    %911 = vmatpush2.msra.mxu0 0.0
    %912 = vmatprep.subr.mxu0 0.0
    %913 = vmatpush2.msra.mxu0 0.0
    %914 = vmatprep.subr.mxu0 0.0
    %915 = vmatpush2.msra.mxu0 0.0
    %916 = vmatprep.subr.mxu0 0.0
    %917 = vmatpush2.msra.mxu0 0.0
    %918 = vmatprep.subr.mxu0 0.0
    %919 = vmatpush2.msra.mxu0 0.0
    %920 = vmatprep.subr.mxu0 0.0
    %921 = vmatpush2.msra.mxu0 0.0
    %922 = vmatprep.subr.mxu0 0.0
    %923 = vmatpush2.msra.mxu0 0.0
    %924 = vmatprep.subr.mxu0 0.0
    %925 = vmatpush2.msra.mxu0 0.0
    %926 = vmatprep.subr.mxu0 0.0
    %927 = vmatpush2.msra.mxu0 0.0
    %928 = vmatprep.mubr.f32.mxu0 0.0
    %929 = vmatmul.mubr.f32.gmra.mxu0 %v694
    %v930 = vpop.f32.mrf.mxu0
    %v931 = vadd.f32 0.0, %v930
    %v932 = vpop.f32.mrf.mxu0
    %933 = vdwg.mxu0
    %934 = vmatprep.subr.mxu0 %v743
    %935 = vmatpush1.msra.mxu0 %v742
    %936 = vmatprep.subr.mxu0 %v740
    %937 = vmatpush1.msra.mxu0 %v739
    %938 = vmatprep.subr.mxu0 %v737
    %939 = vmatpush1.msra.mxu0 %v736
    %940 = vmatprep.subr.mxu0 %v734
    %941 = vmatpush1.msra.mxu0 %v733
    %942 = vmatprep.subr.mxu0 %v731
    %943 = vmatpush1.msra.mxu0 %v730
    %944 = vmatprep.subr.mxu0 %v728
    %945 = vmatpush1.msra.mxu0 %v727
    %946 = vmatprep.subr.mxu0 %v725
    %947 = vmatpush1.msra.mxu0 %v724
    %948 = vmatprep.subr.mxu0 %v722
    %949 = vmatpush1.msra.mxu0 %v721
    %950 = vmatprep.subr.mxu0 %v719
    %951 = vmatpush1.msra.mxu0 %v718
    %952 = vmatprep.subr.mxu0 %v716
    %953 = vmatpush1.msra.mxu0 %v715
    %954 = vmatprep.subr.mxu0 %v713
    %955 = vmatpush1.msra.mxu0 %v712
    %956 = vmatprep.subr.mxu0 %v710
    %957 = vmatpush1.msra.mxu0 %v709
    %958 = vmatprep.subr.mxu0 %v707
    %959 = vmatpush1.msra.mxu0 %v706
    %960 = vmatprep.subr.mxu0 %v704
    %961 = vmatpush1.msra.mxu0 %v703
    %962 = vmatprep.subr.mxu0 %v701
    %963 = vmatpush1.msra.mxu0 %v700
    %964 = vmatprep.subr.mxu0 %v698
    %965 = vmatpush1.msra.mxu0 %v697
    %966 = vmatprep.subr.mxu0 0.0
    %967 = vmatpush2.msra.mxu0 0.0
    %968 = vmatprep.subr.mxu0 0.0
    %969 = vmatpush2.msra.mxu0 0.0
    %970 = vmatprep.subr.mxu0 0.0
    %971 = vmatpush2.msra.mxu0 0.0
    %972 = vmatprep.subr.mxu0 0.0
    %973 = vmatpush2.msra.mxu0 0.0
    %974 = vmatprep.subr.mxu0 0.0
    %975 = vmatpush2.msra.mxu0 0.0
    %976 = vmatprep.subr.mxu0 0.0
    %977 = vmatpush2.msra.mxu0 0.0
    %978 = vmatprep.subr.mxu0 0.0
    %979 = vmatpush2.msra.mxu0 0.0
    %980 = vmatprep.subr.mxu0 0.0
    %981 = vmatpush2.msra.mxu0 0.0
    %982 = vmatprep.subr.mxu0 0.0
    %983 = vmatpush2.msra.mxu0 0.0
    %984 = vmatprep.subr.mxu0 0.0
    %985 = vmatpush2.msra.mxu0 0.0
    %986 = vmatprep.subr.mxu0 0.0
    %987 = vmatpush2.msra.mxu0 0.0
    %988 = vmatprep.subr.mxu0 0.0
    %989 = vmatpush2.msra.mxu0 0.0
    %990 = vmatprep.subr.mxu0 0.0
    %991 = vmatpush2.msra.mxu0 0.0
    %992 = vmatprep.subr.mxu0 0.0
    %993 = vmatpush2.msra.mxu0 0.0
    %994 = vmatprep.subr.mxu0 0.0
    %995 = vmatpush2.msra.mxu0 0.0
    %996 = vmatprep.subr.mxu0 0.0
    %997 = vmatpush2.msra.mxu0 0.0
    %998 = vmatprep.mubr.f32.mxu0 0.0
    %999 = vmatmul.mubr.f32.gmra.mxu0 %v690
    %v1000 = vpop.f32.mrf.mxu0
    %v1001 = vadd.f32 %v860, %v1000
    %v1002 = vpop.f32.mrf.mxu0
    %v1003 = vadd.f32 %v862, %v1002
    %1004 = vdwg.mxu0
    %1005 = vmatprep.subr.mxu0 0.0
    %1006 = vmatpush1.msra.mxu0 %v744
    %1007 = vmatprep.subr.mxu0 0.0
    %1008 = vmatpush1.msra.mxu0 %v741
    %1009 = vmatprep.subr.mxu0 0.0
    %1010 = vmatpush1.msra.mxu0 %v738
    %1011 = vmatprep.subr.mxu0 0.0
    %1012 = vmatpush1.msra.mxu0 %v735
    %1013 = vmatprep.subr.mxu0 0.0
    %1014 = vmatpush1.msra.mxu0 %v732
    %1015 = vmatprep.subr.mxu0 0.0
    %1016 = vmatpush1.msra.mxu0 %v729
    %1017 = vmatprep.subr.mxu0 0.0
    %1018 = vmatpush1.msra.mxu0 %v726
    %1019 = vmatprep.subr.mxu0 0.0
    %1020 = vmatpush1.msra.mxu0 %v723
    %1021 = vmatprep.subr.mxu0 0.0
    %1022 = vmatpush1.msra.mxu0 %v720
    %1023 = vmatprep.subr.mxu0 0.0
    %1024 = vmatpush1.msra.mxu0 %v717
    %1025 = vmatprep.subr.mxu0 0.0
    %1026 = vmatpush1.msra.mxu0 %v714
    %1027 = vmatprep.subr.mxu0 0.0
    %1028 = vmatpush1.msra.mxu0 %v711
    %1029 = vmatprep.subr.mxu0 0.0
    %1030 = vmatpush1.msra.mxu0 %v708
    %1031 = vmatprep.subr.mxu0 0.0
    %1032 = vmatpush1.msra.mxu0 %v705
    %1033 = vmatprep.subr.mxu0 0.0
    %1034 = vmatpush1.msra.mxu0 %v702
    %1035 = vmatprep.subr.mxu0 0.0
    %1036 = vmatpush1.msra.mxu0 %v699
    %1037 = vmatprep.subr.mxu0 0.0
    %1038 = vmatpush2.msra.mxu0 0.0
    %1039 = vmatprep.subr.mxu0 0.0
    %1040 = vmatpush2.msra.mxu0 0.0
    %1041 = vmatprep.subr.mxu0 0.0
    %1042 = vmatpush2.msra.mxu0 0.0
    %1043 = vmatprep.subr.mxu0 0.0
    %1044 = vmatpush2.msra.mxu0 0.0
    %1045 = vmatprep.subr.mxu0 0.0
    %1046 = vmatpush2.msra.mxu0 0.0
    %1047 = vmatprep.subr.mxu0 0.0
    %1048 = vmatpush2.msra.mxu0 0.0
    %1049 = vmatprep.subr.mxu0 0.0
    %1050 = vmatpush2.msra.mxu0 0.0
    %1051 = vmatprep.subr.mxu0 0.0
    %1052 = vmatpush2.msra.mxu0 0.0
    %1053 = vmatprep.subr.mxu0 0.0
    %1054 = vmatpush2.msra.mxu0 0.0
    %1055 = vmatprep.subr.mxu0 0.0
    %1056 = vmatpush2.msra.mxu0 0.0
    %1057 = vmatprep.subr.mxu0 0.0
    %1058 = vmatpush2.msra.mxu0 0.0
    %1059 = vmatprep.subr.mxu0 0.0
    %1060 = vmatpush2.msra.mxu0 0.0
    %1061 = vmatprep.subr.mxu0 0.0
    %1062 = vmatpush2.msra.mxu0 0.0
    %1063 = vmatprep.subr.mxu0 0.0
    %1064 = vmatpush2.msra.mxu0 0.0
    %1065 = vmatprep.subr.mxu0 0.0
    %1066 = vmatpush2.msra.mxu0 0.0
    %1067 = vmatprep.subr.mxu0 0.0
    %1068 = vmatpush2.msra.mxu0 0.0
    %1069 = vmatprep.mubr.f32.mxu0 0.0
    %1070 = vmatmul.mubr.f32.gmra.mxu0 %v690
    %v1071 = vpop.f32.mrf.mxu0
    %v1072 = vadd.f32 %v931, %v1071
    %v1073 = vpop.f32.mrf.mxu0
    %1074 = vdwg.mxu0
    %v1075 = vld [vmem:[%s6] sm:$0x7]
    %v1077 = vlaneseq
    %v1078 = vshrl.u32 %v1077, 7
    %v1079 = vsub.s32 0, %v1078
    %v1080 = vrot.slane %v1075, %v1079
    %v1081 = vlaneseq
    %v1082 = vshrl.u32 %v1081, 7
    %v1083 = vsub.s32 1, %v1082
    %v1084 = vrot.slane %v1075, %v1083
    %v1085 = vlaneseq
    %v1086 = vshrl.u32 %v1085, 7
    %v1087 = vsub.s32 2, %v1086
    %v1088 = vrot.slane %v1075, %v1087
    %v1092 = vadd.f32 %v1001, %v1080
    %v1093 = vadd.f32 %v1003, %v1084
    %v1094 = vadd.f32 %v1072, %v1088
    %v1095 = vxor.u32 %v1092, 2147483648
    %v1096 = vmul.f32 %v1095, 1.442695
    %v1097 = vpow.pop %v1096
    %v1098 = vadd.f32 %v1097, 1.0
    %v1099 = vrcp.pop %v1098
    %v1100 = vmul.f32 1.0, %v1099
    %v1101 = vxor.u32 %v1093, 2147483648
    %v1102 = vmul.f32 %v1101, 1.442695
    %v1103 = vpow.pop %v1102
    %v1104 = vadd.f32 %v1103, 1.0
    %v1105 = vrcp.pop %v1104
    %v1106 = vmul.f32 1.0, %v1105
    %v1107 = vxor.u32 %v1094, 2147483648
    %v1108 = vmul.f32 %v1107, 1.442695
    %v1109 = vpow.pop %v1108
    %v1110 = vadd.f32 %v1109, 1.0
    %v1111 = vrcp.pop %v1110
    %v1112 = vmul.f32 1.0, %v1111
    %v1113 = vmul.f32 %v1112, %v692
    %v1114 = vmul.f32 %v1100, %v696
    %v1115 = vadd.f32 %v1113, %v1114
    %v1116 = vtanh.pop %v1115
    %v1117 = vmul.f32 %v1106, %v1116
    %s1118 = scalar_lea.vmem [#allocation2], 2
    %1119 = vst [vmem:[%s1118] sm:$0x1] %v1117
    %s1120 = scalar_lea.vmem [#allocation3], 2
    %1121 = vst [vmem:[%s1120] sm:$0x1] %v1115
    %s1122 = sld [smem:[#allocation5 + $0x2]]
    %s1123 = sld [smem:[#allocation5 + $0x82]]
    %s1124 = scalar_lea.vmem [#allocation2], %s1122
    %v1125 = vld [vmem:[%s1124] sm:$0x1]
    %s1126 = scalar_lea.vmem [#allocation3], %s1122
    %v1127 = vld [vmem:[%s1126] sm:$0x1]
    %s1128 = scalar_lea.vmem [#allocation2], %s1123
    %v1129 = vld [vmem:[%s1128] sm:$0x1]
    %s1130 = scalar_lea.vmem [#allocation3], %s1123
    %v1131 = vld [vmem:[%s1130] sm:$0x1]
    %v1132 = vld [vmem:[%s4] sm:$0xff]
    %v1133 = vld [vmem:[%s4 + $0x8] sm:$0xff]
    %v1134 = vld [vmem:[%s4 + $0x10] sm:$0xff]
    %v1135 = vld [vmem:[%s4 + $0x18] sm:$0xff]
    %v1136 = vld [vmem:[%s4 + $0x20] sm:$0xff]
    %v1137 = vld [vmem:[%s4 + $0x28] sm:$0xff]
    %v1138 = vld [vmem:[%s4 + $0x30] sm:$0xff]
    %v1139 = vld [vmem:[%s4 + $0x38] sm:$0xff]
    %v1140 = vld [vmem:[%s4 + $0x40] sm:$0xff]
    %v1141 = vld [vmem:[%s4 + $0x48] sm:$0xff]
    %v1142 = vld [vmem:[%s4 + $0x50] sm:$0xff]
    %v1143 = vld [vmem:[%s4 + $0x58] sm:$0xff]
    %v1144 = vld [vmem:[%s4 + $0x60] sm:$0xff]
    %v1145 = vld [vmem:[%s4 + $0x68] sm:$0xff]
    %v1146 = vld [vmem:[%s4 + $0x70] sm:$0xff]
    %v1147 = vld [vmem:[%s4 + $0x78] sm:$0xff]
    %v1148 = vld [vmem:[%s4 + $0x80] sm:$0xff]
    %v1149 = vld [vmem:[%s4 + $0x88] sm:$0xff]
    %v1150 = vld [vmem:[%s4 + $0x90] sm:$0xff]
    %v1151 = vld [vmem:[%s4 + $0x98] sm:$0xff]
    %v1152 = vld [vmem:[%s4 + $0xa0] sm:$0xff]
    %v1153 = vld [vmem:[%s4 + $0xa8] sm:$0xff]
    %v1154 = vld [vmem:[%s4 + $0xb0] sm:$0xff]
    %v1155 = vld [vmem:[%s4 + $0xb8] sm:$0xff]
    %v1156 = vld [vmem:[%s4 + $0xc0] sm:$0xff]
    %v1157 = vld [vmem:[%s4 + $0xc8] sm:$0xff]
    %v1158 = vld [vmem:[%s4 + $0xd0] sm:$0xff]
    %v1159 = vld [vmem:[%s4 + $0xd8] sm:$0xff]
    %v1160 = vld [vmem:[%s4 + $0xe0] sm:$0xff]
    %v1161 = vld [vmem:[%s4 + $0xe8] sm:$0xff]
    %v1162 = vld [vmem:[%s4 + $0xf0] sm:$0xff]
    %v1163 = vld [vmem:[%s4 + $0xf8] sm:$0xff]
    %v1164 = vld [vmem:[%s4 + $0x100] sm:$0xff]
    %v1165 = vld [vmem:[%s4 + $0x108] sm:$0xff]
    %v1166 = vld [vmem:[%s4 + $0x110] sm:$0xff]
    %v1167 = vld [vmem:[%s4 + $0x118] sm:$0xff]
    %v1168 = vld [vmem:[%s4 + $0x120] sm:$0xff]
    %v1169 = vld [vmem:[%s4 + $0x128] sm:$0xff]
    %v1170 = vld [vmem:[%s4 + $0x130] sm:$0xff]
    %v1171 = vld [vmem:[%s4 + $0x138] sm:$0xff]
    %v1172 = vld [vmem:[%s4 + $0x140] sm:$0xff]
    %v1173 = vld [vmem:[%s4 + $0x148] sm:$0xff]
    %v1174 = vld [vmem:[%s4 + $0x150] sm:$0xff]
    %v1175 = vld [vmem:[%s4 + $0x158] sm:$0xff]
    %v1176 = vld [vmem:[%s4 + $0x160] sm:$0xff]
    %v1177 = vld [vmem:[%s4 + $0x168] sm:$0xff]
    %v1178 = vld [vmem:[%s4 + $0x170] sm:$0xff]
    %v1179 = vld [vmem:[%s4 + $0x178] sm:$0xff]
    %v1180 = vld [vmem:[%s5] sm:$0xff]
    %v1181 = vld [vmem:[%s5 + $0x8] sm:$0xff]
    %v1182 = vld [vmem:[%s5 + $0x10] sm:$0xff]
    %v1183 = vld [vmem:[%s5 + $0x18] sm:$0xff]
    %v1184 = vld [vmem:[%s5 + $0x20] sm:$0xff]
    %v1185 = vld [vmem:[%s5 + $0x28] sm:$0xff]
    %v1186 = vld [vmem:[%s5 + $0x30] sm:$0xff]
    %v1187 = vld [vmem:[%s5 + $0x38] sm:$0xff]
    %v1188 = vld [vmem:[%s5 + $0x40] sm:$0xff]
    %v1189 = vld [vmem:[%s5 + $0x48] sm:$0xff]
    %v1190 = vld [vmem:[%s5 + $0x50] sm:$0xff]
    %v1191 = vld [vmem:[%s5 + $0x58] sm:$0xff]
    %v1192 = vld [vmem:[%s5 + $0x60] sm:$0xff]
    %v1193 = vld [vmem:[%s5 + $0x68] sm:$0xff]
    %v1194 = vld [vmem:[%s5 + $0x70] sm:$0xff]
    %v1195 = vld [vmem:[%s5 + $0x78] sm:$0xff]
    %v1196 = vld [vmem:[%s5 + $0x80] sm:$0xff]
    %v1197 = vld [vmem:[%s5 + $0x88] sm:$0xff]
    %v1198 = vld [vmem:[%s5 + $0x90] sm:$0xff]
    %v1199 = vld [vmem:[%s5 + $0x98] sm:$0xff]
    %v1200 = vld [vmem:[%s5 + $0xa0] sm:$0xff]
    %v1201 = vld [vmem:[%s5 + $0xa8] sm:$0xff]
    %v1202 = vld [vmem:[%s5 + $0xb0] sm:$0xff]
    %v1203 = vld [vmem:[%s5 + $0xb8] sm:$0xff]
    %v1204 = vld [vmem:[%s5 + $0xc0] sm:$0xff]
    %v1205 = vld [vmem:[%s5 + $0xc8] sm:$0xff]
    %v1206 = vld [vmem:[%s5 + $0xd0] sm:$0xff]
    %v1207 = vld [vmem:[%s5 + $0xd8] sm:$0xff]
    %v1208 = vld [vmem:[%s5 + $0xe0] sm:$0xff]
    %v1209 = vld [vmem:[%s5 + $0xe8] sm:$0xff]
    %v1210 = vld [vmem:[%s5 + $0xf0] sm:$0xff]
    %v1211 = vld [vmem:[%s5 + $0xf8] sm:$0xff]
    %v1212 = vld [vmem:[%s5 + $0x100] sm:$0xff]
    %v1213 = vld [vmem:[%s5 + $0x108] sm:$0xff]
    %v1214 = vld [vmem:[%s5 + $0x110] sm:$0xff]
    %v1215 = vld [vmem:[%s5 + $0x118] sm:$0xff]
    %v1216 = vld [vmem:[%s5 + $0x120] sm:$0xff]
    %v1217 = vld [vmem:[%s5 + $0x128] sm:$0xff]
    %v1218 = vld [vmem:[%s5 + $0x130] sm:$0xff]
    %v1219 = vld [vmem:[%s5 + $0x138] sm:$0xff]
    %v1220 = vld [vmem:[%s5 + $0x140] sm:$0xff]
    %v1221 = vld [vmem:[%s5 + $0x148] sm:$0xff]
    %v1222 = vld [vmem:[%s5 + $0x150] sm:$0xff]
    %v1223 = vld [vmem:[%s5 + $0x158] sm:$0xff]
    %v1224 = vld [vmem:[%s5 + $0x160] sm:$0xff]
    %v1225 = vld [vmem:[%s5 + $0x168] sm:$0xff]
    %v1226 = vld [vmem:[%s5 + $0x170] sm:$0xff]
    %v1227 = vld [vmem:[%s5 + $0x178] sm:$0xff]
    %1228 = vmatprep.subr.mxu0 %v1226
    %1229 = vmatpush1.msra.mxu0 %v1225
    %1230 = vmatprep.subr.mxu0 %v1223
    %1231 = vmatpush1.msra.mxu0 %v1222
    %1232 = vmatprep.subr.mxu0 %v1220
    %1233 = vmatpush1.msra.mxu0 %v1219
    %1234 = vmatprep.subr.mxu0 %v1217
    %1235 = vmatpush1.msra.mxu0 %v1216
    %1236 = vmatprep.subr.mxu0 %v1214
    %1237 = vmatpush1.msra.mxu0 %v1213
    %1238 = vmatprep.subr.mxu0 %v1211
    %1239 = vmatpush1.msra.mxu0 %v1210
    %1240 = vmatprep.subr.mxu0 %v1208
    %1241 = vmatpush1.msra.mxu0 %v1207
    %1242 = vmatprep.subr.mxu0 %v1205
    %1243 = vmatpush1.msra.mxu0 %v1204
    %1244 = vmatprep.subr.mxu0 %v1202
    %1245 = vmatpush1.msra.mxu0 %v1201
    %1246 = vmatprep.subr.mxu0 %v1199
    %1247 = vmatpush1.msra.mxu0 %v1198
    %1248 = vmatprep.subr.mxu0 %v1196
    %1249 = vmatpush1.msra.mxu0 %v1195
    %1250 = vmatprep.subr.mxu0 %v1193
    %1251 = vmatpush1.msra.mxu0 %v1192
    %1252 = vmatprep.subr.mxu0 %v1190
    %1253 = vmatpush1.msra.mxu0 %v1189
    %1254 = vmatprep.subr.mxu0 %v1187
    %1255 = vmatpush1.msra.mxu0 %v1186
    %1256 = vmatprep.subr.mxu0 %v1184
    %1257 = vmatpush1.msra.mxu0 %v1183
    %1258 = vmatprep.subr.mxu0 %v1181
    %1259 = vmatpush1.msra.mxu0 %v1180
    %1260 = vmatprep.subr.mxu0 0.0
    %1261 = vmatpush2.msra.mxu0 0.0
    %1262 = vmatprep.subr.mxu0 0.0
    %1263 = vmatpush2.msra.mxu0 0.0
    %1264 = vmatprep.subr.mxu0 0.0
    %1265 = vmatpush2.msra.mxu0 0.0
    %1266 = vmatprep.subr.mxu0 0.0
    %1267 = vmatpush2.msra.mxu0 0.0
    %1268 = vmatprep.subr.mxu0 0.0
    %1269 = vmatpush2.msra.mxu0 0.0
    %1270 = vmatprep.subr.mxu0 0.0
    %1271 = vmatpush2.msra.mxu0 0.0
    %1272 = vmatprep.subr.mxu0 0.0
    %1273 = vmatpush2.msra.mxu0 0.0
    %1274 = vmatprep.subr.mxu0 0.0
    %1275 = vmatpush2.msra.mxu0 0.0
    %1276 = vmatprep.subr.mxu0 0.0
    %1277 = vmatpush2.msra.mxu0 0.0
    %1278 = vmatprep.subr.mxu0 0.0
    %1279 = vmatpush2.msra.mxu0 0.0
    %1280 = vmatprep.subr.mxu0 0.0
    %1281 = vmatpush2.msra.mxu0 0.0
    %1282 = vmatprep.subr.mxu0 0.0
    %1283 = vmatpush2.msra.mxu0 0.0
    %1284 = vmatprep.subr.mxu0 0.0
    %1285 = vmatpush2.msra.mxu0 0.0
    %1286 = vmatprep.subr.mxu0 0.0
    %1287 = vmatpush2.msra.mxu0 0.0
    %1288 = vmatprep.subr.mxu0 0.0
    %1289 = vmatpush2.msra.mxu0 0.0
    %1290 = vmatprep.subr.mxu0 0.0
    %1291 = vmatpush2.msra.mxu0 0.0
    %1292 = vmatprep.mubr.f32.mxu0 0.0
    %1293 = vmatmul.mubr.f32.gmra.mxu0 %v1129
    %v1294 = vpop.f32.mrf.mxu0
    %v1295 = vadd.f32 0.0, %v1294
    %v1296 = vpop.f32.mrf.mxu0
    %v1297 = vadd.f32 0.0, %v1296
    %1298 = vdwg.mxu0
    %1299 = vmatprep.subr.mxu0 0.0
    %1300 = vmatpush1.msra.mxu0 %v1227
    %1301 = vmatprep.subr.mxu0 0.0
    %1302 = vmatpush1.msra.mxu0 %v1224
    %1303 = vmatprep.subr.mxu0 0.0
    %1304 = vmatpush1.msra.mxu0 %v1221
    %1305 = vmatprep.subr.mxu0 0.0
    %1306 = vmatpush1.msra.mxu0 %v1218
    %1307 = vmatprep.subr.mxu0 0.0
    %1308 = vmatpush1.msra.mxu0 %v1215
    %1309 = vmatprep.subr.mxu0 0.0
    %1310 = vmatpush1.msra.mxu0 %v1212
    %1311 = vmatprep.subr.mxu0 0.0
    %1312 = vmatpush1.msra.mxu0 %v1209
    %1313 = vmatprep.subr.mxu0 0.0
    %1314 = vmatpush1.msra.mxu0 %v1206
    %1315 = vmatprep.subr.mxu0 0.0
    %1316 = vmatpush1.msra.mxu0 %v1203
    %1317 = vmatprep.subr.mxu0 0.0
    %1318 = vmatpush1.msra.mxu0 %v1200
    %1319 = vmatprep.subr.mxu0 0.0
    %1320 = vmatpush1.msra.mxu0 %v1197
    %1321 = vmatprep.subr.mxu0 0.0
    %1322 = vmatpush1.msra.mxu0 %v1194
    %1323 = vmatprep.subr.mxu0 0.0
    %1324 = vmatpush1.msra.mxu0 %v1191
    %1325 = vmatprep.subr.mxu0 0.0
    %1326 = vmatpush1.msra.mxu0 %v1188
    %1327 = vmatprep.subr.mxu0 0.0
    %1328 = vmatpush1.msra.mxu0 %v1185
    %1329 = vmatprep.subr.mxu0 0.0
    %1330 = vmatpush1.msra.mxu0 %v1182
    %1331 = vmatprep.subr.mxu0 0.0
    %1332 = vmatpush2.msra.mxu0 0.0
    %1333 = vmatprep.subr.mxu0 0.0
    %1334 = vmatpush2.msra.mxu0 0.0
    %1335 = vmatprep.subr.mxu0 0.0
    %1336 = vmatpush2.msra.mxu0 0.0
    %1337 = vmatprep.subr.mxu0 0.0
    %1338 = vmatpush2.msra.mxu0 0.0
    %1339 = vmatprep.subr.mxu0 0.0
    %1340 = vmatpush2.msra.mxu0 0.0
    %1341 = vmatprep.subr.mxu0 0.0
    %1342 = vmatpush2.msra.mxu0 0.0
    %1343 = vmatprep.subr.mxu0 0.0
    %1344 = vmatpush2.msra.mxu0 0.0
    %1345 = vmatprep.subr.mxu0 0.0
    %1346 = vmatpush2.msra.mxu0 0.0
    %1347 = vmatprep.subr.mxu0 0.0
    %1348 = vmatpush2.msra.mxu0 0.0
    %1349 = vmatprep.subr.mxu0 0.0
    %1350 = vmatpush2.msra.mxu0 0.0
    %1351 = vmatprep.subr.mxu0 0.0
    %1352 = vmatpush2.msra.mxu0 0.0
    %1353 = vmatprep.subr.mxu0 0.0
    %1354 = vmatpush2.msra.mxu0 0.0
    %1355 = vmatprep.subr.mxu0 0.0
    %1356 = vmatpush2.msra.mxu0 0.0
    %1357 = vmatprep.subr.mxu0 0.0
    %1358 = vmatpush2.msra.mxu0 0.0
    %1359 = vmatprep.subr.mxu0 0.0
    %1360 = vmatpush2.msra.mxu0 0.0
    %1361 = vmatprep.subr.mxu0 0.0
    %1362 = vmatpush2.msra.mxu0 0.0
    %1363 = vmatprep.mubr.f32.mxu0 0.0
    %1364 = vmatmul.mubr.f32.gmra.mxu0 %v1129
    %v1365 = vpop.f32.mrf.mxu0
    %v1366 = vadd.f32 0.0, %v1365
    %v1367 = vpop.f32.mrf.mxu0
    %1368 = vdwg.mxu0
    %1369 = vmatprep.subr.mxu0 %v1178
    %1370 = vmatpush1.msra.mxu0 %v1177
    %1371 = vmatprep.subr.mxu0 %v1175
    %1372 = vmatpush1.msra.mxu0 %v1174
    %1373 = vmatprep.subr.mxu0 %v1172
    %1374 = vmatpush1.msra.mxu0 %v1171
    %1375 = vmatprep.subr.mxu0 %v1169
    %1376 = vmatpush1.msra.mxu0 %v1168
    %1377 = vmatprep.subr.mxu0 %v1166
    %1378 = vmatpush1.msra.mxu0 %v1165
    %1379 = vmatprep.subr.mxu0 %v1163
    %1380 = vmatpush1.msra.mxu0 %v1162
    %1381 = vmatprep.subr.mxu0 %v1160
    %1382 = vmatpush1.msra.mxu0 %v1159
    %1383 = vmatprep.subr.mxu0 %v1157
    %1384 = vmatpush1.msra.mxu0 %v1156
    %1385 = vmatprep.subr.mxu0 %v1154
    %1386 = vmatpush1.msra.mxu0 %v1153
    %1387 = vmatprep.subr.mxu0 %v1151
    %1388 = vmatpush1.msra.mxu0 %v1150
    %1389 = vmatprep.subr.mxu0 %v1148
    %1390 = vmatpush1.msra.mxu0 %v1147
    %1391 = vmatprep.subr.mxu0 %v1145
    %1392 = vmatpush1.msra.mxu0 %v1144
    %1393 = vmatprep.subr.mxu0 %v1142
    %1394 = vmatpush1.msra.mxu0 %v1141
    %1395 = vmatprep.subr.mxu0 %v1139
    %1396 = vmatpush1.msra.mxu0 %v1138
    %1397 = vmatprep.subr.mxu0 %v1136
    %1398 = vmatpush1.msra.mxu0 %v1135
    %1399 = vmatprep.subr.mxu0 %v1133
    %1400 = vmatpush1.msra.mxu0 %v1132
    %1401 = vmatprep.subr.mxu0 0.0
    %1402 = vmatpush2.msra.mxu0 0.0
    %1403 = vmatprep.subr.mxu0 0.0
    %1404 = vmatpush2.msra.mxu0 0.0
    %1405 = vmatprep.subr.mxu0 0.0
    %1406 = vmatpush2.msra.mxu0 0.0
    %1407 = vmatprep.subr.mxu0 0.0
    %1408 = vmatpush2.msra.mxu0 0.0
    %1409 = vmatprep.subr.mxu0 0.0
    %1410 = vmatpush2.msra.mxu0 0.0
    %1411 = vmatprep.subr.mxu0 0.0
    %1412 = vmatpush2.msra.mxu0 0.0
    %1413 = vmatprep.subr.mxu0 0.0
    %1414 = vmatpush2.msra.mxu0 0.0
    %1415 = vmatprep.subr.mxu0 0.0
    %1416 = vmatpush2.msra.mxu0 0.0
    %1417 = vmatprep.subr.mxu0 0.0
    %1418 = vmatpush2.msra.mxu0 0.0
    %1419 = vmatprep.subr.mxu0 0.0
    %1420 = vmatpush2.msra.mxu0 0.0
    %1421 = vmatprep.subr.mxu0 0.0
    %1422 = vmatpush2.msra.mxu0 0.0
    %1423 = vmatprep.subr.mxu0 0.0
    %1424 = vmatpush2.msra.mxu0 0.0
    %1425 = vmatprep.subr.mxu0 0.0
    %1426 = vmatpush2.msra.mxu0 0.0
    %1427 = vmatprep.subr.mxu0 0.0
    %1428 = vmatpush2.msra.mxu0 0.0
    %1429 = vmatprep.subr.mxu0 0.0
    %1430 = vmatpush2.msra.mxu0 0.0
    %1431 = vmatprep.subr.mxu0 0.0
    %1432 = vmatpush2.msra.mxu0 0.0
    %1433 = vmatprep.mubr.f32.mxu0 0.0
    %1434 = vmatmul.mubr.f32.gmra.mxu0 %v1125
    %v1435 = vpop.f32.mrf.mxu0
    %v1436 = vadd.f32 %v1295, %v1435
    %v1437 = vpop.f32.mrf.mxu0
    %v1438 = vadd.f32 %v1297, %v1437
    %1439 = vdwg.mxu0
    %1440 = vmatprep.subr.mxu0 0.0
    %1441 = vmatpush1.msra.mxu0 %v1179
    %1442 = vmatprep.subr.mxu0 0.0
    %1443 = vmatpush1.msra.mxu0 %v1176
    %1444 = vmatprep.subr.mxu0 0.0
    %1445 = vmatpush1.msra.mxu0 %v1173
    %1446 = vmatprep.subr.mxu0 0.0
    %1447 = vmatpush1.msra.mxu0 %v1170
    %1448 = vmatprep.subr.mxu0 0.0
    %1449 = vmatpush1.msra.mxu0 %v1167
    %1450 = vmatprep.subr.mxu0 0.0
    %1451 = vmatpush1.msra.mxu0 %v1164
    %1452 = vmatprep.subr.mxu0 0.0
    %1453 = vmatpush1.msra.mxu0 %v1161
    %1454 = vmatprep.subr.mxu0 0.0
    %1455 = vmatpush1.msra.mxu0 %v1158
    %1456 = vmatprep.subr.mxu0 0.0
    %1457 = vmatpush1.msra.mxu0 %v1155
    %1458 = vmatprep.subr.mxu0 0.0
    %1459 = vmatpush1.msra.mxu0 %v1152
    %1460 = vmatprep.subr.mxu0 0.0
    %1461 = vmatpush1.msra.mxu0 %v1149
    %1462 = vmatprep.subr.mxu0 0.0
    %1463 = vmatpush1.msra.mxu0 %v1146
    %1464 = vmatprep.subr.mxu0 0.0
    %1465 = vmatpush1.msra.mxu0 %v1143
    %1466 = vmatprep.subr.mxu0 0.0
    %1467 = vmatpush1.msra.mxu0 %v1140
    %1468 = vmatprep.subr.mxu0 0.0
    %1469 = vmatpush1.msra.mxu0 %v1137
    %1470 = vmatprep.subr.mxu0 0.0
    %1471 = vmatpush1.msra.mxu0 %v1134
    %1472 = vmatprep.subr.mxu0 0.0
    %1473 = vmatpush2.msra.mxu0 0.0
    %1474 = vmatprep.subr.mxu0 0.0
    %1475 = vmatpush2.msra.mxu0 0.0
    %1476 = vmatprep.subr.mxu0 0.0
    %1477 = vmatpush2.msra.mxu0 0.0
    %1478 = vmatprep.subr.mxu0 0.0
    %1479 = vmatpush2.msra.mxu0 0.0
    %1480 = vmatprep.subr.mxu0 0.0
    %1481 = vmatpush2.msra.mxu0 0.0
    %1482 = vmatprep.subr.mxu0 0.0
    %1483 = vmatpush2.msra.mxu0 0.0
    %1484 = vmatprep.subr.mxu0 0.0
    %1485 = vmatpush2.msra.mxu0 0.0
    %1486 = vmatprep.subr.mxu0 0.0
    %1487 = vmatpush2.msra.mxu0 0.0
    %1488 = vmatprep.subr.mxu0 0.0
    %1489 = vmatpush2.msra.mxu0 0.0
    %1490 = vmatprep.subr.mxu0 0.0
    %1491 = vmatpush2.msra.mxu0 0.0
    %1492 = vmatprep.subr.mxu0 0.0
    %1493 = vmatpush2.msra.mxu0 0.0
    %1494 = vmatprep.subr.mxu0 0.0
    %1495 = vmatpush2.msra.mxu0 0.0
    %1496 = vmatprep.subr.mxu0 0.0
    %1497 = vmatpush2.msra.mxu0 0.0
    %1498 = vmatprep.subr.mxu0 0.0
    %1499 = vmatpush2.msra.mxu0 0.0
    %1500 = vmatprep.subr.mxu0 0.0
    %1501 = vmatpush2.msra.mxu0 0.0
    %1502 = vmatprep.subr.mxu0 0.0
    %1503 = vmatpush2.msra.mxu0 0.0
    %1504 = vmatprep.mubr.f32.mxu0 0.0
    %1505 = vmatmul.mubr.f32.gmra.mxu0 %v1125
    %v1506 = vpop.f32.mrf.mxu0
    %v1507 = vadd.f32 %v1366, %v1506
    %v1508 = vpop.f32.mrf.mxu0
    %1509 = vdwg.mxu0
    %v1510 = vld [vmem:[%s6] sm:$0x7]
    %v1512 = vlaneseq
    %v1513 = vshrl.u32 %v1512, 7
    %v1514 = vsub.s32 0, %v1513
    %v1515 = vrot.slane %v1510, %v1514
    %v1516 = vlaneseq
    %v1517 = vshrl.u32 %v1516, 7
    %v1518 = vsub.s32 1, %v1517
    %v1519 = vrot.slane %v1510, %v1518
    %v1520 = vlaneseq
    %v1521 = vshrl.u32 %v1520, 7
    %v1522 = vsub.s32 2, %v1521
    %v1523 = vrot.slane %v1510, %v1522
    %v1527 = vadd.f32 %v1436, %v1515
    %v1528 = vadd.f32 %v1438, %v1519
    %v1529 = vadd.f32 %v1507, %v1523
    %v1530 = vxor.u32 %v1527, 2147483648
    %v1531 = vmul.f32 %v1530, 1.442695
    %v1532 = vpow.pop %v1531
    %v1533 = vadd.f32 %v1532, 1.0
    %v1534 = vrcp.pop %v1533
    %v1535 = vmul.f32 1.0, %v1534
    %v1536 = vxor.u32 %v1528, 2147483648
    %v1537 = vmul.f32 %v1536, 1.442695
    %v1538 = vpow.pop %v1537
    %v1539 = vadd.f32 %v1538, 1.0
    %v1540 = vrcp.pop %v1539
    %v1541 = vmul.f32 1.0, %v1540
    %v1542 = vxor.u32 %v1529, 2147483648
    %v1543 = vmul.f32 %v1542, 1.442695
    %v1544 = vpow.pop %v1543
    %v1545 = vadd.f32 %v1544, 1.0
    %v1546 = vrcp.pop %v1545
    %v1547 = vmul.f32 1.0, %v1546
    %v1548 = vmul.f32 %v1547, %v1127
    %v1549 = vmul.f32 %v1535, %v1131
    %v1550 = vadd.f32 %v1548, %v1549
    %v1551 = vtanh.pop %v1550
    %v1552 = vmul.f32 %v1541, %v1551
    %s1553 = scalar_lea.vmem [#allocation2], 3
    %1554 = vst [vmem:[%s1553] sm:$0x1] %v1552
    %s1555 = scalar_lea.vmem [#allocation3], 3
    %1556 = vst [vmem:[%s1555] sm:$0x1] %v1550
    %s1557 = sld [smem:[#allocation5 + $0x3]]
    %s1558 = sld [smem:[#allocation5 + $0x83]]
    %s1559 = scalar_lea.vmem [#allocation2], %s1557
    %v1560 = vld [vmem:[%s1559] sm:$0x1]
    %s1561 = scalar_lea.vmem [#allocation3], %s1557
    %v1562 = vld [vmem:[%s1561] sm:$0x1]
    %s1563 = scalar_lea.vmem [#allocation2], %s1558
    %v1564 = vld [vmem:[%s1563] sm:$0x1]
    %s1565 = scalar_lea.vmem [#allocation3], %s1558
    %v1566 = vld [vmem:[%s1565] sm:$0x1]
    %v1567 = vld [vmem:[%s4] sm:$0xff]
    %v1568 = vld [vmem:[%s4 + $0x8] sm:$0xff]
    %v1569 = vld [vmem:[%s4 + $0x10] sm:$0xff]
    %v1570 = vld [vmem:[%s4 + $0x18] sm:$0xff]
    %v1571 = vld [vmem:[%s4 + $0x20] sm:$0xff]
    %v1572 = vld [vmem:[%s4 + $0x28] sm:$0xff]
    %v1573 = vld [vmem:[%s4 + $0x30] sm:$0xff]
    %v1574 = vld [vmem:[%s4 + $0x38] sm:$0xff]
    %v1575 = vld [vmem:[%s4 + $0x40] sm:$0xff]
    %v1576 = vld [vmem:[%s4 + $0x48] sm:$0xff]
    %v1577 = vld [vmem:[%s4 + $0x50] sm:$0xff]
    %v1578 = vld [vmem:[%s4 + $0x58] sm:$0xff]
    %v1579 = vld [vmem:[%s4 + $0x60] sm:$0xff]
    %v1580 = vld [vmem:[%s4 + $0x68] sm:$0xff]
    %v1581 = vld [vmem:[%s4 + $0x70] sm:$0xff]
    %v1582 = vld [vmem:[%s4 + $0x78] sm:$0xff]
    %v1583 = vld [vmem:[%s4 + $0x80] sm:$0xff]
    %v1584 = vld [vmem:[%s4 + $0x88] sm:$0xff]
    %v1585 = vld [vmem:[%s4 + $0x90] sm:$0xff]
    %v1586 = vld [vmem:[%s4 + $0x98] sm:$0xff]
    %v1587 = vld [vmem:[%s4 + $0xa0] sm:$0xff]
    %v1588 = vld [vmem:[%s4 + $0xa8] sm:$0xff]
    %v1589 = vld [vmem:[%s4 + $0xb0] sm:$0xff]
    %v1590 = vld [vmem:[%s4 + $0xb8] sm:$0xff]
    %v1591 = vld [vmem:[%s4 + $0xc0] sm:$0xff]
    %v1592 = vld [vmem:[%s4 + $0xc8] sm:$0xff]
    %v1593 = vld [vmem:[%s4 + $0xd0] sm:$0xff]
    %v1594 = vld [vmem:[%s4 + $0xd8] sm:$0xff]
    %v1595 = vld [vmem:[%s4 + $0xe0] sm:$0xff]
    %v1596 = vld [vmem:[%s4 + $0xe8] sm:$0xff]
    %v1597 = vld [vmem:[%s4 + $0xf0] sm:$0xff]
    %v1598 = vld [vmem:[%s4 + $0xf8] sm:$0xff]
    %v1599 = vld [vmem:[%s4 + $0x100] sm:$0xff]
    %v1600 = vld [vmem:[%s4 + $0x108] sm:$0xff]
    %v1601 = vld [vmem:[%s4 + $0x110] sm:$0xff]
    %v1602 = vld [vmem:[%s4 + $0x118] sm:$0xff]
    %v1603 = vld [vmem:[%s4 + $0x120] sm:$0xff]
    %v1604 = vld [vmem:[%s4 + $0x128] sm:$0xff]
    %v1605 = vld [vmem:[%s4 + $0x130] sm:$0xff]
    %v1606 = vld [vmem:[%s4 + $0x138] sm:$0xff]
    %v1607 = vld [vmem:[%s4 + $0x140] sm:$0xff]
    %v1608 = vld [vmem:[%s4 + $0x148] sm:$0xff]
    %v1609 = vld [vmem:[%s4 + $0x150] sm:$0xff]
    %v1610 = vld [vmem:[%s4 + $0x158] sm:$0xff]
    %v1611 = vld [vmem:[%s4 + $0x160] sm:$0xff]
    %v1612 = vld [vmem:[%s4 + $0x168] sm:$0xff]
    %v1613 = vld [vmem:[%s4 + $0x170] sm:$0xff]
    %v1614 = vld [vmem:[%s4 + $0x178] sm:$0xff]
    %v1615 = vld [vmem:[%s5] sm:$0xff]
    %v1616 = vld [vmem:[%s5 + $0x8] sm:$0xff]
    %v1617 = vld [vmem:[%s5 + $0x10] sm:$0xff]
    %v1618 = vld [vmem:[%s5 + $0x18] sm:$0xff]
    %v1619 = vld [vmem:[%s5 + $0x20] sm:$0xff]
    %v1620 = vld [vmem:[%s5 + $0x28] sm:$0xff]
    %v1621 = vld [vmem:[%s5 + $0x30] sm:$0xff]
    %v1622 = vld [vmem:[%s5 + $0x38] sm:$0xff]
    %v1623 = vld [vmem:[%s5 + $0x40] sm:$0xff]
    %v1624 = vld [vmem:[%s5 + $0x48] sm:$0xff]
    %v1625 = vld [vmem:[%s5 + $0x50] sm:$0xff]
    %v1626 = vld [vmem:[%s5 + $0x58] sm:$0xff]
    %v1627 = vld [vmem:[%s5 + $0x60] sm:$0xff]
    %v1628 = vld [vmem:[%s5 + $0x68] sm:$0xff]
    %v1629 = vld [vmem:[%s5 + $0x70] sm:$0xff]
    %v1630 = vld [vmem:[%s5 + $0x78] sm:$0xff]
    %v1631 = vld [vmem:[%s5 + $0x80] sm:$0xff]
    %v1632 = vld [vmem:[%s5 + $0x88] sm:$0xff]
    %v1633 = vld [vmem:[%s5 + $0x90] sm:$0xff]
    %v1634 = vld [vmem:[%s5 + $0x98] sm:$0xff]
    %v1635 = vld [vmem:[%s5 + $0xa0] sm:$0xff]
    %v1636 = vld [vmem:[%s5 + $0xa8] sm:$0xff]
    %v1637 = vld [vmem:[%s5 + $0xb0] sm:$0xff]
    %v1638 = vld [vmem:[%s5 + $0xb8] sm:$0xff]
    %v1639 = vld [vmem:[%s5 + $0xc0] sm:$0xff]
    %v1640 = vld [vmem:[%s5 + $0xc8] sm:$0xff]
    %v1641 = vld [vmem:[%s5 + $0xd0] sm:$0xff]
    %v1642 = vld [vmem:[%s5 + $0xd8] sm:$0xff]
    %v1643 = vld [vmem:[%s5 + $0xe0] sm:$0xff]
    %v1644 = vld [vmem:[%s5 + $0xe8] sm:$0xff]
    %v1645 = vld [vmem:[%s5 + $0xf0] sm:$0xff]
    %v1646 = vld [vmem:[%s5 + $0xf8] sm:$0xff]
    %v1647 = vld [vmem:[%s5 + $0x100] sm:$0xff]
    %v1648 = vld [vmem:[%s5 + $0x108] sm:$0xff]
    %v1649 = vld [vmem:[%s5 + $0x110] sm:$0xff]
    %v1650 = vld [vmem:[%s5 + $0x118] sm:$0xff]
    %v1651 = vld [vmem:[%s5 + $0x120] sm:$0xff]
    %v1652 = vld [vmem:[%s5 + $0x128] sm:$0xff]
    %v1653 = vld [vmem:[%s5 + $0x130] sm:$0xff]
    %v1654 = vld [vmem:[%s5 + $0x138] sm:$0xff]
    %v1655 = vld [vmem:[%s5 + $0x140] sm:$0xff]
    %v1656 = vld [vmem:[%s5 + $0x148] sm:$0xff]
    %v1657 = vld [vmem:[%s5 + $0x150] sm:$0xff]
    %v1658 = vld [vmem:[%s5 + $0x158] sm:$0xff]
    %v1659 = vld [vmem:[%s5 + $0x160] sm:$0xff]
    %v1660 = vld [vmem:[%s5 + $0x168] sm:$0xff]
    %v1661 = vld [vmem:[%s5 + $0x170] sm:$0xff]
    %v1662 = vld [vmem:[%s5 + $0x178] sm:$0xff]
    %1663 = vmatprep.subr.mxu0 %v1661
    %1664 = vmatpush1.msra.mxu0 %v1660
    %1665 = vmatprep.subr.mxu0 %v1658
    %1666 = vmatpush1.msra.mxu0 %v1657
    %1667 = vmatprep.subr.mxu0 %v1655
    %1668 = vmatpush1.msra.mxu0 %v1654
    %1669 = vmatprep.subr.mxu0 %v1652
    %1670 = vmatpush1.msra.mxu0 %v1651
    %1671 = vmatprep.subr.mxu0 %v1649
    %1672 = vmatpush1.msra.mxu0 %v1648
    %1673 = vmatprep.subr.mxu0 %v1646
    %1674 = vmatpush1.msra.mxu0 %v1645
    %1675 = vmatprep.subr.mxu0 %v1643
    %1676 = vmatpush1.msra.mxu0 %v1642
    %1677 = vmatprep.subr.mxu0 %v1640
    %1678 = vmatpush1.msra.mxu0 %v1639
    %1679 = vmatprep.subr.mxu0 %v1637
    %1680 = vmatpush1.msra.mxu0 %v1636
    %1681 = vmatprep.subr.mxu0 %v1634
    %1682 = vmatpush1.msra.mxu0 %v1633
    %1683 = vmatprep.subr.mxu0 %v1631
    %1684 = vmatpush1.msra.mxu0 %v1630
    %1685 = vmatprep.subr.mxu0 %v1628
    %1686 = vmatpush1.msra.mxu0 %v1627
    %1687 = vmatprep.subr.mxu0 %v1625
    %1688 = vmatpush1.msra.mxu0 %v1624
    %1689 = vmatprep.subr.mxu0 %v1622
    %1690 = vmatpush1.msra.mxu0 %v1621
    %1691 = vmatprep.subr.mxu0 %v1619
    %1692 = vmatpush1.msra.mxu0 %v1618
    %1693 = vmatprep.subr.mxu0 %v1616
    %1694 = vmatpush1.msra.mxu0 %v1615
    %1695 = vmatprep.subr.mxu0 0.0
    %1696 = vmatpush2.msra.mxu0 0.0
    %1697 = vmatprep.subr.mxu0 0.0
    %1698 = vmatpush2.msra.mxu0 0.0
    %1699 = vmatprep.subr.mxu0 0.0
    %1700 = vmatpush2.msra.mxu0 0.0
    %1701 = vmatprep.subr.mxu0 0.0
    %1702 = vmatpush2.msra.mxu0 0.0
    %1703 = vmatprep.subr.mxu0 0.0
    %1704 = vmatpush2.msra.mxu0 0.0
    %1705 = vmatprep.subr.mxu0 0.0
    %1706 = vmatpush2.msra.mxu0 0.0
    %1707 = vmatprep.subr.mxu0 0.0
    %1708 = vmatpush2.msra.mxu0 0.0
    %1709 = vmatprep.subr.mxu0 0.0
    %1710 = vmatpush2.msra.mxu0 0.0
    %1711 = vmatprep.subr.mxu0 0.0
    %1712 = vmatpush2.msra.mxu0 0.0
    %1713 = vmatprep.subr.mxu0 0.0
    %1714 = vmatpush2.msra.mxu0 0.0
    %1715 = vmatprep.subr.mxu0 0.0
    %1716 = vmatpush2.msra.mxu0 0.0
    %1717 = vmatprep.subr.mxu0 0.0
    %1718 = vmatpush2.msra.mxu0 0.0
    %1719 = vmatprep.subr.mxu0 0.0
    %1720 = vmatpush2.msra.mxu0 0.0
    %1721 = vmatprep.subr.mxu0 0.0
    %1722 = vmatpush2.msra.mxu0 0.0
    %1723 = vmatprep.subr.mxu0 0.0
    %1724 = vmatpush2.msra.mxu0 0.0
    %1725 = vmatprep.subr.mxu0 0.0
    %1726 = vmatpush2.msra.mxu0 0.0
    %1727 = vmatprep.mubr.f32.mxu0 0.0
    %1728 = vmatmul.mubr.f32.gmra.mxu0 %v1564
    %v1729 = vpop.f32.mrf.mxu0
    %v1730 = vadd.f32 0.0, %v1729
    %v1731 = vpop.f32.mrf.mxu0
    %v1732 = vadd.f32 0.0, %v1731
    %1733 = vdwg.mxu0
    %1734 = vmatprep.subr.mxu0 0.0
    %1735 = vmatpush1.msra.mxu0 %v1662
    %1736 = vmatprep.subr.mxu0 0.0
    %1737 = vmatpush1.msra.mxu0 %v1659
    %1738 = vmatprep.subr.mxu0 0.0
    %1739 = vmatpush1.msra.mxu0 %v1656
    %1740 = vmatprep.subr.mxu0 0.0
    %1741 = vmatpush1.msra.mxu0 %v1653
    %1742 = vmatprep.subr.mxu0 0.0
    %1743 = vmatpush1.msra.mxu0 %v1650
    %1744 = vmatprep.subr.mxu0 0.0
    %1745 = vmatpush1.msra.mxu0 %v1647
    %1746 = vmatprep.subr.mxu0 0.0
    %1747 = vmatpush1.msra.mxu0 %v1644
    %1748 = vmatprep.subr.mxu0 0.0
    %1749 = vmatpush1.msra.mxu0 %v1641
    %1750 = vmatprep.subr.mxu0 0.0
    %1751 = vmatpush1.msra.mxu0 %v1638
    %1752 = vmatprep.subr.mxu0 0.0
    %1753 = vmatpush1.msra.mxu0 %v1635
    %1754 = vmatprep.subr.mxu0 0.0
    %1755 = vmatpush1.msra.mxu0 %v1632
    %1756 = vmatprep.subr.mxu0 0.0
    %1757 = vmatpush1.msra.mxu0 %v1629
    %1758 = vmatprep.subr.mxu0 0.0
    %1759 = vmatpush1.msra.mxu0 %v1626
    %1760 = vmatprep.subr.mxu0 0.0
    %1761 = vmatpush1.msra.mxu0 %v1623
    %1762 = vmatprep.subr.mxu0 0.0
    %1763 = vmatpush1.msra.mxu0 %v1620
    %1764 = vmatprep.subr.mxu0 0.0
    %1765 = vmatpush1.msra.mxu0 %v1617
    %1766 = vmatprep.subr.mxu0 0.0
    %1767 = vmatpush2.msra.mxu0 0.0
    %1768 = vmatprep.subr.mxu0 0.0
    %1769 = vmatpush2.msra.mxu0 0.0
    %1770 = vmatprep.subr.mxu0 0.0
    %1771 = vmatpush2.msra.mxu0 0.0
    %1772 = vmatprep.subr.mxu0 0.0
    %1773 = vmatpush2.msra.mxu0 0.0
    %1774 = vmatprep.subr.mxu0 0.0
    %1775 = vmatpush2.msra.mxu0 0.0
    %1776 = vmatprep.subr.mxu0 0.0
    %1777 = vmatpush2.msra.mxu0 0.0
    %1778 = vmatprep.subr.mxu0 0.0
    %1779 = vmatpush2.msra.mxu0 0.0
    %1780 = vmatprep.subr.mxu0 0.0
    %1781 = vmatpush2.msra.mxu0 0.0
    %1782 = vmatprep.subr.mxu0 0.0
    %1783 = vmatpush2.msra.mxu0 0.0
    %1784 = vmatprep.subr.mxu0 0.0
    %1785 = vmatpush2.msra.mxu0 0.0
    %1786 = vmatprep.subr.mxu0 0.0
    %1787 = vmatpush2.msra.mxu0 0.0
    %1788 = vmatprep.subr.mxu0 0.0
    %1789 = vmatpush2.msra.mxu0 0.0
    %1790 = vmatprep.subr.mxu0 0.0
    %1791 = vmatpush2.msra.mxu0 0.0
    %1792 = vmatprep.subr.mxu0 0.0
    %1793 = vmatpush2.msra.mxu0 0.0
    %1794 = vmatprep.subr.mxu0 0.0
    %1795 = vmatpush2.msra.mxu0 0.0
    %1796 = vmatprep.subr.mxu0 0.0
    %1797 = vmatpush2.msra.mxu0 0.0
    %1798 = vmatprep.mubr.f32.mxu0 0.0
    %1799 = vmatmul.mubr.f32.gmra.mxu0 %v1564
    %v1800 = vpop.f32.mrf.mxu0
    %v1801 = vadd.f32 0.0, %v1800
    %v1802 = vpop.f32.mrf.mxu0
    %1803 = vdwg.mxu0
    %1804 = vmatprep.subr.mxu0 %v1613
    %1805 = vmatpush1.msra.mxu0 %v1612
    %1806 = vmatprep.subr.mxu0 %v1610
    %1807 = vmatpush1.msra.mxu0 %v1609
    %1808 = vmatprep.subr.mxu0 %v1607
    %1809 = vmatpush1.msra.mxu0 %v1606
    %1810 = vmatprep.subr.mxu0 %v1604
    %1811 = vmatpush1.msra.mxu0 %v1603
    %1812 = vmatprep.subr.mxu0 %v1601
    %1813 = vmatpush1.msra.mxu0 %v1600
    %1814 = vmatprep.subr.mxu0 %v1598
    %1815 = vmatpush1.msra.mxu0 %v1597
    %1816 = vmatprep.subr.mxu0 %v1595
    %1817 = vmatpush1.msra.mxu0 %v1594
    %1818 = vmatprep.subr.mxu0 %v1592
    %1819 = vmatpush1.msra.mxu0 %v1591
    %1820 = vmatprep.subr.mxu0 %v1589
    %1821 = vmatpush1.msra.mxu0 %v1588
    %1822 = vmatprep.subr.mxu0 %v1586
    %1823 = vmatpush1.msra.mxu0 %v1585
    %1824 = vmatprep.subr.mxu0 %v1583
    %1825 = vmatpush1.msra.mxu0 %v1582
    %1826 = vmatprep.subr.mxu0 %v1580
    %1827 = vmatpush1.msra.mxu0 %v1579
    %1828 = vmatprep.subr.mxu0 %v1577
    %1829 = vmatpush1.msra.mxu0 %v1576
    %1830 = vmatprep.subr.mxu0 %v1574
    %1831 = vmatpush1.msra.mxu0 %v1573
    %1832 = vmatprep.subr.mxu0 %v1571
    %1833 = vmatpush1.msra.mxu0 %v1570
    %1834 = vmatprep.subr.mxu0 %v1568
    %1835 = vmatpush1.msra.mxu0 %v1567
    %1836 = vmatprep.subr.mxu0 0.0
    %1837 = vmatpush2.msra.mxu0 0.0
    %1838 = vmatprep.subr.mxu0 0.0
    %1839 = vmatpush2.msra.mxu0 0.0
    %1840 = vmatprep.subr.mxu0 0.0
    %1841 = vmatpush2.msra.mxu0 0.0
    %1842 = vmatprep.subr.mxu0 0.0
    %1843 = vmatpush2.msra.mxu0 0.0
    %1844 = vmatprep.subr.mxu0 0.0
    %1845 = vmatpush2.msra.mxu0 0.0
    %1846 = vmatprep.subr.mxu0 0.0
    %1847 = vmatpush2.msra.mxu0 0.0
    %1848 = vmatprep.subr.mxu0 0.0
    %1849 = vmatpush2.msra.mxu0 0.0
    %1850 = vmatprep.subr.mxu0 0.0
    %1851 = vmatpush2.msra.mxu0 0.0
    %1852 = vmatprep.subr.mxu0 0.0
    %1853 = vmatpush2.msra.mxu0 0.0
    %1854 = vmatprep.subr.mxu0 0.0
    %1855 = vmatpush2.msra.mxu0 0.0
    %1856 = vmatprep.subr.mxu0 0.0
    %1857 = vmatpush2.msra.mxu0 0.0
    %1858 = vmatprep.subr.mxu0 0.0
    %1859 = vmatpush2.msra.mxu0 0.0
    %1860 = vmatprep.subr.mxu0 0.0
    %1861 = vmatpush2.msra.mxu0 0.0
    %1862 = vmatprep.subr.mxu0 0.0
    %1863 = vmatpush2.msra.mxu0 0.0
    %1864 = vmatprep.subr.mxu0 0.0
    %1865 = vmatpush2.msra.mxu0 0.0
    %1866 = vmatprep.subr.mxu0 0.0
    %1867 = vmatpush2.msra.mxu0 0.0
    %1868 = vmatprep.mubr.f32.mxu0 0.0
    %1869 = vmatmul.mubr.f32.gmra.mxu0 %v1560
    %v1870 = vpop.f32.mrf.mxu0
    %v1871 = vadd.f32 %v1730, %v1870
    %v1872 = vpop.f32.mrf.mxu0
    %v1873 = vadd.f32 %v1732, %v1872
    %1874 = vdwg.mxu0
    %1875 = vmatprep.subr.mxu0 0.0
    %1876 = vmatpush1.msra.mxu0 %v1614
    %1877 = vmatprep.subr.mxu0 0.0
    %1878 = vmatpush1.msra.mxu0 %v1611
    %1879 = vmatprep.subr.mxu0 0.0
    %1880 = vmatpush1.msra.mxu0 %v1608
    %1881 = vmatprep.subr.mxu0 0.0
    %1882 = vmatpush1.msra.mxu0 %v1605
    %1883 = vmatprep.subr.mxu0 0.0
    %1884 = vmatpush1.msra.mxu0 %v1602
    %1885 = vmatprep.subr.mxu0 0.0
    %1886 = vmatpush1.msra.mxu0 %v1599
    %1887 = vmatprep.subr.mxu0 0.0
    %1888 = vmatpush1.msra.mxu0 %v1596
    %1889 = vmatprep.subr.mxu0 0.0
    %1890 = vmatpush1.msra.mxu0 %v1593
    %1891 = vmatprep.subr.mxu0 0.0
    %1892 = vmatpush1.msra.mxu0 %v1590
    %1893 = vmatprep.subr.mxu0 0.0
    %1894 = vmatpush1.msra.mxu0 %v1587
    %1895 = vmatprep.subr.mxu0 0.0
    %1896 = vmatpush1.msra.mxu0 %v1584
    %1897 = vmatprep.subr.mxu0 0.0
    %1898 = vmatpush1.msra.mxu0 %v1581
    %1899 = vmatprep.subr.mxu0 0.0
    %1900 = vmatpush1.msra.mxu0 %v1578
    %1901 = vmatprep.subr.mxu0 0.0
    %1902 = vmatpush1.msra.mxu0 %v1575
    %1903 = vmatprep.subr.mxu0 0.0
    %1904 = vmatpush1.msra.mxu0 %v1572
    %1905 = vmatprep.subr.mxu0 0.0
    %1906 = vmatpush1.msra.mxu0 %v1569
    %1907 = vmatprep.subr.mxu0 0.0
    %1908 = vmatpush2.msra.mxu0 0.0
    %1909 = vmatprep.subr.mxu0 0.0
    %1910 = vmatpush2.msra.mxu0 0.0
    %1911 = vmatprep.subr.mxu0 0.0
    %1912 = vmatpush2.msra.mxu0 0.0
    %1913 = vmatprep.subr.mxu0 0.0
    %1914 = vmatpush2.msra.mxu0 0.0
    %1915 = vmatprep.subr.mxu0 0.0
    %1916 = vmatpush2.msra.mxu0 0.0
    %1917 = vmatprep.subr.mxu0 0.0
    %1918 = vmatpush2.msra.mxu0 0.0
    %1919 = vmatprep.subr.mxu0 0.0
    %1920 = vmatpush2.msra.mxu0 0.0
    %1921 = vmatprep.subr.mxu0 0.0
    %1922 = vmatpush2.msra.mxu0 0.0
    %1923 = vmatprep.subr.mxu0 0.0
    %1924 = vmatpush2.msra.mxu0 0.0
    %1925 = vmatprep.subr.mxu0 0.0
    %1926 = vmatpush2.msra.mxu0 0.0
    %1927 = vmatprep.subr.mxu0 0.0
    %1928 = vmatpush2.msra.mxu0 0.0
    %1929 = vmatprep.subr.mxu0 0.0
    %1930 = vmatpush2.msra.mxu0 0.0
    %1931 = vmatprep.subr.mxu0 0.0
    %1932 = vmatpush2.msra.mxu0 0.0
    %1933 = vmatprep.subr.mxu0 0.0
    %1934 = vmatpush2.msra.mxu0 0.0
    %1935 = vmatprep.subr.mxu0 0.0
    %1936 = vmatpush2.msra.mxu0 0.0
    %1937 = vmatprep.subr.mxu0 0.0
    %1938 = vmatpush2.msra.mxu0 0.0
    %1939 = vmatprep.mubr.f32.mxu0 0.0
    %1940 = vmatmul.mubr.f32.gmra.mxu0 %v1560
    %v1941 = vpop.f32.mrf.mxu0
    %v1942 = vadd.f32 %v1801, %v1941
    %v1943 = vpop.f32.mrf.mxu0
    %1944 = vdwg.mxu0
    %v1945 = vld [vmem:[%s6] sm:$0x7]
    %v1947 = vlaneseq
    %v1948 = vshrl.u32 %v1947, 7
    %v1949 = vsub.s32 0, %v1948
    %v1950 = vrot.slane %v1945, %v1949
    %v1951 = vlaneseq
    %v1952 = vshrl.u32 %v1951, 7
    %v1953 = vsub.s32 1, %v1952
    %v1954 = vrot.slane %v1945, %v1953
    %v1955 = vlaneseq
    %v1956 = vshrl.u32 %v1955, 7
    %v1957 = vsub.s32 2, %v1956
    %v1958 = vrot.slane %v1945, %v1957
    %v1962 = vadd.f32 %v1871, %v1950
    %v1963 = vadd.f32 %v1873, %v1954
    %v1964 = vadd.f32 %v1942, %v1958
    %v1965 = vxor.u32 %v1962, 2147483648
    %v1966 = vmul.f32 %v1965, 1.442695
    %v1967 = vpow.pop %v1966
    %v1968 = vadd.f32 %v1967, 1.0
    %v1969 = vrcp.pop %v1968
    %v1970 = vmul.f32 1.0, %v1969
    %v1971 = vxor.u32 %v1963, 2147483648
    %v1972 = vmul.f32 %v1971, 1.442695
    %v1973 = vpow.pop %v1972
    %v1974 = vadd.f32 %v1973, 1.0
    %v1975 = vrcp.pop %v1974
    %v1976 = vmul.f32 1.0, %v1975
    %v1977 = vxor.u32 %v1964, 2147483648
    %v1978 = vmul.f32 %v1977, 1.442695
    %v1979 = vpow.pop %v1978
    %v1980 = vadd.f32 %v1979, 1.0
    %v1981 = vrcp.pop %v1980
    %v1982 = vmul.f32 1.0, %v1981
    %v1983 = vmul.f32 %v1982, %v1562
    %v1984 = vmul.f32 %v1970, %v1566
    %v1985 = vadd.f32 %v1983, %v1984
    %v1986 = vtanh.pop %v1985
    %v1987 = vmul.f32 %v1976, %v1986
    %s1988 = scalar_lea.vmem [#allocation2], 4
    %1989 = vst [vmem:[%s1988] sm:$0x1] %v1987
    %s1990 = scalar_lea.vmem [#allocation3], 4
    %1991 = vst [vmem:[%s1990] sm:$0x1] %v1985
    %s1992 = sld [smem:[#allocation5 + $0x4]]
    %s1993 = sld [smem:[#allocation5 + $0x84]]
    %s1994 = scalar_lea.vmem [#allocation2], %s1992
    %v1995 = vld [vmem:[%s1994] sm:$0x1]
    %s1996 = scalar_lea.vmem [#allocation3], %s1992
    %v1997 = vld [vmem:[%s1996] sm:$0x1]
    %s1998 = scalar_lea.vmem [#allocation2], %s1993
    %v1999 = vld [vmem:[%s1998] sm:$0x1]
    %s2000 = scalar_lea.vmem [#allocation3], %s1993
    %v2001 = vld [vmem:[%s2000] sm:$0x1]
    %v2002 = vld [vmem:[%s4] sm:$0xff]
    %v2003 = vld [vmem:[%s4 + $0x8] sm:$0xff]
    %v2004 = vld [vmem:[%s4 + $0x10] sm:$0xff]
    %v2005 = vld [vmem:[%s4 + $0x18] sm:$0xff]
    %v2006 = vld [vmem:[%s4 + $0x20] sm:$0xff]
    %v2007 = vld [vmem:[%s4 + $0x28] sm:$0xff]
    %v2008 = vld [vmem:[%s4 + $0x30] sm:$0xff]
    %v2009 = vld [vmem:[%s4 + $0x38] sm:$0xff]
    %v2010 = vld [vmem:[%s4 + $0x40] sm:$0xff]
    %v2011 = vld [vmem:[%s4 + $0x48] sm:$0xff]
    %v2012 = vld [vmem:[%s4 + $0x50] sm:$0xff]
    %v2013 = vld [vmem:[%s4 + $0x58] sm:$0xff]
    %v2014 = vld [vmem:[%s4 + $0x60] sm:$0xff]
    %v2015 = vld [vmem:[%s4 + $0x68] sm:$0xff]
    %v2016 = vld [vmem:[%s4 + $0x70] sm:$0xff]
    %v2017 = vld [vmem:[%s4 + $0x78] sm:$0xff]
    %v2018 = vld [vmem:[%s4 + $0x80] sm:$0xff]
    %v2019 = vld [vmem:[%s4 + $0x88] sm:$0xff]
    %v2020 = vld [vmem:[%s4 + $0x90] sm:$0xff]
    %v2021 = vld [vmem:[%s4 + $0x98] sm:$0xff]
    %v2022 = vld [vmem:[%s4 + $0xa0] sm:$0xff]
    %v2023 = vld [vmem:[%s4 + $0xa8] sm:$0xff]
    %v2024 = vld [vmem:[%s4 + $0xb0] sm:$0xff]
    %v2025 = vld [vmem:[%s4 + $0xb8] sm:$0xff]
    %v2026 = vld [vmem:[%s4 + $0xc0] sm:$0xff]
    %v2027 = vld [vmem:[%s4 + $0xc8] sm:$0xff]
    %v2028 = vld [vmem:[%s4 + $0xd0] sm:$0xff]
    %v2029 = vld [vmem:[%s4 + $0xd8] sm:$0xff]
    %v2030 = vld [vmem:[%s4 + $0xe0] sm:$0xff]
    %v2031 = vld [vmem:[%s4 + $0xe8] sm:$0xff]
    %v2032 = vld [vmem:[%s4 + $0xf0] sm:$0xff]
    %v2033 = vld [vmem:[%s4 + $0xf8] sm:$0xff]
    %v2034 = vld [vmem:[%s4 + $0x100] sm:$0xff]
    %v2035 = vld [vmem:[%s4 + $0x108] sm:$0xff]
    %v2036 = vld [vmem:[%s4 + $0x110] sm:$0xff]
    %v2037 = vld [vmem:[%s4 + $0x118] sm:$0xff]
    %v2038 = vld [vmem:[%s4 + $0x120] sm:$0xff]
    %v2039 = vld [vmem:[%s4 + $0x128] sm:$0xff]
    %v2040 = vld [vmem:[%s4 + $0x130] sm:$0xff]
    %v2041 = vld [vmem:[%s4 + $0x138] sm:$0xff]
    %v2042 = vld [vmem:[%s4 + $0x140] sm:$0xff]
    %v2043 = vld [vmem:[%s4 + $0x148] sm:$0xff]
    %v2044 = vld [vmem:[%s4 + $0x150] sm:$0xff]
    %v2045 = vld [vmem:[%s4 + $0x158] sm:$0xff]
    %v2046 = vld [vmem:[%s4 + $0x160] sm:$0xff]
    %v2047 = vld [vmem:[%s4 + $0x168] sm:$0xff]
    %v2048 = vld [vmem:[%s4 + $0x170] sm:$0xff]
    %v2049 = vld [vmem:[%s4 + $0x178] sm:$0xff]
    %v2050 = vld [vmem:[%s5] sm:$0xff]
    %v2051 = vld [vmem:[%s5 + $0x8] sm:$0xff]
    %v2052 = vld [vmem:[%s5 + $0x10] sm:$0xff]
    %v2053 = vld [vmem:[%s5 + $0x18] sm:$0xff]
    %v2054 = vld [vmem:[%s5 + $0x20] sm:$0xff]
    %v2055 = vld [vmem:[%s5 + $0x28] sm:$0xff]
    %v2056 = vld [vmem:[%s5 + $0x30] sm:$0xff]
    %v2057 = vld [vmem:[%s5 + $0x38] sm:$0xff]
    %v2058 = vld [vmem:[%s5 + $0x40] sm:$0xff]
    %v2059 = vld [vmem:[%s5 + $0x48] sm:$0xff]
    %v2060 = vld [vmem:[%s5 + $0x50] sm:$0xff]
    %v2061 = vld [vmem:[%s5 + $0x58] sm:$0xff]
    %v2062 = vld [vmem:[%s5 + $0x60] sm:$0xff]
    %v2063 = vld [vmem:[%s5 + $0x68] sm:$0xff]
    %v2064 = vld [vmem:[%s5 + $0x70] sm:$0xff]
    %v2065 = vld [vmem:[%s5 + $0x78] sm:$0xff]
    %v2066 = vld [vmem:[%s5 + $0x80] sm:$0xff]
    %v2067 = vld [vmem:[%s5 + $0x88] sm:$0xff]
    %v2068 = vld [vmem:[%s5 + $0x90] sm:$0xff]
    %v2069 = vld [vmem:[%s5 + $0x98] sm:$0xff]
    %v2070 = vld [vmem:[%s5 + $0xa0] sm:$0xff]
    %v2071 = vld [vmem:[%s5 + $0xa8] sm:$0xff]
    %v2072 = vld [vmem:[%s5 + $0xb0] sm:$0xff]
    %v2073 = vld [vmem:[%s5 + $0xb8] sm:$0xff]
    %v2074 = vld [vmem:[%s5 + $0xc0] sm:$0xff]
    %v2075 = vld [vmem:[%s5 + $0xc8] sm:$0xff]
    %v2076 = vld [vmem:[%s5 + $0xd0] sm:$0xff]
    %v2077 = vld [vmem:[%s5 + $0xd8] sm:$0xff]
    %v2078 = vld [vmem:[%s5 + $0xe0] sm:$0xff]
    %v2079 = vld [vmem:[%s5 + $0xe8] sm:$0xff]
    %v2080 = vld [vmem:[%s5 + $0xf0] sm:$0xff]
    %v2081 = vld [vmem:[%s5 + $0xf8] sm:$0xff]
    %v2082 = vld [vmem:[%s5 + $0x100] sm:$0xff]
    %v2083 = vld [vmem:[%s5 + $0x108] sm:$0xff]
    %v2084 = vld [vmem:[%s5 + $0x110] sm:$0xff]
    %v2085 = vld [vmem:[%s5 + $0x118] sm:$0xff]
    %v2086 = vld [vmem:[%s5 + $0x120] sm:$0xff]
    %v2087 = vld [vmem:[%s5 + $0x128] sm:$0xff]
    %v2088 = vld [vmem:[%s5 + $0x130] sm:$0xff]
    %v2089 = vld [vmem:[%s5 + $0x138] sm:$0xff]
    %v2090 = vld [vmem:[%s5 + $0x140] sm:$0xff]
    %v2091 = vld [vmem:[%s5 + $0x148] sm:$0xff]
    %v2092 = vld [vmem:[%s5 + $0x150] sm:$0xff]
    %v2093 = vld [vmem:[%s5 + $0x158] sm:$0xff]
    %v2094 = vld [vmem:[%s5 + $0x160] sm:$0xff]
    %v2095 = vld [vmem:[%s5 + $0x168] sm:$0xff]
    %v2096 = vld [vmem:[%s5 + $0x170] sm:$0xff]
    %v2097 = vld [vmem:[%s5 + $0x178] sm:$0xff]
    %2098 = vmatprep.subr.mxu0 %v2096
    %2099 = vmatpush1.msra.mxu0 %v2095
    %2100 = vmatprep.subr.mxu0 %v2093
    %2101 = vmatpush1.msra.mxu0 %v2092
    %2102 = vmatprep.subr.mxu0 %v2090
    %2103 = vmatpush1.msra.mxu0 %v2089
    %2104 = vmatprep.subr.mxu0 %v2087
    %2105 = vmatpush1.msra.mxu0 %v2086
    %2106 = vmatprep.subr.mxu0 %v2084
    %2107 = vmatpush1.msra.mxu0 %v2083
    %2108 = vmatprep.subr.mxu0 %v2081
    %2109 = vmatpush1.msra.mxu0 %v2080
    %2110 = vmatprep.subr.mxu0 %v2078
    %2111 = vmatpush1.msra.mxu0 %v2077
    %2112 = vmatprep.subr.mxu0 %v2075
    %2113 = vmatpush1.msra.mxu0 %v2074
    %2114 = vmatprep.subr.mxu0 %v2072
    %2115 = vmatpush1.msra.mxu0 %v2071
    %2116 = vmatprep.subr.mxu0 %v2069
    %2117 = vmatpush1.msra.mxu0 %v2068
    %2118 = vmatprep.subr.mxu0 %v2066
    %2119 = vmatpush1.msra.mxu0 %v2065
    %2120 = vmatprep.subr.mxu0 %v2063
    %2121 = vmatpush1.msra.mxu0 %v2062
    %2122 = vmatprep.subr.mxu0 %v2060
    %2123 = vmatpush1.msra.mxu0 %v2059
    %2124 = vmatprep.subr.mxu0 %v2057
    %2125 = vmatpush1.msra.mxu0 %v2056
    %2126 = vmatprep.subr.mxu0 %v2054
    %2127 = vmatpush1.msra.mxu0 %v2053
    %2128 = vmatprep.subr.mxu0 %v2051
    %2129 = vmatpush1.msra.mxu0 %v2050
    %2130 = vmatprep.subr.mxu0 0.0
    %2131 = vmatpush2.msra.mxu0 0.0
    %2132 = vmatprep.subr.mxu0 0.0
    %2133 = vmatpush2.msra.mxu0 0.0
    %2134 = vmatprep.subr.mxu0 0.0
    %2135 = vmatpush2.msra.mxu0 0.0
    %2136 = vmatprep.subr.mxu0 0.0
    %2137 = vmatpush2.msra.mxu0 0.0
    %2138 = vmatprep.subr.mxu0 0.0
    %2139 = vmatpush2.msra.mxu0 0.0
    %2140 = vmatprep.subr.mxu0 0.0
    %2141 = vmatpush2.msra.mxu0 0.0
    %2142 = vmatprep.subr.mxu0 0.0
    %2143 = vmatpush2.msra.mxu0 0.0
    %2144 = vmatprep.subr.mxu0 0.0
    %2145 = vmatpush2.msra.mxu0 0.0
    %2146 = vmatprep.subr.mxu0 0.0
    %2147 = vmatpush2.msra.mxu0 0.0
    %2148 = vmatprep.subr.mxu0 0.0
    %2149 = vmatpush2.msra.mxu0 0.0
    %2150 = vmatprep.subr.mxu0 0.0
    %2151 = vmatpush2.msra.mxu0 0.0
    %2152 = vmatprep.subr.mxu0 0.0
    %2153 = vmatpush2.msra.mxu0 0.0
    %2154 = vmatprep.subr.mxu0 0.0
    %2155 = vmatpush2.msra.mxu0 0.0
    %2156 = vmatprep.subr.mxu0 0.0
    %2157 = vmatpush2.msra.mxu0 0.0
    %2158 = vmatprep.subr.mxu0 0.0
    %2159 = vmatpush2.msra.mxu0 0.0
    %2160 = vmatprep.subr.mxu0 0.0
    %2161 = vmatpush2.msra.mxu0 0.0
    %2162 = vmatprep.mubr.f32.mxu0 0.0
    %2163 = vmatmul.mubr.f32.gmra.mxu0 %v1999
    %v2164 = vpop.f32.mrf.mxu0
    %v2165 = vadd.f32 0.0, %v2164
    %v2166 = vpop.f32.mrf.mxu0
    %v2167 = vadd.f32 0.0, %v2166
    %2168 = vdwg.mxu0
    %2169 = vmatprep.subr.mxu0 0.0
    %2170 = vmatpush1.msra.mxu0 %v2097
    %2171 = vmatprep.subr.mxu0 0.0
    %2172 = vmatpush1.msra.mxu0 %v2094
    %2173 = vmatprep.subr.mxu0 0.0
    %2174 = vmatpush1.msra.mxu0 %v2091
    %2175 = vmatprep.subr.mxu0 0.0
    %2176 = vmatpush1.msra.mxu0 %v2088
    %2177 = vmatprep.subr.mxu0 0.0
    %2178 = vmatpush1.msra.mxu0 %v2085
    %2179 = vmatprep.subr.mxu0 0.0
    %2180 = vmatpush1.msra.mxu0 %v2082
    %2181 = vmatprep.subr.mxu0 0.0
    %2182 = vmatpush1.msra.mxu0 %v2079
    %2183 = vmatprep.subr.mxu0 0.0
    %2184 = vmatpush1.msra.mxu0 %v2076
    %2185 = vmatprep.subr.mxu0 0.0
    %2186 = vmatpush1.msra.mxu0 %v2073
    %2187 = vmatprep.subr.mxu0 0.0
    %2188 = vmatpush1.msra.mxu0 %v2070
    %2189 = vmatprep.subr.mxu0 0.0
    %2190 = vmatpush1.msra.mxu0 %v2067
    %2191 = vmatprep.subr.mxu0 0.0
    %2192 = vmatpush1.msra.mxu0 %v2064
    %2193 = vmatprep.subr.mxu0 0.0
    %2194 = vmatpush1.msra.mxu0 %v2061
    %2195 = vmatprep.subr.mxu0 0.0
    %2196 = vmatpush1.msra.mxu0 %v2058
    %2197 = vmatprep.subr.mxu0 0.0
    %2198 = vmatpush1.msra.mxu0 %v2055
    %2199 = vmatprep.subr.mxu0 0.0
    %2200 = vmatpush1.msra.mxu0 %v2052
    %2201 = vmatprep.subr.mxu0 0.0
    %2202 = vmatpush2.msra.mxu0 0.0
    %2203 = vmatprep.subr.mxu0 0.0
    %2204 = vmatpush2.msra.mxu0 0.0
    %2205 = vmatprep.subr.mxu0 0.0
    %2206 = vmatpush2.msra.mxu0 0.0
    %2207 = vmatprep.subr.mxu0 0.0
    %2208 = vmatpush2.msra.mxu0 0.0
    %2209 = vmatprep.subr.mxu0 0.0
    %2210 = vmatpush2.msra.mxu0 0.0
    %2211 = vmatprep.subr.mxu0 0.0
    %2212 = vmatpush2.msra.mxu0 0.0
    %2213 = vmatprep.subr.mxu0 0.0
    %2214 = vmatpush2.msra.mxu0 0.0
    %2215 = vmatprep.subr.mxu0 0.0
    %2216 = vmatpush2.msra.mxu0 0.0
    %2217 = vmatprep.subr.mxu0 0.0
    %2218 = vmatpush2.msra.mxu0 0.0
    %2219 = vmatprep.subr.mxu0 0.0
    %2220 = vmatpush2.msra.mxu0 0.0
    %2221 = vmatprep.subr.mxu0 0.0
    %2222 = vmatpush2.msra.mxu0 0.0
    %2223 = vmatprep.subr.mxu0 0.0
    %2224 = vmatpush2.msra.mxu0 0.0
    %2225 = vmatprep.subr.mxu0 0.0
    %2226 = vmatpush2.msra.mxu0 0.0
    %2227 = vmatprep.subr.mxu0 0.0
    %2228 = vmatpush2.msra.mxu0 0.0
    %2229 = vmatprep.subr.mxu0 0.0
    %2230 = vmatpush2.msra.mxu0 0.0
    %2231 = vmatprep.subr.mxu0 0.0
    %2232 = vmatpush2.msra.mxu0 0.0
    %2233 = vmatprep.mubr.f32.mxu0 0.0
    %2234 = vmatmul.mubr.f32.gmra.mxu0 %v1999
    %v2235 = vpop.f32.mrf.mxu0
    %v2236 = vadd.f32 0.0, %v2235
    %v2237 = vpop.f32.mrf.mxu0
    %2238 = vdwg.mxu0
    %2239 = vmatprep.subr.mxu0 %v2048
    %2240 = vmatpush1.msra.mxu0 %v2047
    %2241 = vmatprep.subr.mxu0 %v2045
    %2242 = vmatpush1.msra.mxu0 %v2044
    %2243 = vmatprep.subr.mxu0 %v2042
    %2244 = vmatpush1.msra.mxu0 %v2041
    %2245 = vmatprep.subr.mxu0 %v2039
    %2246 = vmatpush1.msra.mxu0 %v2038
    %2247 = vmatprep.subr.mxu0 %v2036
    %2248 = vmatpush1.msra.mxu0 %v2035
    %2249 = vmatprep.subr.mxu0 %v2033
    %2250 = vmatpush1.msra.mxu0 %v2032
    %2251 = vmatprep.subr.mxu0 %v2030
    %2252 = vmatpush1.msra.mxu0 %v2029
    %2253 = vmatprep.subr.mxu0 %v2027
    %2254 = vmatpush1.msra.mxu0 %v2026
    %2255 = vmatprep.subr.mxu0 %v2024
    %2256 = vmatpush1.msra.mxu0 %v2023
    %2257 = vmatprep.subr.mxu0 %v2021
    %2258 = vmatpush1.msra.mxu0 %v2020
    %2259 = vmatprep.subr.mxu0 %v2018
    %2260 = vmatpush1.msra.mxu0 %v2017
    %2261 = vmatprep.subr.mxu0 %v2015
    %2262 = vmatpush1.msra.mxu0 %v2014
    %2263 = vmatprep.subr.mxu0 %v2012
    %2264 = vmatpush1.msra.mxu0 %v2011
    %2265 = vmatprep.subr.mxu0 %v2009
    %2266 = vmatpush1.msra.mxu0 %v2008
    %2267 = vmatprep.subr.mxu0 %v2006
    %2268 = vmatpush1.msra.mxu0 %v2005
    %2269 = vmatprep.subr.mxu0 %v2003
    %2270 = vmatpush1.msra.mxu0 %v2002
    %2271 = vmatprep.subr.mxu0 0.0
    %2272 = vmatpush2.msra.mxu0 0.0
    %2273 = vmatprep.subr.mxu0 0.0
    %2274 = vmatpush2.msra.mxu0 0.0
    %2275 = vmatprep.subr.mxu0 0.0
    %2276 = vmatpush2.msra.mxu0 0.0
    %2277 = vmatprep.subr.mxu0 0.0
    %2278 = vmatpush2.msra.mxu0 0.0
    %2279 = vmatprep.subr.mxu0 0.0
    %2280 = vmatpush2.msra.mxu0 0.0
    %2281 = vmatprep.subr.mxu0 0.0
    %2282 = vmatpush2.msra.mxu0 0.0
    %2283 = vmatprep.subr.mxu0 0.0
    %2284 = vmatpush2.msra.mxu0 0.0
    %2285 = vmatprep.subr.mxu0 0.0
    %2286 = vmatpush2.msra.mxu0 0.0
    %2287 = vmatprep.subr.mxu0 0.0
    %2288 = vmatpush2.msra.mxu0 0.0
    %2289 = vmatprep.subr.mxu0 0.0
    %2290 = vmatpush2.msra.mxu0 0.0
    %2291 = vmatprep.subr.mxu0 0.0
    %2292 = vmatpush2.msra.mxu0 0.0
    %2293 = vmatprep.subr.mxu0 0.0
    %2294 = vmatpush2.msra.mxu0 0.0
    %2295 = vmatprep.subr.mxu0 0.0
    %2296 = vmatpush2.msra.mxu0 0.0
    %2297 = vmatprep.subr.mxu0 0.0
    %2298 = vmatpush2.msra.mxu0 0.0
    %2299 = vmatprep.subr.mxu0 0.0
    %2300 = vmatpush2.msra.mxu0 0.0
    %2301 = vmatprep.subr.mxu0 0.0
    %2302 = vmatpush2.msra.mxu0 0.0
    %2303 = vmatprep.mubr.f32.mxu0 0.0
    %2304 = vmatmul.mubr.f32.gmra.mxu0 %v1995
    %v2305 = vpop.f32.mrf.mxu0
    %v2306 = vadd.f32 %v2165, %v2305
    %v2307 = vpop.f32.mrf.mxu0
    %v2308 = vadd.f32 %v2167, %v2307
    %2309 = vdwg.mxu0
    %2310 = vmatprep.subr.mxu0 0.0
    %2311 = vmatpush1.msra.mxu0 %v2049
    %2312 = vmatprep.subr.mxu0 0.0
    %2313 = vmatpush1.msra.mxu0 %v2046
    %2314 = vmatprep.subr.mxu0 0.0
    %2315 = vmatpush1.msra.mxu0 %v2043
    %2316 = vmatprep.subr.mxu0 0.0
    %2317 = vmatpush1.msra.mxu0 %v2040
    %2318 = vmatprep.subr.mxu0 0.0
    %2319 = vmatpush1.msra.mxu0 %v2037
    %2320 = vmatprep.subr.mxu0 0.0
    %2321 = vmatpush1.msra.mxu0 %v2034
    %2322 = vmatprep.subr.mxu0 0.0
    %2323 = vmatpush1.msra.mxu0 %v2031
    %2324 = vmatprep.subr.mxu0 0.0
    %2325 = vmatpush1.msra.mxu0 %v2028
    %2326 = vmatprep.subr.mxu0 0.0
    %2327 = vmatpush1.msra.mxu0 %v2025
    %2328 = vmatprep.subr.mxu0 0.0
    %2329 = vmatpush1.msra.mxu0 %v2022
    %2330 = vmatprep.subr.mxu0 0.0
    %2331 = vmatpush1.msra.mxu0 %v2019
    %2332 = vmatprep.subr.mxu0 0.0
    %2333 = vmatpush1.msra.mxu0 %v2016
    %2334 = vmatprep.subr.mxu0 0.0
    %2335 = vmatpush1.msra.mxu0 %v2013
    %2336 = vmatprep.subr.mxu0 0.0
    %2337 = vmatpush1.msra.mxu0 %v2010
    %2338 = vmatprep.subr.mxu0 0.0
    %2339 = vmatpush1.msra.mxu0 %v2007
    %2340 = vmatprep.subr.mxu0 0.0
    %2341 = vmatpush1.msra.mxu0 %v2004
    %2342 = vmatprep.subr.mxu0 0.0
    %2343 = vmatpush2.msra.mxu0 0.0
    %2344 = vmatprep.subr.mxu0 0.0
    %2345 = vmatpush2.msra.mxu0 0.0
    %2346 = vmatprep.subr.mxu0 0.0
    %2347 = vmatpush2.msra.mxu0 0.0
    %2348 = vmatprep.subr.mxu0 0.0
    %2349 = vmatpush2.msra.mxu0 0.0
    %2350 = vmatprep.subr.mxu0 0.0
    %2351 = vmatpush2.msra.mxu0 0.0
    %2352 = vmatprep.subr.mxu0 0.0
    %2353 = vmatpush2.msra.mxu0 0.0
    %2354 = vmatprep.subr.mxu0 0.0
    %2355 = vmatpush2.msra.mxu0 0.0
    %2356 = vmatprep.subr.mxu0 0.0
    %2357 = vmatpush2.msra.mxu0 0.0
    %2358 = vmatprep.subr.mxu0 0.0
    %2359 = vmatpush2.msra.mxu0 0.0
    %2360 = vmatprep.subr.mxu0 0.0
    %2361 = vmatpush2.msra.mxu0 0.0
    %2362 = vmatprep.subr.mxu0 0.0
    %2363 = vmatpush2.msra.mxu0 0.0
    %2364 = vmatprep.subr.mxu0 0.0
    %2365 = vmatpush2.msra.mxu0 0.0
    %2366 = vmatprep.subr.mxu0 0.0
    %2367 = vmatpush2.msra.mxu0 0.0
    %2368 = vmatprep.subr.mxu0 0.0
    %2369 = vmatpush2.msra.mxu0 0.0
    %2370 = vmatprep.subr.mxu0 0.0
    %2371 = vmatpush2.msra.mxu0 0.0
    %2372 = vmatprep.subr.mxu0 0.0
    %2373 = vmatpush2.msra.mxu0 0.0
    %2374 = vmatprep.mubr.f32.mxu0 0.0
    %2375 = vmatmul.mubr.f32.gmra.mxu0 %v1995
    %v2376 = vpop.f32.mrf.mxu0
    %v2377 = vadd.f32 %v2236, %v2376
    %v2378 = vpop.f32.mrf.mxu0
    %2379 = vdwg.mxu0
    %v2380 = vld [vmem:[%s6] sm:$0x7]
    %v2382 = vlaneseq
    %v2383 = vshrl.u32 %v2382, 7
    %v2384 = vsub.s32 0, %v2383
    %v2385 = vrot.slane %v2380, %v2384
    %v2386 = vlaneseq
    %v2387 = vshrl.u32 %v2386, 7
    %v2388 = vsub.s32 1, %v2387
    %v2389 = vrot.slane %v2380, %v2388
    %v2390 = vlaneseq
    %v2391 = vshrl.u32 %v2390, 7
    %v2392 = vsub.s32 2, %v2391
    %v2393 = vrot.slane %v2380, %v2392
    %v2397 = vadd.f32 %v2306, %v2385
    %v2398 = vadd.f32 %v2308, %v2389
    %v2399 = vadd.f32 %v2377, %v2393
    %v2400 = vxor.u32 %v2397, 2147483648
    %v2401 = vmul.f32 %v2400, 1.442695
    %v2402 = vpow.pop %v2401
    %v2403 = vadd.f32 %v2402, 1.0
    %v2404 = vrcp.pop %v2403
    %v2405 = vmul.f32 1.0, %v2404
    %v2406 = vxor.u32 %v2398, 2147483648
    %v2407 = vmul.f32 %v2406, 1.442695
    %v2408 = vpow.pop %v2407
    %v2409 = vadd.f32 %v2408, 1.0
    %v2410 = vrcp.pop %v2409
    %v2411 = vmul.f32 1.0, %v2410
    %v2412 = vxor.u32 %v2399, 2147483648
    %v2413 = vmul.f32 %v2412, 1.442695
    %v2414 = vpow.pop %v2413
    %v2415 = vadd.f32 %v2414, 1.0
    %v2416 = vrcp.pop %v2415
    %v2417 = vmul.f32 1.0, %v2416
    %v2418 = vmul.f32 %v2417, %v1997
    %v2419 = vmul.f32 %v2405, %v2001
    %v2420 = vadd.f32 %v2418, %v2419
    %v2421 = vtanh.pop %v2420
    %v2422 = vmul.f32 %v2411, %v2421
    %s2423 = scalar_lea.vmem [#allocation2], 5
    %2424 = vst [vmem:[%s2423] sm:$0x1] %v2422
    %s2425 = scalar_lea.vmem [#allocation3], 5
    %2426 = vst [vmem:[%s2425] sm:$0x1] %v2420
    %s2427 = sld [smem:[#allocation5 + $0x5]]
    %s2428 = sld [smem:[#allocation5 + $0x85]]
    %s2429 = scalar_lea.vmem [#allocation2], %s2427
    %v2430 = vld [vmem:[%s2429] sm:$0x1]
    %s2431 = scalar_lea.vmem [#allocation3], %s2427
    %v2432 = vld [vmem:[%s2431] sm:$0x1]
    %s2433 = scalar_lea.vmem [#allocation2], %s2428
    %v2434 = vld [vmem:[%s2433] sm:$0x1]
    %s2435 = scalar_lea.vmem [#allocation3], %s2428
    %v2436 = vld [vmem:[%s2435] sm:$0x1]
    %v2437 = vld [vmem:[%s4] sm:$0xff]
    %v2438 = vld [vmem:[%s4 + $0x8] sm:$0xff]
    %v2439 = vld [vmem:[%s4 + $0x10] sm:$0xff]
    %v2440 = vld [vmem:[%s4 + $0x18] sm:$0xff]
    %v2441 = vld [vmem:[%s4 + $0x20] sm:$0xff]
    %v2442 = vld [vmem:[%s4 + $0x28] sm:$0xff]
    %v2443 = vld [vmem:[%s4 + $0x30] sm:$0xff]
    %v2444 = vld [vmem:[%s4 + $0x38] sm:$0xff]
    %v2445 = vld [vmem:[%s4 + $0x40] sm:$0xff]
    %v2446 = vld [vmem:[%s4 + $0x48] sm:$0xff]
    %v2447 = vld [vmem:[%s4 + $0x50] sm:$0xff]
    %v2448 = vld [vmem:[%s4 + $0x58] sm:$0xff]
    %v2449 = vld [vmem:[%s4 + $0x60] sm:$0xff]
    %v2450 = vld [vmem:[%s4 + $0x68] sm:$0xff]
    %v2451 = vld [vmem:[%s4 + $0x70] sm:$0xff]
    %v2452 = vld [vmem:[%s4 + $0x78] sm:$0xff]
    %v2453 = vld [vmem:[%s4 + $0x80] sm:$0xff]
    %v2454 = vld [vmem:[%s4 + $0x88] sm:$0xff]
    %v2455 = vld [vmem:[%s4 + $0x90] sm:$0xff]
    %v2456 = vld [vmem:[%s4 + $0x98] sm:$0xff]
    %v2457 = vld [vmem:[%s4 + $0xa0] sm:$0xff]
    %v2458 = vld [vmem:[%s4 + $0xa8] sm:$0xff]
    %v2459 = vld [vmem:[%s4 + $0xb0] sm:$0xff]
    %v2460 = vld [vmem:[%s4 + $0xb8] sm:$0xff]
    %v2461 = vld [vmem:[%s4 + $0xc0] sm:$0xff]
    %v2462 = vld [vmem:[%s4 + $0xc8] sm:$0xff]
    %v2463 = vld [vmem:[%s4 + $0xd0] sm:$0xff]
    %v2464 = vld [vmem:[%s4 + $0xd8] sm:$0xff]
    %v2465 = vld [vmem:[%s4 + $0xe0] sm:$0xff]
    %v2466 = vld [vmem:[%s4 + $0xe8] sm:$0xff]
    %v2467 = vld [vmem:[%s4 + $0xf0] sm:$0xff]
    %v2468 = vld [vmem:[%s4 + $0xf8] sm:$0xff]
    %v2469 = vld [vmem:[%s4 + $0x100] sm:$0xff]
    %v2470 = vld [vmem:[%s4 + $0x108] sm:$0xff]
    %v2471 = vld [vmem:[%s4 + $0x110] sm:$0xff]
    %v2472 = vld [vmem:[%s4 + $0x118] sm:$0xff]
    %v2473 = vld [vmem:[%s4 + $0x120] sm:$0xff]
    %v2474 = vld [vmem:[%s4 + $0x128] sm:$0xff]
    %v2475 = vld [vmem:[%s4 + $0x130] sm:$0xff]
    %v2476 = vld [vmem:[%s4 + $0x138] sm:$0xff]
    %v2477 = vld [vmem:[%s4 + $0x140] sm:$0xff]
    %v2478 = vld [vmem:[%s4 + $0x148] sm:$0xff]
    %v2479 = vld [vmem:[%s4 + $0x150] sm:$0xff]
    %v2480 = vld [vmem:[%s4 + $0x158] sm:$0xff]
    %v2481 = vld [vmem:[%s4 + $0x160] sm:$0xff]
    %v2482 = vld [vmem:[%s4 + $0x168] sm:$0xff]
    %v2483 = vld [vmem:[%s4 + $0x170] sm:$0xff]
    %v2484 = vld [vmem:[%s4 + $0x178] sm:$0xff]
    %v2485 = vld [vmem:[%s5] sm:$0xff]
    %v2486 = vld [vmem:[%s5 + $0x8] sm:$0xff]
    %v2487 = vld [vmem:[%s5 + $0x10] sm:$0xff]
    %v2488 = vld [vmem:[%s5 + $0x18] sm:$0xff]
    %v2489 = vld [vmem:[%s5 + $0x20] sm:$0xff]
    %v2490 = vld [vmem:[%s5 + $0x28] sm:$0xff]
    %v2491 = vld [vmem:[%s5 + $0x30] sm:$0xff]
    %v2492 = vld [vmem:[%s5 + $0x38] sm:$0xff]
    %v2493 = vld [vmem:[%s5 + $0x40] sm:$0xff]
    %v2494 = vld [vmem:[%s5 + $0x48] sm:$0xff]
    %v2495 = vld [vmem:[%s5 + $0x50] sm:$0xff]
    %v2496 = vld [vmem:[%s5 + $0x58] sm:$0xff]
    %v2497 = vld [vmem:[%s5 + $0x60] sm:$0xff]
    %v2498 = vld [vmem:[%s5 + $0x68] sm:$0xff]
    %v2499 = vld [vmem:[%s5 + $0x70] sm:$0xff]
    %v2500 = vld [vmem:[%s5 + $0x78] sm:$0xff]
    %v2501 = vld [vmem:[%s5 + $0x80] sm:$0xff]
    %v2502 = vld [vmem:[%s5 + $0x88] sm:$0xff]
    %v2503 = vld [vmem:[%s5 + $0x90] sm:$0xff]
    %v2504 = vld [vmem:[%s5 + $0x98] sm:$0xff]
    %v2505 = vld [vmem:[%s5 + $0xa0] sm:$0xff]
    %v2506 = vld [vmem:[%s5 + $0xa8] sm:$0xff]
    %v2507 = vld [vmem:[%s5 + $0xb0] sm:$0xff]
    %v2508 = vld [vmem:[%s5 + $0xb8] sm:$0xff]
    %v2509 = vld [vmem:[%s5 + $0xc0] sm:$0xff]
    %v2510 = vld [vmem:[%s5 + $0xc8] sm:$0xff]
    %v2511 = vld [vmem:[%s5 + $0xd0] sm:$0xff]
    %v2512 = vld [vmem:[%s5 + $0xd8] sm:$0xff]
    %v2513 = vld [vmem:[%s5 + $0xe0] sm:$0xff]
    %v2514 = vld [vmem:[%s5 + $0xe8] sm:$0xff]
    %v2515 = vld [vmem:[%s5 + $0xf0] sm:$0xff]
    %v2516 = vld [vmem:[%s5 + $0xf8] sm:$0xff]
    %v2517 = vld [vmem:[%s5 + $0x100] sm:$0xff]
    %v2518 = vld [vmem:[%s5 + $0x108] sm:$0xff]
    %v2519 = vld [vmem:[%s5 + $0x110] sm:$0xff]
    %v2520 = vld [vmem:[%s5 + $0x118] sm:$0xff]
    %v2521 = vld [vmem:[%s5 + $0x120] sm:$0xff]
    %v2522 = vld [vmem:[%s5 + $0x128] sm:$0xff]
    %v2523 = vld [vmem:[%s5 + $0x130] sm:$0xff]
    %v2524 = vld [vmem:[%s5 + $0x138] sm:$0xff]
    %v2525 = vld [vmem:[%s5 + $0x140] sm:$0xff]
    %v2526 = vld [vmem:[%s5 + $0x148] sm:$0xff]
    %v2527 = vld [vmem:[%s5 + $0x150] sm:$0xff]
    %v2528 = vld [vmem:[%s5 + $0x158] sm:$0xff]
    %v2529 = vld [vmem:[%s5 + $0x160] sm:$0xff]
    %v2530 = vld [vmem:[%s5 + $0x168] sm:$0xff]
    %v2531 = vld [vmem:[%s5 + $0x170] sm:$0xff]
    %v2532 = vld [vmem:[%s5 + $0x178] sm:$0xff]
    %2533 = vmatprep.subr.mxu0 %v2531
    %2534 = vmatpush1.msra.mxu0 %v2530
    %2535 = vmatprep.subr.mxu0 %v2528
    %2536 = vmatpush1.msra.mxu0 %v2527
    %2537 = vmatprep.subr.mxu0 %v2525
    %2538 = vmatpush1.msra.mxu0 %v2524
    %2539 = vmatprep.subr.mxu0 %v2522
    %2540 = vmatpush1.msra.mxu0 %v2521
    %2541 = vmatprep.subr.mxu0 %v2519
    %2542 = vmatpush1.msra.mxu0 %v2518
    %2543 = vmatprep.subr.mxu0 %v2516
    %2544 = vmatpush1.msra.mxu0 %v2515
    %2545 = vmatprep.subr.mxu0 %v2513
    %2546 = vmatpush1.msra.mxu0 %v2512
    %2547 = vmatprep.subr.mxu0 %v2510
    %2548 = vmatpush1.msra.mxu0 %v2509
    %2549 = vmatprep.subr.mxu0 %v2507
    %2550 = vmatpush1.msra.mxu0 %v2506
    %2551 = vmatprep.subr.mxu0 %v2504
    %2552 = vmatpush1.msra.mxu0 %v2503
    %2553 = vmatprep.subr.mxu0 %v2501
    %2554 = vmatpush1.msra.mxu0 %v2500
    %2555 = vmatprep.subr.mxu0 %v2498
    %2556 = vmatpush1.msra.mxu0 %v2497
    %2557 = vmatprep.subr.mxu0 %v2495
    %2558 = vmatpush1.msra.mxu0 %v2494
    %2559 = vmatprep.subr.mxu0 %v2492
    %2560 = vmatpush1.msra.mxu0 %v2491
    %2561 = vmatprep.subr.mxu0 %v2489
    %2562 = vmatpush1.msra.mxu0 %v2488
    %2563 = vmatprep.subr.mxu0 %v2486
    %2564 = vmatpush1.msra.mxu0 %v2485
    %2565 = vmatprep.subr.mxu0 0.0
    %2566 = vmatpush2.msra.mxu0 0.0
    %2567 = vmatprep.subr.mxu0 0.0
    %2568 = vmatpush2.msra.mxu0 0.0
    %2569 = vmatprep.subr.mxu0 0.0
    %2570 = vmatpush2.msra.mxu0 0.0
    %2571 = vmatprep.subr.mxu0 0.0
    %2572 = vmatpush2.msra.mxu0 0.0
    %2573 = vmatprep.subr.mxu0 0.0
    %2574 = vmatpush2.msra.mxu0 0.0
    %2575 = vmatprep.subr.mxu0 0.0
    %2576 = vmatpush2.msra.mxu0 0.0
    %2577 = vmatprep.subr.mxu0 0.0
    %2578 = vmatpush2.msra.mxu0 0.0
    %2579 = vmatprep.subr.mxu0 0.0
    %2580 = vmatpush2.msra.mxu0 0.0
    %2581 = vmatprep.subr.mxu0 0.0
    %2582 = vmatpush2.msra.mxu0 0.0
    %2583 = vmatprep.subr.mxu0 0.0
    %2584 = vmatpush2.msra.mxu0 0.0
    %2585 = vmatprep.subr.mxu0 0.0
    %2586 = vmatpush2.msra.mxu0 0.0
    %2587 = vmatprep.subr.mxu0 0.0
    %2588 = vmatpush2.msra.mxu0 0.0
    %2589 = vmatprep.subr.mxu0 0.0
    %2590 = vmatpush2.msra.mxu0 0.0
    %2591 = vmatprep.subr.mxu0 0.0
    %2592 = vmatpush2.msra.mxu0 0.0
    %2593 = vmatprep.subr.mxu0 0.0
    %2594 = vmatpush2.msra.mxu0 0.0
    %2595 = vmatprep.subr.mxu0 0.0
    %2596 = vmatpush2.msra.mxu0 0.0
    %2597 = vmatprep.mubr.f32.mxu0 0.0
    %2598 = vmatmul.mubr.f32.gmra.mxu0 %v2434
    %v2599 = vpop.f32.mrf.mxu0
    %v2600 = vadd.f32 0.0, %v2599
    %v2601 = vpop.f32.mrf.mxu0
    %v2602 = vadd.f32 0.0, %v2601
    %2603 = vdwg.mxu0
    %2604 = vmatprep.subr.mxu0 0.0
    %2605 = vmatpush1.msra.mxu0 %v2532
    %2606 = vmatprep.subr.mxu0 0.0
    %2607 = vmatpush1.msra.mxu0 %v2529
    %2608 = vmatprep.subr.mxu0 0.0
    %2609 = vmatpush1.msra.mxu0 %v2526
    %2610 = vmatprep.subr.mxu0 0.0
    %2611 = vmatpush1.msra.mxu0 %v2523
    %2612 = vmatprep.subr.mxu0 0.0
    %2613 = vmatpush1.msra.mxu0 %v2520
    %2614 = vmatprep.subr.mxu0 0.0
    %2615 = vmatpush1.msra.mxu0 %v2517
    %2616 = vmatprep.subr.mxu0 0.0
    %2617 = vmatpush1.msra.mxu0 %v2514
    %2618 = vmatprep.subr.mxu0 0.0
    %2619 = vmatpush1.msra.mxu0 %v2511
    %2620 = vmatprep.subr.mxu0 0.0
    %2621 = vmatpush1.msra.mxu0 %v2508
    %2622 = vmatprep.subr.mxu0 0.0
    %2623 = vmatpush1.msra.mxu0 %v2505
    %2624 = vmatprep.subr.mxu0 0.0
    %2625 = vmatpush1.msra.mxu0 %v2502
    %2626 = vmatprep.subr.mxu0 0.0
    %2627 = vmatpush1.msra.mxu0 %v2499
    %2628 = vmatprep.subr.mxu0 0.0
    %2629 = vmatpush1.msra.mxu0 %v2496
    %2630 = vmatprep.subr.mxu0 0.0
    %2631 = vmatpush1.msra.mxu0 %v2493
    %2632 = vmatprep.subr.mxu0 0.0
    %2633 = vmatpush1.msra.mxu0 %v2490
    %2634 = vmatprep.subr.mxu0 0.0
    %2635 = vmatpush1.msra.mxu0 %v2487
    %2636 = vmatprep.subr.mxu0 0.0
    %2637 = vmatpush2.msra.mxu0 0.0
    %2638 = vmatprep.subr.mxu0 0.0
    %2639 = vmatpush2.msra.mxu0 0.0
    %2640 = vmatprep.subr.mxu0 0.0
    %2641 = vmatpush2.msra.mxu0 0.0
    %2642 = vmatprep.subr.mxu0 0.0
    %2643 = vmatpush2.msra.mxu0 0.0
    %2644 = vmatprep.subr.mxu0 0.0
    %2645 = vmatpush2.msra.mxu0 0.0
    %2646 = vmatprep.subr.mxu0 0.0
    %2647 = vmatpush2.msra.mxu0 0.0
    %2648 = vmatprep.subr.mxu0 0.0
    %2649 = vmatpush2.msra.mxu0 0.0
    %2650 = vmatprep.subr.mxu0 0.0
    %2651 = vmatpush2.msra.mxu0 0.0
    %2652 = vmatprep.subr.mxu0 0.0
    %2653 = vmatpush2.msra.mxu0 0.0
    %2654 = vmatprep.subr.mxu0 0.0
    %2655 = vmatpush2.msra.mxu0 0.0
    %2656 = vmatprep.subr.mxu0 0.0
    %2657 = vmatpush2.msra.mxu0 0.0
    %2658 = vmatprep.subr.mxu0 0.0
    %2659 = vmatpush2.msra.mxu0 0.0
    %2660 = vmatprep.subr.mxu0 0.0
    %2661 = vmatpush2.msra.mxu0 0.0
    %2662 = vmatprep.subr.mxu0 0.0
    %2663 = vmatpush2.msra.mxu0 0.0
    %2664 = vmatprep.subr.mxu0 0.0
    %2665 = vmatpush2.msra.mxu0 0.0
    %2666 = vmatprep.subr.mxu0 0.0
    %2667 = vmatpush2.msra.mxu0 0.0
    %2668 = vmatprep.mubr.f32.mxu0 0.0
    %2669 = vmatmul.mubr.f32.gmra.mxu0 %v2434
    %v2670 = vpop.f32.mrf.mxu0
    %v2671 = vadd.f32 0.0, %v2670
    %v2672 = vpop.f32.mrf.mxu0
    %2673 = vdwg.mxu0
    %2674 = vmatprep.subr.mxu0 %v2483
    %2675 = vmatpush1.msra.mxu0 %v2482
    %2676 = vmatprep.subr.mxu0 %v2480
    %2677 = vmatpush1.msra.mxu0 %v2479
    %2678 = vmatprep.subr.mxu0 %v2477
    %2679 = vmatpush1.msra.mxu0 %v2476
    %2680 = vmatprep.subr.mxu0 %v2474
    %2681 = vmatpush1.msra.mxu0 %v2473
    %2682 = vmatprep.subr.mxu0 %v2471
    %2683 = vmatpush1.msra.mxu0 %v2470
    %2684 = vmatprep.subr.mxu0 %v2468
    %2685 = vmatpush1.msra.mxu0 %v2467
    %2686 = vmatprep.subr.mxu0 %v2465
    %2687 = vmatpush1.msra.mxu0 %v2464
    %2688 = vmatprep.subr.mxu0 %v2462
    %2689 = vmatpush1.msra.mxu0 %v2461
    %2690 = vmatprep.subr.mxu0 %v2459
    %2691 = vmatpush1.msra.mxu0 %v2458
    %2692 = vmatprep.subr.mxu0 %v2456
    %2693 = vmatpush1.msra.mxu0 %v2455
    %2694 = vmatprep.subr.mxu0 %v2453
    %2695 = vmatpush1.msra.mxu0 %v2452
    %2696 = vmatprep.subr.mxu0 %v2450
    %2697 = vmatpush1.msra.mxu0 %v2449
    %2698 = vmatprep.subr.mxu0 %v2447
    %2699 = vmatpush1.msra.mxu0 %v2446
    %2700 = vmatprep.subr.mxu0 %v2444
    %2701 = vmatpush1.msra.mxu0 %v2443
    %2702 = vmatprep.subr.mxu0 %v2441
    %2703 = vmatpush1.msra.mxu0 %v2440
    %2704 = vmatprep.subr.mxu0 %v2438
    %2705 = vmatpush1.msra.mxu0 %v2437
    %2706 = vmatprep.subr.mxu0 0.0
    %2707 = vmatpush2.msra.mxu0 0.0
    %2708 = vmatprep.subr.mxu0 0.0
    %2709 = vmatpush2.msra.mxu0 0.0
    %2710 = vmatprep.subr.mxu0 0.0
    %2711 = vmatpush2.msra.mxu0 0.0
    %2712 = vmatprep.subr.mxu0 0.0
    %2713 = vmatpush2.msra.mxu0 0.0
    %2714 = vmatprep.subr.mxu0 0.0
    %2715 = vmatpush2.msra.mxu0 0.0
    %2716 = vmatprep.subr.mxu0 0.0
    %2717 = vmatpush2.msra.mxu0 0.0
    %2718 = vmatprep.subr.mxu0 0.0
    %2719 = vmatpush2.msra.mxu0 0.0
    %2720 = vmatprep.subr.mxu0 0.0
    %2721 = vmatpush2.msra.mxu0 0.0
    %2722 = vmatprep.subr.mxu0 0.0
    %2723 = vmatpush2.msra.mxu0 0.0
    %2724 = vmatprep.subr.mxu0 0.0
    %2725 = vmatpush2.msra.mxu0 0.0
    %2726 = vmatprep.subr.mxu0 0.0
    %2727 = vmatpush2.msra.mxu0 0.0
    %2728 = vmatprep.subr.mxu0 0.0
    %2729 = vmatpush2.msra.mxu0 0.0
    %2730 = vmatprep.subr.mxu0 0.0
    %2731 = vmatpush2.msra.mxu0 0.0
    %2732 = vmatprep.subr.mxu0 0.0
    %2733 = vmatpush2.msra.mxu0 0.0
    %2734 = vmatprep.subr.mxu0 0.0
    %2735 = vmatpush2.msra.mxu0 0.0
    %2736 = vmatprep.subr.mxu0 0.0
    %2737 = vmatpush2.msra.mxu0 0.0
    %2738 = vmatprep.mubr.f32.mxu0 0.0
    %2739 = vmatmul.mubr.f32.gmra.mxu0 %v2430
    %v2740 = vpop.f32.mrf.mxu0
    %v2741 = vadd.f32 %v2600, %v2740
    %v2742 = vpop.f32.mrf.mxu0
    %v2743 = vadd.f32 %v2602, %v2742
    %2744 = vdwg.mxu0
    %2745 = vmatprep.subr.mxu0 0.0
    %2746 = vmatpush1.msra.mxu0 %v2484
    %2747 = vmatprep.subr.mxu0 0.0
    %2748 = vmatpush1.msra.mxu0 %v2481
    %2749 = vmatprep.subr.mxu0 0.0
    %2750 = vmatpush1.msra.mxu0 %v2478
    %2751 = vmatprep.subr.mxu0 0.0
    %2752 = vmatpush1.msra.mxu0 %v2475
    %2753 = vmatprep.subr.mxu0 0.0
    %2754 = vmatpush1.msra.mxu0 %v2472
    %2755 = vmatprep.subr.mxu0 0.0
    %2756 = vmatpush1.msra.mxu0 %v2469
    %2757 = vmatprep.subr.mxu0 0.0
    %2758 = vmatpush1.msra.mxu0 %v2466
    %2759 = vmatprep.subr.mxu0 0.0
    %2760 = vmatpush1.msra.mxu0 %v2463
    %2761 = vmatprep.subr.mxu0 0.0
    %2762 = vmatpush1.msra.mxu0 %v2460
    %2763 = vmatprep.subr.mxu0 0.0
    %2764 = vmatpush1.msra.mxu0 %v2457
    %2765 = vmatprep.subr.mxu0 0.0
    %2766 = vmatpush1.msra.mxu0 %v2454
    %2767 = vmatprep.subr.mxu0 0.0
    %2768 = vmatpush1.msra.mxu0 %v2451
    %2769 = vmatprep.subr.mxu0 0.0
    %2770 = vmatpush1.msra.mxu0 %v2448
    %2771 = vmatprep.subr.mxu0 0.0
    %2772 = vmatpush1.msra.mxu0 %v2445
    %2773 = vmatprep.subr.mxu0 0.0
    %2774 = vmatpush1.msra.mxu0 %v2442
    %2775 = vmatprep.subr.mxu0 0.0
    %2776 = vmatpush1.msra.mxu0 %v2439
    %2777 = vmatprep.subr.mxu0 0.0
    %2778 = vmatpush2.msra.mxu0 0.0
    %2779 = vmatprep.subr.mxu0 0.0
    %2780 = vmatpush2.msra.mxu0 0.0
    %2781 = vmatprep.subr.mxu0 0.0
    %2782 = vmatpush2.msra.mxu0 0.0
    %2783 = vmatprep.subr.mxu0 0.0
    %2784 = vmatpush2.msra.mxu0 0.0
    %2785 = vmatprep.subr.mxu0 0.0
    %2786 = vmatpush2.msra.mxu0 0.0
    %2787 = vmatprep.subr.mxu0 0.0
    %2788 = vmatpush2.msra.mxu0 0.0
    %2789 = vmatprep.subr.mxu0 0.0
    %2790 = vmatpush2.msra.mxu0 0.0
    %2791 = vmatprep.subr.mxu0 0.0
    %2792 = vmatpush2.msra.mxu0 0.0
    %2793 = vmatprep.subr.mxu0 0.0
    %2794 = vmatpush2.msra.mxu0 0.0
    %2795 = vmatprep.subr.mxu0 0.0
    %2796 = vmatpush2.msra.mxu0 0.0
    %2797 = vmatprep.subr.mxu0 0.0
    %2798 = vmatpush2.msra.mxu0 0.0
    %2799 = vmatprep.subr.mxu0 0.0
    %2800 = vmatpush2.msra.mxu0 0.0
    %2801 = vmatprep.subr.mxu0 0.0
    %2802 = vmatpush2.msra.mxu0 0.0
    %2803 = vmatprep.subr.mxu0 0.0
    %2804 = vmatpush2.msra.mxu0 0.0
    %2805 = vmatprep.subr.mxu0 0.0
    %2806 = vmatpush2.msra.mxu0 0.0
    %2807 = vmatprep.subr.mxu0 0.0
    %2808 = vmatpush2.msra.mxu0 0.0
    %2809 = vmatprep.mubr.f32.mxu0 0.0
    %2810 = vmatmul.mubr.f32.gmra.mxu0 %v2430
    %v2811 = vpop.f32.mrf.mxu0
    %v2812 = vadd.f32 %v2671, %v2811
    %v2813 = vpop.f32.mrf.mxu0
    %2814 = vdwg.mxu0
    %v2815 = vld [vmem:[%s6] sm:$0x7]
    %v2817 = vlaneseq
    %v2818 = vshrl.u32 %v2817, 7
    %v2819 = vsub.s32 0, %v2818
    %v2820 = vrot.slane %v2815, %v2819
    %v2821 = vlaneseq
    %v2822 = vshrl.u32 %v2821, 7
    %v2823 = vsub.s32 1, %v2822
    %v2824 = vrot.slane %v2815, %v2823
    %v2825 = vlaneseq
    %v2826 = vshrl.u32 %v2825, 7
    %v2827 = vsub.s32 2, %v2826
    %v2828 = vrot.slane %v2815, %v2827
    %v2832 = vadd.f32 %v2741, %v2820
    %v2833 = vadd.f32 %v2743, %v2824
    %v2834 = vadd.f32 %v2812, %v2828
    %v2835 = vxor.u32 %v2832, 2147483648
    %v2836 = vmul.f32 %v2835, 1.442695
    %v2837 = vpow.pop %v2836
    %v2838 = vadd.f32 %v2837, 1.0
    %v2839 = vrcp.pop %v2838
    %v2840 = vmul.f32 1.0, %v2839
    %v2841 = vxor.u32 %v2833, 2147483648
    %v2842 = vmul.f32 %v2841, 1.442695
    %v2843 = vpow.pop %v2842
    %v2844 = vadd.f32 %v2843, 1.0
    %v2845 = vrcp.pop %v2844
    %v2846 = vmul.f32 1.0, %v2845
    %v2847 = vxor.u32 %v2834, 2147483648
    %v2848 = vmul.f32 %v2847, 1.442695
    %v2849 = vpow.pop %v2848
    %v2850 = vadd.f32 %v2849, 1.0
    %v2851 = vrcp.pop %v2850
    %v2852 = vmul.f32 1.0, %v2851
    %v2853 = vmul.f32 %v2852, %v2432
    %v2854 = vmul.f32 %v2840, %v2436
    %v2855 = vadd.f32 %v2853, %v2854
    %v2856 = vtanh.pop %v2855
    %v2857 = vmul.f32 %v2846, %v2856
    %s2858 = scalar_lea.vmem [#allocation2], 6
    %2859 = vst [vmem:[%s2858] sm:$0x1] %v2857
    %s2860 = scalar_lea.vmem [#allocation3], 6
    %2861 = vst [vmem:[%s2860] sm:$0x1] %v2855
    %v2862 = vld [vmem:[%s2858] sm:$0x1]
    %2863 = vst [vmem:[#allocation6] sm:$0x1] %v2862
    // Predicated region
    $region26: #{_treenet_fused_call.1} parent=1 // pred_check
      _
    $region27: #{_treenet_fused_call.1} parent=1 // pred_check_branch
      %2865 = sbr.rel (0) target = $region29
    $region28: #{_treenet_fused_call.1} parent=1 // pred_region
      %s2867 = ssub.s32 16, 16
      %2868 = vsyncadd [#allocation7], %s2867
      %s2870 = sshll.u32 [#allocation6], 4
      %s2871 = int_to_ptr.vmem [resolvable:$true] %s2870
      %2873 = dma.vmem_to_hbm [thread:$0]  %s2871, 16, %s7, [#allocation7]
    $region29: #{_treenet_fused_call.1} parent=1 // pred_fallthru
      _
    // Predicated region
    $region30: #{_treenet_fused_call.1} parent=1 // pred_check
      _
    $region31: #{_treenet_fused_call.1} parent=1 // pred_check_branch
      %2875 = sbr.rel (0) target = $region33
    $region32: #{_treenet_fused_call.1} parent=1 // pred_region
      %2876 = dma.done [#allocation7], 16
    $region33: #{_treenet_fused_call.1} parent=1 // pred_fallthru
      _
    %2877 = vsyncpa [#allocation7], 1

</llo_original>
